<compile_context>
chip_gen: v5e
topology: v5e:2x2
jax: 0.10.0
libtpu: 0.0.40
codegen_flags: <defaults>
</compile_context>

<pallas_src>
import functools

import jax
import jax.numpy as jnp
from jax.experimental import pallas as pl
from jax.experimental.pallas import tpu as pltpu


_LANE = 128      # vreg lane width (last dim)
_SUBLANE = 8     # f32 sublane width (second-to-last dim)


def _round_up(n, m):
    return ((n + m - 1) // m) * m


def _pad2d(a, rows, cols):
    r, c = a.shape
    if r == rows and c == cols:
        return a
    return jnp.pad(a, ((0, rows - r), (0, cols - c)))


def _vmem_estimate(tile_b, Fp, Hp, Op):
    """Rough resident-VMEM estimate (bytes) for the fused kernel."""
    weights = 2 * (Fp * Hp + 2 * Hp * Hp + Hp * Op)   # bf16, single-buffered
    x_tile = 2 * tile_b * Fp * 2                      # bf16, double-buffered
    out_tile = 2 * tile_b * Op * 4                    # f32, double-buffered
    param_rows = 2 * (16 * Hp + 8 * Op) * 4           # packed LN/bias rows
    acts = 3 * tile_b * Hp * 4                        # live f32 intermediates
    return weights + x_tile + out_tile + param_rows + acts


def _mlp_compute(x, w1, get_w2, get_w3, get_wo, p, bo, o_ref,
                 *, hidden_dim, eps, negative_slope):
    """Shared fused forward body.

    x:  (tile_b, Fp) bf16        w1: (Fp, Hp) bf16
    get_w2/get_w3/get_wo: callables returning the (already-in-VMEM) bf16 weight,
        called lazily right before use (lets manual DMA waits sit next to use).
    p:  (16, Hp) f32 packed rows [b1,g1,be1, b2,g2,be2, b3,g3,be3, pad...]
    bo: (1, Op) f32
    """
    inv_h = 1.0 / float(hidden_dim)

    def ln_lrelu(h, gamma, beta):
        # Single-pass stats. Padded lanes of h are exactly 0, so dividing the
        # full-lane sums by the *true* hidden_dim gives exact mean / E[h^2].
        m = jnp.sum(h, axis=-1, keepdims=True) * inv_h
        m2 = jnp.sum(h * h, axis=-1, keepdims=True) * inv_h
        var = jnp.maximum(m2 - m * m, 0.0)        # guard against cancellation
        y = (h - m) * jax.lax.rsqrt(var + eps) * gamma + beta
        # gamma/beta are zero-padded -> padded lanes stay exactly 0 after LN.
        return jnp.where(y > 0, y, negative_slope * y)   # LeakyReLU(0.01)

    def fc(a, w, b):
        # bf16 MXU matmul with f32 accumulation; bias add in f32.
        return jnp.dot(a.astype(jnp.bfloat16), w,
                       preferred_element_type=jnp.float32) + b

    b1, g1, be1 = p[0:1], p[1:2], p[2:3]
    b2, g2, be2 = p[3:4], p[4:5], p[5:6]
    b3, g3, be3 = p[6:7], p[7:8], p[8:9]

    h = ln_lrelu(fc(x, w1, b1), g1, be1)           # dropout: identity (eval)
    h = ln_lrelu(fc(h, get_w2(), b2), g2, be2)     # dropout: identity (eval)
    h = ln_lrelu(fc(h, get_w3(), b3), g3, be3)     # dropout: identity (eval)
    o_ref[...] = fc(h, get_wo(), bo).astype(o_ref.dtype)


def mlp_kernel_pipelined(x_ref, w1_ref, w2_ref, w3_ref, wo_ref, p_ref, bo_ref,
                         o_ref, *, hidden_dim, eps=1e-5, negative_slope=0.01):
    """All operands delivered by the BlockSpec pipeline (grid > 1)."""
    _mlp_compute(x_ref[...], w1_ref[...],
                 lambda: w2_ref[...], lambda: w3_ref[...], lambda: wo_ref[...],
                 p_ref[...], bo_ref[...], o_ref,
                 hidden_dim=hidden_dim, eps=eps, negative_slope=negative_slope)


def mlp_kernel_prefetch(x_ref, w1_ref, p_ref, bo_ref,
                        w2_hbm, w3_hbm, wo_hbm,
                        o_ref,
                        w2_v, w3_v, wo_v, sem,
                        *, hidden_dim, eps=1e-5, negative_slope=0.01):
    """Single-grid-step variant: w2/w3/wo live in HBM (pl.ANY) and are DMA'd
    manually so their transfer overlaps layer-1/2 compute instead of being
    fully exposed before the body runs."""
    cp2 = pltpu.make_async_copy(w2_hbm, w2_v, sem.at[0])
    cp3 = pltpu.make_async_copy(w3_hbm, w3_v, sem.at[1])
    cpo = pltpu.make_async_copy(wo_hbm, wo_v, sem.at[2])
    cp2.start()
    cp3.start()
    cpo.start()

    def get_w2():
        cp2.wait()
        return w2_v[...]

    def get_w3():
        cp3.wait()
        return w3_v[...]

    def get_wo():
        cpo.wait()
        return wo_v[...]

    _mlp_compute(x_ref[...], w1_ref[...], get_w2, get_w3, get_wo,
                 p_ref[...], bo_ref[...], o_ref,
                 hidden_dim=hidden_dim, eps=eps, negative_slope=negative_slope)


def base_model_forward(x, params, *, tile_b=None):
    """x: [B, input_size] float32. params: dict from init_params."""
    B, F = x.shape
    H = params["w1"].shape[1]
    O = params["wo"].shape[1]

    Fp = _round_up(F, _LANE)
    Hp = _round_up(H, _LANE)
    Op = _round_up(O, _LANE)

    # --- chip-aware tiling / VMEM budget -----------------------------------
    kind = ""
    try:
        kind = jax.devices()[0].device_kind.lower()
    except Exception:
        pass
    is_v7 = "v7" in kind
    vmem_cap = (56 << 20) if is_v7 else (100 << 20)   # headroom under physical

    if tile_b is None:
        # v7x: cap at 256 so B > 256 yields >= 2 programs (sharded across both
        # TensorCores).  v5e/v6e: 512 keeps the serial grid short.
        max_tile = 256 if is_v7 else 512
        tile_b = min(_round_up(B, _SUBLANE), max_tile)
        while _vmem_estimate(tile_b, Fp, Hp, Op) > vmem_cap and tile_b > 64:
            tile_b //= 2
    tile_b = max(_SUBLANE, _round_up(tile_b, _SUBLANE))
    Bp = _round_up(B, tile_b)
    grid = (Bp // tile_b,)
    single_step = grid[0] == 1

    vmem_limit = int(min(vmem_cap,
                         max(16 << 20,
                             1.5 * _vmem_estimate(tile_b, Fp, Hp, Op) + (4 << 20))))

    # --- pad / pack operands -------------------------------------------------
    # Matmul operands in bf16; LN params / biases stay f32. gamma/beta are
    # zero-padded so padded lanes remain exactly zero through every layer.
    xp = _pad2d(x, Bp, Fp).astype(jnp.bfloat16)
    w1 = _pad2d(params["w1"], Fp, Hp).astype(jnp.bfloat16)
    w2 = _pad2d(params["w2"], Hp, Hp).astype(jnp.bfloat16)
    w3 = _pad2d(params["w3"], Hp, Hp).astype(jnp.bfloat16)
    wo = _pad2d(params["wo"], Hp, Op).astype(jnp.bfloat16)
    p_rows = jnp.concatenate(
        [params[k] for k in ("b1", "g1", "be1", "b2", "g2", "be2",
                             "b3", "g3", "be3")], axis=0)          # (9, H)
    p_packed = _pad2d(p_rows, 16, Hp)                               # one DMA
    bo = _pad2d(params["bo"], 1, Op)

    flops = 2 * B * (F * H + 2 * H * H + H * O)
    bytes_accessed = (
        xp.size * 2
        + (w1.size + w2.size + w3.size + wo.size) * 2
        + (p_packed.size + bo.size) * 4
        + Bp * Op * 4
    )
    cost = pl.CostEstimate(flops=flops, transcendentals=3 * B,
                           bytes_accessed=bytes_accessed)

    def row_spec(cols):
        return pl.BlockSpec((tile_b, cols), lambda i: (i, 0))

    def run(use_prefetch, pm):
        def const_spec(shape):
            # Constant-index operands: single-buffer when supported (pm set).
            if pm is None:
                return pl.BlockSpec(shape, lambda i: tuple(0 for _ in shape))
            return pl.BlockSpec(shape, lambda i: tuple(0 for _ in shape),
                                pipeline_mode=pm)

        if use_prefetch:
            kernel = functools.partial(mlp_kernel_prefetch, hidden_dim=H)
            in_specs = [
                row_spec(Fp),
                const_spec((Fp, Hp)),
                const_spec((16, Hp)),
                const_spec((1, Op)),
                pl.BlockSpec(memory_space=pl.ANY),   # w2 (manual DMA)
                pl.BlockSpec(memory_space=pl.ANY),   # w3 (manual DMA)
                pl.BlockSpec(memory_space=pl.ANY),   # wo (manual DMA)
            ]
            inputs = (xp, w1, p_packed, bo, w2, w3, wo)
            scratch = [
                pltpu.VMEM((Hp, Hp), jnp.bfloat16),
                pltpu.VMEM((Hp, Hp), jnp.bfloat16),
                pltpu.VMEM((Hp, Op), jnp.bfloat16),
                pltpu.SemaphoreType.DMA((3,)),
            ]
        else:
            kernel = functools.partial(mlp_kernel_pipelined, hidden_dim=H)
            in_specs = [
                row_spec(Fp),
                const_spec((Fp, Hp)), const_spec((Hp, Hp)),
                const_spec((Hp, Hp)), const_spec((Hp, Op)),
                const_spec((16, Hp)), const_spec((1, Op)),
            ]
            inputs = (xp, w1, w2, w3, wo, p_packed, bo)
            scratch = []

        out = pl.pallas_call(
            kernel,
            out_shape=jax.ShapeDtypeStruct((Bp, Op), x.dtype),
            grid_spec=pltpu.PrefetchScalarGridSpec(
                num_scalar_prefetch=0,
                grid=grid,
                in_specs=in_specs,
                out_specs=row_spec(Op),
                scratch_shapes=scratch),
            compiler_params=pltpu.CompilerParams(
                dimension_semantics=("parallel",),
                vmem_limit_bytes=vmem_limit),
            cost_estimate=cost,
        )(*inputs)
        return jax.block_until_ready(out)

    # Preferred configuration first; degrade gracefully if the installed JAX
    # rejects pipeline_mode / the manual-DMA path (keeps the script runnable).
    attempts = ([(True, pl.Buffered(1)), (True, None),
                 (False, pl.Buffered(1)), (False, None)]
                if single_step else
                [(False, pl.Buffered(1)), (False, None)])
    last_err = None
    out_padded = None
    for use_prefetch, pm in attempts:
        try:
            out_padded = run(use_prefetch, pm)
            break
        except Exception as e:           # noqa: BLE001 - fall back to safer config
            last_err = e
    if out_padded is None:
        raise last_err

    return out_padded[:B, :O]


def init_params(key, input_size, hidden_size, out_size):
    """Deterministic synthetic init. Linear weights stored [in, out]; biases and
    LayerNorm params stored as [1, dim] for clean 2-D VMEM tiles."""
    ks = jax.random.split(key, 8)

    def lin(k, fan_in, fan_out):
        bound = 1.0 / jnp.sqrt(fan_in)
        kw, kb = jax.random.split(k)
        w = jax.random.uniform(kw, (fan_in, fan_out), jnp.float32, -bound, bound)
        b = jax.random.uniform(kb, (1, fan_out), jnp.float32, -bound, bound)
        return w, b

    w1, b1 = lin(ks[0], input_size, hidden_size)
    w2, b2 = lin(ks[1], hidden_size, hidden_size)
    w3, b3 = lin(ks[2], hidden_size, hidden_size)
    wo, bo = lin(ks[3], hidden_size, out_size)
    ones = lambda n: jnp.ones((1, n), jnp.float32)
    zeros = lambda n: jnp.zeros((1, n), jnp.float32)
    return dict(
        w1=w1, b1=b1, g1=ones(hidden_size), be1=zeros(hidden_size),
        w2=w2, b2=b2, g2=ones(hidden_size), be2=zeros(hidden_size),
        w3=w3, b3=b3, g3=ones(hidden_size), be3=zeros(hidden_size),
        wo=wo, bo=bo,
    )


def reference_forward(x, p, matmul_dtype=jnp.float32):
    """Pure-JAX reference. matmul_dtype=bf16 matches the kernel's MXU precision."""
    def ln(h, g, b):
        mu = jnp.mean(h, axis=-1, keepdims=True)
        var = jnp.mean((h - mu) ** 2, axis=-1, keepdims=True)
        return (h - mu) * jax.lax.rsqrt(var + 1e-5) * g + b

    lrelu = lambda h: jnp.where(h > 0, h, 0.01 * h)
    dot = lambda a, w: jnp.dot(a.astype(matmul_dtype), w.astype(matmul_dtype),
                               preferred_element_type=jnp.float32)
    h = lrelu(ln(dot(x, p["w1"]) + p["b1"], p["g1"], p["be1"]))
    h = lrelu(ln(dot(h, p["w2"]) + p["b2"], p["g2"], p["be2"]))
    h = lrelu(ln(dot(h, p["w3"]) + p["b3"], p["g3"], p["be3"]))
    return dot(h, p["wo"]) + p["bo"]


if __name__ == "__main__":
    key = jax.random.PRNGKey(0)
    k_x, k_p = jax.random.split(key)

    batch, input_size, hidden_size, out_size = 16, 32, 64, 16
    dropout_rate = 0.1  # inference mode -> identity; kept for signature parity

    x = jax.random.normal(k_x, (batch, input_size), jnp.float32)
    params = init_params(k_p, input_size, hidden_size, out_size)

    # grid=(1,) -> manual weight-prefetch path
    out = base_model_forward(x, params)
    out = jax.block_until_ready(out)
    assert out.shape == (batch, out_size)

    # Force grid=(2,) -> fully BlockSpec-pipelined path (exercises both kernels)
    out_tiled = base_model_forward(x, params, tile_b=8)
    out_tiled = jax.block_until_ready(out_tiled)
    assert out_tiled.shape == (batch, out_size)

    # Precision-matched reference (bf16 matmul inputs, f32 accumulation).
    ref_bf16 = reference_forward(x, params, matmul_dtype=jnp.bfloat16)
    assert jnp.allclose(out, ref_bf16, atol=5e-3, rtol=5e-3)
    assert jnp.allclose(out_tiled, ref_bf16, atol=5e-3, rtol=5e-3)

    # Sanity check against the full-f32 reference (loose tol for bf16 operands).
    ref_f32 = reference_forward(x, params, matmul_dtype=jnp.float32)
    assert jnp.allclose(out, ref_f32, atol=7.5e-2, rtol=7.5e-2)

    print("KERNEL_OK")
</pallas_src>

<mosaic_0001>
module attributes {stable_mosaic.version = 11 : i64} {
  func.func @mlp_kernel_prefetch(%arg0: i32, %arg1: memref<16x128xbf16, #tpu.memory_space<vmem>>, %arg2: memref<128x128xbf16, #tpu.memory_space<vmem>>, %arg3: memref<16x128xf32, #tpu.memory_space<vmem>>, %arg4: memref<1x128xf32, #tpu.memory_space<vmem>>, %arg5: memref<128x128xbf16, #tpu.memory_space<any>>, %arg6: memref<128x128xbf16, #tpu.memory_space<any>>, %arg7: memref<128x128xbf16, #tpu.memory_space<any>>, %arg8: memref<16x128xf32, #tpu.memory_space<vmem>>, %arg9: memref<128x128xbf16, #tpu.memory_space<vmem>>, %arg10: memref<128x128xbf16, #tpu.memory_space<vmem>>, %arg11: memref<128x128xbf16, #tpu.memory_space<vmem>>, %arg12: memref<3x!tpu.dma_semaphore, #tpu.memory_space<semaphore_mem>>) attributes {dimension_semantics = [#tpu.dimension_semantics<parallel>], iteration_bounds = array<i64: 1>, scalar_prefetch = 0 : i64, scratch_operands = 4 : i64, tpu.core_type = #tpu.core_type<tc>, window_params = [{transform_indices = @transform_0, window_bounds = array<i64: 16, 128>}, {pipeline_mode = #tpu.pipeline_mode<synchronous>, transform_indices = @transform_1, window_bounds = array<i64: 128, 128>}, {pipeline_mode = #tpu.pipeline_mode<synchronous>, transform_indices = @transform_2, window_bounds = array<i64: 16, 128>}, {pipeline_mode = #tpu.pipeline_mode<synchronous>, transform_indices = @transform_3, window_bounds = array<i64: 1, 128>}, {}, {}, {}, {transform_indices = @transform_7, window_bounds = array<i64: 16, 128>}]} {
    %c0_i32 = arith.constant 0 : i32
    %0 = tpu.memref_slice %arg12[%c0_i32] : memref<3x!tpu.dma_semaphore, #tpu.memory_space<semaphore_mem>> -> memref<1x!tpu.dma_semaphore, #tpu.memory_space<semaphore_mem>>
    %1 = tpu.memref_squeeze %0 : memref<1x!tpu.dma_semaphore, #tpu.memory_space<semaphore_mem>> -> memref<!tpu.dma_semaphore, #tpu.memory_space<semaphore_mem>>
    tpu.enqueue_dma source(%arg5 : memref<128x128xbf16, #tpu.memory_space<any>>) target(%arg9 : memref<128x128xbf16, #tpu.memory_space<vmem>>) target_semaphore(%1 : memref<!tpu.dma_semaphore, #tpu.memory_space<semaphore_mem>>)
    %c1_i32 = arith.constant 1 : i32
    %2 = tpu.memref_slice %arg12[%c1_i32] : memref<3x!tpu.dma_semaphore, #tpu.memory_space<semaphore_mem>> -> memref<1x!tpu.dma_semaphore, #tpu.memory_space<semaphore_mem>>
    %3 = tpu.memref_squeeze %2 : memref<1x!tpu.dma_semaphore, #tpu.memory_space<semaphore_mem>> -> memref<!tpu.dma_semaphore, #tpu.memory_space<semaphore_mem>>
    tpu.enqueue_dma source(%arg6 : memref<128x128xbf16, #tpu.memory_space<any>>) target(%arg10 : memref<128x128xbf16, #tpu.memory_space<vmem>>) target_semaphore(%3 : memref<!tpu.dma_semaphore, #tpu.memory_space<semaphore_mem>>)
    %c2_i32 = arith.constant 2 : i32
    %4 = tpu.memref_slice %arg12[%c2_i32] : memref<3x!tpu.dma_semaphore, #tpu.memory_space<semaphore_mem>> -> memref<1x!tpu.dma_semaphore, #tpu.memory_space<semaphore_mem>>
    %5 = tpu.memref_squeeze %4 : memref<1x!tpu.dma_semaphore, #tpu.memory_space<semaphore_mem>> -> memref<!tpu.dma_semaphore, #tpu.memory_space<semaphore_mem>>
    tpu.enqueue_dma source(%arg7 : memref<128x128xbf16, #tpu.memory_space<any>>) target(%arg11 : memref<128x128xbf16, #tpu.memory_space<vmem>>) target_semaphore(%5 : memref<!tpu.dma_semaphore, #tpu.memory_space<semaphore_mem>>)
    %c0 = arith.constant 0 : index
    %c0_0 = arith.constant 0 : index
    %6 = vector.load %arg1[%c0, %c0_0] : memref<16x128xbf16, #tpu.memory_space<vmem>>, vector<16x128xbf16>
    %c0_1 = arith.constant 0 : index
    %c0_2 = arith.constant 0 : index
    %7 = vector.load %arg2[%c0_1, %c0_2] : memref<128x128xbf16, #tpu.memory_space<vmem>>, vector<128x128xbf16>
    %c0_3 = arith.constant 0 : index
    %c0_4 = arith.constant 0 : index
    %8 = vector.load %arg3[%c0_3, %c0_4] : memref<16x128xf32, #tpu.memory_space<vmem>>, vector<16x128xf32>
    %c0_5 = arith.constant 0 : index
    %c0_6 = arith.constant 0 : index
    %9 = vector.load %arg4[%c0_5, %c0_6] : memref<1x128xf32, #tpu.memory_space<vmem>>, vector<1x128xf32>
    %10 = vector.extract_strided_slice %8 {offsets = [0, 0], sizes = [1, 128], strides = [1, 1]} : vector<16x128xf32> to vector<1x128xf32>
    %11 = vector.extract_strided_slice %8 {offsets = [1, 0], sizes = [1, 128], strides = [1, 1]} : vector<16x128xf32> to vector<1x128xf32>
    %12 = vector.extract_strided_slice %8 {offsets = [2, 0], sizes = [1, 128], strides = [1, 1]} : vector<16x128xf32> to vector<1x128xf32>
    %13 = vector.extract_strided_slice %8 {offsets = [3, 0], sizes = [1, 128], strides = [1, 1]} : vector<16x128xf32> to vector<1x128xf32>
    %14 = vector.extract_strided_slice %8 {offsets = [4, 0], sizes = [1, 128], strides = [1, 1]} : vector<16x128xf32> to vector<1x128xf32>
    %15 = vector.extract_strided_slice %8 {offsets = [5, 0], sizes = [1, 128], strides = [1, 1]} : vector<16x128xf32> to vector<1x128xf32>
    %16 = vector.extract_strided_slice %8 {offsets = [6, 0], sizes = [1, 128], strides = [1, 1]} : vector<16x128xf32> to vector<1x128xf32>
    %17 = vector.extract_strided_slice %8 {offsets = [7, 0], sizes = [1, 128], strides = [1, 1]} : vector<16x128xf32> to vector<1x128xf32>
    %18 = vector.extract_strided_slice %8 {offsets = [8, 0], sizes = [1, 128], strides = [1, 1]} : vector<16x128xf32> to vector<1x128xf32>
    %cst = arith.constant dense<0.000000e+00> : vector<16x128xf32>
    %19 = tpu.matmul %6, %7, %cst {dimension_numbers = #tpu.dot_dimension_numbers<[1], [0], [0], [1], [0, 0, 1, 1], [], []>} : vector<16x128xbf16>, vector<128x128xbf16>, vector<16x128xf32> -> vector<16x128xf32>
    %20 = vector.broadcast %10 : vector<1x128xf32> to vector<16x128xf32>
    %21 = arith.addf %19, %20 : vector<16x128xf32>
    %cst_7 = arith.constant dense<0.000000e+00> : vector<16xf32>
    %22 = vector.multi_reduction <add>, %21, %cst_7 [1] : vector<16x128xf32> to vector<16xf32>
    %23 = vector.shape_cast %22 : vector<16xf32> to vector<16x1xf32>
    %cst_8 = arith.constant 1.562500e-02 : f32
    %24 = vector.broadcast %cst_8 : f32 to vector<16x1xf32>
    %25 = arith.mulf %23, %24 : vector<16x1xf32>
    %26 = arith.mulf %21, %21 : vector<16x128xf32>
    %cst_9 = arith.constant dense<0.000000e+00> : vector<16xf32>
    %27 = vector.multi_reduction <add>, %26, %cst_9 [1] : vector<16x128xf32> to vector<16xf32>
    %28 = vector.shape_cast %27 : vector<16xf32> to vector<16x1xf32>
    %cst_10 = arith.constant 1.562500e-02 : f32
    %29 = vector.broadcast %cst_10 : f32 to vector<16x1xf32>
    %30 = arith.mulf %28, %29 : vector<16x1xf32>
    %31 = arith.mulf %25, %25 : vector<16x1xf32>
    %32 = arith.subf %30, %31 : vector<16x1xf32>
    %cst_11 = arith.constant 0.000000e+00 : f32
    %33 = vector.broadcast %cst_11 : f32 to vector<16x1xf32>
    %34 = arith.maximumf %32, %33 : vector<16x1xf32>
    %35 = vector.broadcast %25 : vector<16x1xf32> to vector<16x128xf32>
    %36 = arith.subf %21, %35 : vector<16x128xf32>
    %cst_12 = arith.constant 9.99999974E-6 : f32
    %37 = vector.broadcast %cst_12 : f32 to vector<16x1xf32>
    %38 = arith.addf %34, %37 : vector<16x1xf32>
    %39 = math.rsqrt %38 : vector<16x1xf32>
    %40 = vector.broadcast %39 : vector<16x1xf32> to vector<16x128xf32>
    %41 = arith.mulf %36, %40 : vector<16x128xf32>
    %42 = vector.broadcast %11 : vector<1x128xf32> to vector<16x128xf32>
    %43 = arith.mulf %41, %42 : vector<16x128xf32>
    %44 = vector.broadcast %12 : vector<1x128xf32> to vector<16x128xf32>
    %45 = arith.addf %43, %44 : vector<16x128xf32>
    %cst_13 = arith.constant 0.000000e+00 : f32
    %46 = vector.broadcast %cst_13 : f32 to vector<16x128xf32>
    %47 = arith.cmpf ogt, %45, %46 : vector<16x128xf32>
    %cst_14 = arith.constant 0.00999999977 : f32
    %48 = vector.broadcast %cst_14 : f32 to vector<16x128xf32>
    %49 = arith.mulf %48, %45 : vector<16x128xf32>
    %50 = arith.select %47, %45, %49 : vector<16x128xi1>, vector<16x128xf32>
    %c0_i32_15 = arith.constant 0 : i32
    %51 = tpu.memref_slice %arg12[%c0_i32_15] : memref<3x!tpu.dma_semaphore, #tpu.memory_space<semaphore_mem>> -> memref<1x!tpu.dma_semaphore, #tpu.memory_space<semaphore_mem>>
    %52 = tpu.memref_squeeze %51 : memref<1x!tpu.dma_semaphore, #tpu.memory_space<semaphore_mem>> -> memref<!tpu.dma_semaphore, #tpu.memory_space<semaphore_mem>>
    tpu.wait_dma2 semaphore(%52 : memref<!tpu.dma_semaphore, #tpu.memory_space<semaphore_mem>>) src(%arg5 : memref<128x128xbf16, #tpu.memory_space<any>>) dst(%arg9 : memref<128x128xbf16, #tpu.memory_space<vmem>>)
    %c0_16 = arith.constant 0 : index
    %c0_17 = arith.constant 0 : index
    %53 = vector.load %arg9[%c0_16, %c0_17] : memref<128x128xbf16, #tpu.memory_space<vmem>>, vector<128x128xbf16>
    %54 = arith.truncf %50 : vector<16x128xf32> to vector<16x128xbf16>
    %cst_18 = arith.constant dense<0.000000e+00> : vector<16x128xf32>
    %55 = tpu.matmul %54, %53, %cst_18 {dimension_numbers = #tpu.dot_dimension_numbers<[1], [0], [0], [1], [0, 0, 1, 1], [], []>} : vector<16x128xbf16>, vector<128x128xbf16>, vector<16x128xf32> -> vector<16x128xf32>
    %56 = vector.broadcast %13 : vector<1x128xf32> to vector<16x128xf32>
    %57 = arith.addf %55, %56 : vector<16x128xf32>
    %cst_19 = arith.constant dense<0.000000e+00> : vector<16xf32>
    %58 = vector.multi_reduction <add>, %57, %cst_19 [1] : vector<16x128xf32> to vector<16xf32>
    %59 = vector.shape_cast %58 : vector<16xf32> to vector<16x1xf32>
    %cst_20 = arith.constant 1.562500e-02 : f32
    %60 = vector.broadcast %cst_20 : f32 to vector<16x1xf32>
    %61 = arith.mulf %59, %60 : vector<16x1xf32>
    %62 = arith.mulf %57, %57 : vector<16x128xf32>
    %cst_21 = arith.constant dense<0.000000e+00> : vector<16xf32>
    %63 = vector.multi_reduction <add>, %62, %cst_21 [1] : vector<16x128xf32> to vector<16xf32>
    %64 = vector.shape_cast %63 : vector<16xf32> to vector<16x1xf32>
    %cst_22 = arith.constant 1.562500e-02 : f32
    %65 = vector.broadcast %cst_22 : f32 to vector<16x1xf32>
    %66 = arith.mulf %64, %65 : vector<16x1xf32>
    %67 = arith.mulf %61, %61 : vector<16x1xf32>
    %68 = arith.subf %66, %67 : vector<16x1xf32>
    %cst_23 = arith.constant 0.000000e+00 : f32
    %69 = vector.broadcast %cst_23 : f32 to vector<16x1xf32>
    %70 = arith.maximumf %68, %69 : vector<16x1xf32>
    %71 = vector.broadcast %61 : vector<16x1xf32> to vector<16x128xf32>
    %72 = arith.subf %57, %71 : vector<16x128xf32>
    %cst_24 = arith.constant 9.99999974E-6 : f32
    %73 = vector.broadcast %cst_24 : f32 to vector<16x1xf32>
    %74 = arith.addf %70, %73 : vector<16x1xf32>
    %75 = math.rsqrt %74 : vector<16x1xf32>
    %76 = vector.broadcast %75 : vector<16x1xf32> to vector<16x128xf32>
    %77 = arith.mulf %72, %76 : vector<16x128xf32>
    %78 = vector.broadcast %14 : vector<1x128xf32> to vector<16x128xf32>
    %79 = arith.mulf %77, %78 : vector<16x128xf32>
    %80 = vector.broadcast %15 : vector<1x128xf32> to vector<16x128xf32>
    %81 = arith.addf %79, %80 : vector<16x128xf32>
    %cst_25 = arith.constant 0.000000e+00 : f32
    %82 = vector.broadcast %cst_25 : f32 to vector<16x128xf32>
    %83 = arith.cmpf ogt, %81, %82 : vector<16x128xf32>
    %cst_26 = arith.constant 0.00999999977 : f32
    %84 = vector.broadcast %cst_26 : f32 to vector<16x128xf32>
    %85 = arith.mulf %84, %81 : vector<16x128xf32>
    %86 = arith.select %83, %81, %85 : vector<16x128xi1>, vector<16x128xf32>
    %c1_i32_27 = arith.constant 1 : i32
    %87 = tpu.memref_slice %arg12[%c1_i32_27] : memref<3x!tpu.dma_semaphore, #tpu.memory_space<semaphore_mem>> -> memref<1x!tpu.dma_semaphore, #tpu.memory_space<semaphore_mem>>
    %88 = tpu.memref_squeeze %87 : memref<1x!tpu.dma_semaphore, #tpu.memory_space<semaphore_mem>> -> memref<!tpu.dma_semaphore, #tpu.memory_space<semaphore_mem>>
    tpu.wait_dma2 semaphore(%88 : memref<!tpu.dma_semaphore, #tpu.memory_space<semaphore_mem>>) src(%arg6 : memref<128x128xbf16, #tpu.memory_space<any>>) dst(%arg10 : memref<128x128xbf16, #tpu.memory_space<vmem>>)
    %c0_28 = arith.constant 0 : index
    %c0_29 = arith.constant 0 : index
    %89 = vector.load %arg10[%c0_28, %c0_29] : memref<128x128xbf16, #tpu.memory_space<vmem>>, vector<128x128xbf16>
    %90 = arith.truncf %86 : vector<16x128xf32> to vector<16x128xbf16>
    %cst_30 = arith.constant dense<0.000000e+00> : vector<16x128xf32>
    %91 = tpu.matmul %90, %89, %cst_30 {dimension_numbers = #tpu.dot_dimension_numbers<[1], [0], [0], [1], [0, 0, 1, 1], [], []>} : vector<16x128xbf16>, vector<128x128xbf16>, vector<16x128xf32> -> vector<16x128xf32>
    %92 = vector.broadcast %16 : vector<1x128xf32> to vector<16x128xf32>
    %93 = arith.addf %91, %92 : vector<16x128xf32>
    %cst_31 = arith.constant dense<0.000000e+00> : vector<16xf32>
    %94 = vector.multi_reduction <add>, %93, %cst_31 [1] : vector<16x128xf32> to vector<16xf32>
    %95 = vector.shape_cast %94 : vector<16xf32> to vector<16x1xf32>
    %cst_32 = arith.constant 1.562500e-02 : f32
    %96 = vector.broadcast %cst_32 : f32 to vector<16x1xf32>
    %97 = arith.mulf %95, %96 : vector<16x1xf32>
    %98 = arith.mulf %93, %93 : vector<16x128xf32>
    %cst_33 = arith.constant dense<0.000000e+00> : vector<16xf32>
    %99 = vector.multi_reduction <add>, %98, %cst_33 [1] : vector<16x128xf32> to vector<16xf32>
    %100 = vector.shape_cast %99 : vector<16xf32> to vector<16x1xf32>
    %cst_34 = arith.constant 1.562500e-02 : f32
    %101 = vector.broadcast %cst_34 : f32 to vector<16x1xf32>
    %102 = arith.mulf %100, %101 : vector<16x1xf32>
    %103 = arith.mulf %97, %97 : vector<16x1xf32>
    %104 = arith.subf %102, %103 : vector<16x1xf32>
    %cst_35 = arith.constant 0.000000e+00 : f32
    %105 = vector.broadcast %cst_35 : f32 to vector<16x1xf32>
    %106 = arith.maximumf %104, %105 : vector<16x1xf32>
    %107 = vector.broadcast %97 : vector<16x1xf32> to vector<16x128xf32>
    %108 = arith.subf %93, %107 : vector<16x128xf32>
    %cst_36 = arith.constant 9.99999974E-6 : f32
    %109 = vector.broadcast %cst_36 : f32 to vector<16x1xf32>
    %110 = arith.addf %106, %109 : vector<16x1xf32>
    %111 = math.rsqrt %110 : vector<16x1xf32>
    %112 = vector.broadcast %111 : vector<16x1xf32> to vector<16x128xf32>
    %113 = arith.mulf %108, %112 : vector<16x128xf32>
    %114 = vector.broadcast %17 : vector<1x128xf32> to vector<16x128xf32>
    %115 = arith.mulf %113, %114 : vector<16x128xf32>
    %116 = vector.broadcast %18 : vector<1x128xf32> to vector<16x128xf32>
    %117 = arith.addf %115, %116 : vector<16x128xf32>
    %cst_37 = arith.constant 0.000000e+00 : f32
    %118 = vector.broadcast %cst_37 : f32 to vector<16x128xf32>
    %119 = arith.cmpf ogt, %117, %118 : vector<16x128xf32>
    %cst_38 = arith.constant 0.00999999977 : f32
    %120 = vector.broadcast %cst_38 : f32 to vector<16x128xf32>
    %121 = arith.mulf %120, %117 : vector<16x128xf32>
    %122 = arith.select %119, %117, %121 : vector<16x128xi1>, vector<16x128xf32>
    %c2_i32_39 = arith.constant 2 : i32
    %123 = tpu.memref_slice %arg12[%c2_i32_39] : memref<3x!tpu.dma_semaphore, #tpu.memory_space<semaphore_mem>> -> memref<1x!tpu.dma_semaphore, #tpu.memory_space<semaphore_mem>>
    %124 = tpu.memref_squeeze %123 : memref<1x!tpu.dma_semaphore, #tpu.memory_space<semaphore_mem>> -> memref<!tpu.dma_semaphore, #tpu.memory_space<semaphore_mem>>
    tpu.wait_dma2 semaphore(%124 : memref<!tpu.dma_semaphore, #tpu.memory_space<semaphore_mem>>) src(%arg7 : memref<128x128xbf16, #tpu.memory_space<any>>) dst(%arg11 : memref<128x128xbf16, #tpu.memory_space<vmem>>)
    %c0_40 = arith.constant 0 : index
    %c0_41 = arith.constant 0 : index
    %125 = vector.load %arg11[%c0_40, %c0_41] : memref<128x128xbf16, #tpu.memory_space<vmem>>, vector<128x128xbf16>
    %126 = arith.truncf %122 : vector<16x128xf32> to vector<16x128xbf16>
    %cst_42 = arith.constant dense<0.000000e+00> : vector<16x128xf32>
    %127 = tpu.matmul %126, %125, %cst_42 {dimension_numbers = #tpu.dot_dimension_numbers<[1], [0], [0], [1], [0, 0, 1, 1], [], []>} : vector<16x128xbf16>, vector<128x128xbf16>, vector<16x128xf32> -> vector<16x128xf32>
    %128 = vector.broadcast %9 : vector<1x128xf32> to vector<16x128xf32>
    %129 = arith.addf %127, %128 : vector<16x128xf32>
    %c0_43 = arith.constant 0 : index
    %c0_44 = arith.constant 0 : index
    %130 = vector.load %arg8[%c0_43, %c0_44] : memref<16x128xf32, #tpu.memory_space<vmem>>, vector<16x128xf32>
    tpu.vector_store %arg8[%c0_43, %c0_44], %129 {strides = array<i32>} : memref<16x128xf32, #tpu.memory_space<vmem>>, vector<16x128xf32>,
    return
  }
  func.func @transform_0(%arg0: i32) -> (i32, i32) {
    %c0_i32 = arith.constant 0 : i32
    %c0_i32_0 = arith.constant 0 : i32
    return %arg0, %c0_i32 : i32, i32
  }
  func.func @transform_1(%arg0: i32) -> (i32, i32) {
    %c0_i32 = arith.constant 0 : i32
    %c0_i32_0 = arith.constant 0 : i32
    %c0_i32_1 = arith.constant 0 : i32
    return %c0_i32, %c0_i32_0 : i32, i32
  }
  func.func @transform_2(%arg0: i32) -> (i32, i32) {
    %c0_i32 = arith.constant 0 : i32
    %c0_i32_0 = arith.constant 0 : i32
    %c0_i32_1 = arith.constant 0 : i32
    return %c0_i32, %c0_i32_0 : i32, i32
  }
  func.func @transform_3(%arg0: i32) -> (i32, i32) {
    %c0_i32 = arith.constant 0 : i32
    %c0_i32_0 = arith.constant 0 : i32
    %c0_i32_1 = arith.constant 0 : i32
    return %c0_i32, %c0_i32_0 : i32, i32
  }
  func.func @transform_7(%arg0: i32) -> (i32, i32) {
    %c0_i32 = arith.constant 0 : i32
    %c0_i32_0 = arith.constant 0 : i32
    return %arg0, %c0_i32 : i32, i32
  }
}

module attributes {stable_mosaic.version = 11 : i64} {
  func.func @mlp_kernel_prefetch(%arg0: i32, %arg1: memref<16x128xbf16, #tpu.memory_space<vmem>>, %arg2: memref<128x128xbf16, #tpu.memory_space<vmem>>, %arg3: memref<16x128xf32, #tpu.memory_space<vmem>>, %arg4: memref<1x128xf32, #tpu.memory_space<vmem>>, %arg5: memref<128x128xbf16, #tpu.memory_space<any>>, %arg6: memref<128x128xbf16, #tpu.memory_space<any>>, %arg7: memref<128x128xbf16, #tpu.memory_space<any>>, %arg8: memref<16x128xf32, #tpu.memory_space<vmem>>, %arg9: memref<128x128xbf16, #tpu.memory_space<vmem>>, %arg10: memref<128x128xbf16, #tpu.memory_space<vmem>>, %arg11: memref<128x128xbf16, #tpu.memory_space<vmem>>, %arg12: memref<3x!tpu.dma_semaphore, #tpu.memory_space<semaphore_mem>>) attributes {dimension_semantics = [#tpu.dimension_semantics<parallel>], iteration_bounds = array<i64: 1>, scalar_prefetch = 0 : i64, scratch_operands = 4 : i64, tpu.core_type = #tpu.core_type<tc>, window_params = [{transform_indices = @transform_0, window_bounds = array<i64: 16, 128>}, {pipeline_mode = #tpu.pipeline_mode<synchronous>, transform_indices = @transform_1, window_bounds = array<i64: 128, 128>}, {pipeline_mode = #tpu.pipeline_mode<synchronous>, transform_indices = @transform_2, window_bounds = array<i64: 16, 128>}, {pipeline_mode = #tpu.pipeline_mode<synchronous>, transform_indices = @transform_3, window_bounds = array<i64: 1, 128>}, {}, {}, {}, {transform_indices = @transform_7, window_bounds = array<i64: 16, 128>}]} {
    %c0_i32 = arith.constant 0 : i32
    %0 = tpu.memref_slice %arg12[%c0_i32] : memref<3x!tpu.dma_semaphore, #tpu.memory_space<semaphore_mem>> -> memref<1x!tpu.dma_semaphore, #tpu.memory_space<semaphore_mem>>
    %1 = tpu.memref_squeeze %0 : memref<1x!tpu.dma_semaphore, #tpu.memory_space<semaphore_mem>> -> memref<!tpu.dma_semaphore, #tpu.memory_space<semaphore_mem>>
    tpu.enqueue_dma source(%arg5 : memref<128x128xbf16, #tpu.memory_space<any>>) target(%arg9 : memref<128x128xbf16, #tpu.memory_space<vmem>>) target_semaphore(%1 : memref<!tpu.dma_semaphore, #tpu.memory_space<semaphore_mem>>)
    %c1_i32 = arith.constant 1 : i32
    %2 = tpu.memref_slice %arg12[%c1_i32] : memref<3x!tpu.dma_semaphore, #tpu.memory_space<semaphore_mem>> -> memref<1x!tpu.dma_semaphore, #tpu.memory_space<semaphore_mem>>
    %3 = tpu.memref_squeeze %2 : memref<1x!tpu.dma_semaphore, #tpu.memory_space<semaphore_mem>> -> memref<!tpu.dma_semaphore, #tpu.memory_space<semaphore_mem>>
    tpu.enqueue_dma source(%arg6 : memref<128x128xbf16, #tpu.memory_space<any>>) target(%arg10 : memref<128x128xbf16, #tpu.memory_space<vmem>>) target_semaphore(%3 : memref<!tpu.dma_semaphore, #tpu.memory_space<semaphore_mem>>)
    %c2_i32 = arith.constant 2 : i32
    %4 = tpu.memref_slice %arg12[%c2_i32] : memref<3x!tpu.dma_semaphore, #tpu.memory_space<semaphore_mem>> -> memref<1x!tpu.dma_semaphore, #tpu.memory_space<semaphore_mem>>
    %5 = tpu.memref_squeeze %4 : memref<1x!tpu.dma_semaphore, #tpu.memory_space<semaphore_mem>> -> memref<!tpu.dma_semaphore, #tpu.memory_space<semaphore_mem>>
    tpu.enqueue_dma source(%arg7 : memref<128x128xbf16, #tpu.memory_space<any>>) target(%arg11 : memref<128x128xbf16, #tpu.memory_space<vmem>>) target_semaphore(%5 : memref<!tpu.dma_semaphore, #tpu.memory_space<semaphore_mem>>)
    %c0 = arith.constant 0 : index
    %c0_0 = arith.constant 0 : index
    %6 = vector.load %arg1[%c0, %c0_0] : memref<16x128xbf16, #tpu.memory_space<vmem>>, vector<16x128xbf16>
    %c0_1 = arith.constant 0 : index
    %c0_2 = arith.constant 0 : index
    %7 = vector.load %arg2[%c0_1, %c0_2] : memref<128x128xbf16, #tpu.memory_space<vmem>>, vector<128x128xbf16>
    %c0_3 = arith.constant 0 : index
    %c0_4 = arith.constant 0 : index
    %8 = vector.load %arg3[%c0_3, %c0_4] : memref<16x128xf32, #tpu.memory_space<vmem>>, vector<16x128xf32>
    %c0_5 = arith.constant 0 : index
    %c0_6 = arith.constant 0 : index
    %9 = vector.load %arg4[%c0_5, %c0_6] : memref<1x128xf32, #tpu.memory_space<vmem>>, vector<1x128xf32>
    %10 = vector.extract_strided_slice %8 {offsets = [0, 0], sizes = [1, 128], strides = [1, 1]} : vector<16x128xf32> to vector<1x128xf32>
    %11 = vector.extract_strided_slice %8 {offsets = [1, 0], sizes = [1, 128], strides = [1, 1]} : vector<16x128xf32> to vector<1x128xf32>
    %12 = vector.extract_strided_slice %8 {offsets = [2, 0], sizes = [1, 128], strides = [1, 1]} : vector<16x128xf32> to vector<1x128xf32>
    %13 = vector.extract_strided_slice %8 {offsets = [3, 0], sizes = [1, 128], strides = [1, 1]} : vector<16x128xf32> to vector<1x128xf32>
    %14 = vector.extract_strided_slice %8 {offsets = [4, 0], sizes = [1, 128], strides = [1, 1]} : vector<16x128xf32> to vector<1x128xf32>
    %15 = vector.extract_strided_slice %8 {offsets = [5, 0], sizes = [1, 128], strides = [1, 1]} : vector<16x128xf32> to vector<1x128xf32>
    %16 = vector.extract_strided_slice %8 {offsets = [6, 0], sizes = [1, 128], strides = [1, 1]} : vector<16x128xf32> to vector<1x128xf32>
    %17 = vector.extract_strided_slice %8 {offsets = [7, 0], sizes = [1, 128], strides = [1, 1]} : vector<16x128xf32> to vector<1x128xf32>
    %18 = vector.extract_strided_slice %8 {offsets = [8, 0], sizes = [1, 128], strides = [1, 1]} : vector<16x128xf32> to vector<1x128xf32>
    %cst = arith.constant dense<0.000000e+00> : vector<16x128xf32>
    %19 = tpu.matmul %6, %7, %cst {dimension_numbers = #tpu.dot_dimension_numbers<[1], [0], [0], [1], [0, 0, 1, 1], [], []>} : vector<16x128xbf16>, vector<128x128xbf16>, vector<16x128xf32> -> vector<16x128xf32>
    %20 = vector.broadcast %10 : vector<1x128xf32> to vector<16x128xf32>
    %21 = arith.addf %19, %20 : vector<16x128xf32>
    %cst_7 = arith.constant dense<0.000000e+00> : vector<16xf32>
    %22 = vector.multi_reduction <add>, %21, %cst_7 [1] : vector<16x128xf32> to vector<16xf32>
    %23 = vector.shape_cast %22 : vector<16xf32> to vector<16x1xf32>
    %cst_8 = arith.constant 1.562500e-02 : f32
    %24 = vector.broadcast %cst_8 : f32 to vector<16x1xf32>
    %25 = arith.mulf %23, %24 : vector<16x1xf32>
    %26 = arith.mulf %21, %21 : vector<16x128xf32>
    %cst_9 = arith.constant dense<0.000000e+00> : vector<16xf32>
    %27 = vector.multi_reduction <add>, %26, %cst_9 [1] : vector<16x128xf32> to vector<16xf32>
    %28 = vector.shape_cast %27 : vector<16xf32> to vector<16x1xf32>
    %cst_10 = arith.constant 1.562500e-02 : f32
    %29 = vector.broadcast %cst_10 : f32 to vector<16x1xf32>
    %30 = arith.mulf %28, %29 : vector<16x1xf32>
    %31 = arith.mulf %25, %25 : vector<16x1xf32>
    %32 = arith.subf %30, %31 : vector<16x1xf32>
    %cst_11 = arith.constant 0.000000e+00 : f32
    %33 = vector.broadcast %cst_11 : f32 to vector<16x1xf32>
    %34 = arith.maximumf %32, %33 : vector<16x1xf32>
    %35 = vector.broadcast %25 : vector<16x1xf32> to vector<16x128xf32>
    %36 = arith.subf %21, %35 : vector<16x128xf32>
    %cst_12 = arith.constant 9.99999974E-6 : f32
    %37 = vector.broadcast %cst_12 : f32 to vector<16x1xf32>
    %38 = arith.addf %34, %37 : vector<16x1xf32>
    %39 = math.rsqrt %38 : vector<16x1xf32>
    %40 = vector.broadcast %39 : vector<16x1xf32> to vector<16x128xf32>
    %41 = arith.mulf %36, %40 : vector<16x128xf32>
    %42 = vector.broadcast %11 : vector<1x128xf32> to vector<16x128xf32>
    %43 = arith.mulf %41, %42 : vector<16x128xf32>
    %44 = vector.broadcast %12 : vector<1x128xf32> to vector<16x128xf32>
    %45 = arith.addf %43, %44 : vector<16x128xf32>
    %cst_13 = arith.constant 0.000000e+00 : f32
    %46 = vector.broadcast %cst_13 : f32 to vector<16x128xf32>
    %47 = arith.cmpf ogt, %45, %46 : vector<16x128xf32>
    %cst_14 = arith.constant 0.00999999977 : f32
    %48 = vector.broadcast %cst_14 : f32 to vector<16x128xf32>
    %49 = arith.mulf %48, %45 : vector<16x128xf32>
    %50 = arith.select %47, %45, %49 : vector<16x128xi1>, vector<16x128xf32>
    %c0_i32_15 = arith.constant 0 : i32
    %51 = tpu.memref_slice %arg12[%c0_i32_15] : memref<3x!tpu.dma_semaphore, #tpu.memory_space<semaphore_mem>> -> memref<1x!tpu.dma_semaphore, #tpu.memory_space<semaphore_mem>>
    %52 = tpu.memref_squeeze %51 : memref<1x!tpu.dma_semaphore, #tpu.memory_space<semaphore_mem>> -> memref<!tpu.dma_semaphore, #tpu.memory_space<semaphore_mem>>
    tpu.wait_dma2 semaphore(%52 : memref<!tpu.dma_semaphore, #tpu.memory_space<semaphore_mem>>) src(%arg5 : memref<128x128xbf16, #tpu.memory_space<any>>) dst(%arg9 : memref<128x128xbf16, #tpu.memory_space<vmem>>)
    %c0_16 = arith.constant 0 : index
    %c0_17 = arith.constant 0 : index
    %53 = vector.load %arg9[%c0_16, %c0_17] : memref<128x128xbf16, #tpu.memory_space<vmem>>, vector<128x128xbf16>
    %54 = arith.truncf %50 : vector<16x128xf32> to vector<16x128xbf16>
    %cst_18 = arith.constant dense<0.000000e+00> : vector<16x128xf32>
    %55 = tpu.matmul %54, %53, %cst_18 {dimension_numbers = #tpu.dot_dimension_numbers<[1], [0], [0], [1], [0, 0, 1, 1], [], []>} : vector<16x128xbf16>, vector<128x128xbf16>, vector<16x128xf32> -> vector<16x128xf32>
    %56 = vector.broadcast %13 : vector<1x128xf32> to vector<16x128xf32>
    %57 = arith.addf %55, %56 : vector<16x128xf32>
    %cst_19 = arith.constant dense<0.000000e+00> : vector<16xf32>
    %58 = vector.multi_reduction <add>, %57, %cst_19 [1] : vector<16x128xf32> to vector<16xf32>
    %59 = vector.shape_cast %58 : vector<16xf32> to vector<16x1xf32>
    %cst_20 = arith.constant 1.562500e-02 : f32
    %60 = vector.broadcast %cst_20 : f32 to vector<16x1xf32>
    %61 = arith.mulf %59, %60 : vector<16x1xf32>
    %62 = arith.mulf %57, %57 : vector<16x128xf32>
    %cst_21 = arith.constant dense<0.000000e+00> : vector<16xf32>
    %63 = vector.multi_reduction <add>, %62, %cst_21 [1] : vector<16x128xf32> to vector<16xf32>
    %64 = vector.shape_cast %63 : vector<16xf32> to vector<16x1xf32>
    %cst_22 = arith.constant 1.562500e-02 : f32
    %65 = vector.broadcast %cst_22 : f32 to vector<16x1xf32>
    %66 = arith.mulf %64, %65 : vector<16x1xf32>
    %67 = arith.mulf %61, %61 : vector<16x1xf32>
    %68 = arith.subf %66, %67 : vector<16x1xf32>
    %cst_23 = arith.constant 0.000000e+00 : f32
    %69 = vector.broadcast %cst_23 : f32 to vector<16x1xf32>
    %70 = arith.maximumf %68, %69 : vector<16x1xf32>
    %71 = vector.broadcast %61 : vector<16x1xf32> to vector<16x128xf32>
    %72 = arith.subf %57, %71 : vector<16x128xf32>
    %cst_24 = arith.constant 9.99999974E-6 : f32
    %73 = vector.broadcast %cst_24 : f32 to vector<16x1xf32>
    %74 = arith.addf %70, %73 : vector<16x1xf32>
    %75 = math.rsqrt %74 : vector<16x1xf32>
    %76 = vector.broadcast %75 : vector<16x1xf32> to vector<16x128xf32>
    %77 = arith.mulf %72, %76 : vector<16x128xf32>
    %78 = vector.broadcast %14 : vector<1x128xf32> to vector<16x128xf32>
    %79 = arith.mulf %77, %78 : vector<16x128xf32>
    %80 = vector.broadcast %15 : vector<1x128xf32> to vector<16x128xf32>
    %81 = arith.addf %79, %80 : vector<16x128xf32>
    %cst_25 = arith.constant 0.000000e+00 : f32
    %82 = vector.broadcast %cst_25 : f32 to vector<16x128xf32>
    %83 = arith.cmpf ogt, %81, %82 : vector<16x128xf32>
    %cst_26 = arith.constant 0.00999999977 : f32
    %84 = vector.broadcast %cst_26 : f32 to vector<16x128xf32>
    %85 = arith.mulf %84, %81 : vector<16x128xf32>
    %86 = arith.select %83, %81, %85 : vector<16x128xi1>, vector<16x128xf32>
    %c1_i32_27 = arith.constant 1 : i32
    %87 = tpu.memref_slice %arg12[%c1_i32_27] : memref<3x!tpu.dma_semaphore, #tpu.memory_space<semaphore_mem>> -> memref<1x!tpu.dma_semaphore, #tpu.memory_space<semaphore_mem>>
    %88 = tpu.memref_squeeze %87 : memref<1x!tpu.dma_semaphore, #tpu.memory_space<semaphore_mem>> -> memref<!tpu.dma_semaphore, #tpu.memory_space<semaphore_mem>>
    tpu.wait_dma2 semaphore(%88 : memref<!tpu.dma_semaphore, #tpu.memory_space<semaphore_mem>>) src(%arg6 : memref<128x128xbf16, #tpu.memory_space<any>>) dst(%arg10 : memref<128x128xbf16, #tpu.memory_space<vmem>>)
    %c0_28 = arith.constant 0 : index
    %c0_29 = arith.constant 0 : index
    %89 = vector.load %arg10[%c0_28, %c0_29] : memref<128x128xbf16, #tpu.memory_space<vmem>>, vector<128x128xbf16>
    %90 = arith.truncf %86 : vector<16x128xf32> to vector<16x128xbf16>
    %cst_30 = arith.constant dense<0.000000e+00> : vector<16x128xf32>
    %91 = tpu.matmul %90, %89, %cst_30 {dimension_numbers = #tpu.dot_dimension_numbers<[1], [0], [0], [1], [0, 0, 1, 1], [], []>} : vector<16x128xbf16>, vector<128x128xbf16>, vector<16x128xf32> -> vector<16x128xf32>
    %92 = vector.broadcast %16 : vector<1x128xf32> to vector<16x128xf32>
    %93 = arith.addf %91, %92 : vector<16x128xf32>
    %cst_31 = arith.constant dense<0.000000e+00> : vector<16xf32>
    %94 = vector.multi_reduction <add>, %93, %cst_31 [1] : vector<16x128xf32> to vector<16xf32>
    %95 = vector.shape_cast %94 : vector<16xf32> to vector<16x1xf32>
    %cst_32 = arith.constant 1.562500e-02 : f32
    %96 = vector.broadcast %cst_32 : f32 to vector<16x1xf32>
    %97 = arith.mulf %95, %96 : vector<16x1xf32>
    %98 = arith.mulf %93, %93 : vector<16x128xf32>
    %cst_33 = arith.constant dense<0.000000e+00> : vector<16xf32>
    %99 = vector.multi_reduction <add>, %98, %cst_33 [1] : vector<16x128xf32> to vector<16xf32>
    %100 = vector.shape_cast %99 : vector<16xf32> to vector<16x1xf32>
    %cst_34 = arith.constant 1.562500e-02 : f32
    %101 = vector.broadcast %cst_34 : f32 to vector<16x1xf32>
    %102 = arith.mulf %100, %101 : vector<16x1xf32>
    %103 = arith.mulf %97, %97 : vector<16x1xf32>
    %104 = arith.subf %102, %103 : vector<16x1xf32>
    %cst_35 = arith.constant 0.000000e+00 : f32
    %105 = vector.broadcast %cst_35 : f32 to vector<16x1xf32>
    %106 = arith.maximumf %104, %105 : vector<16x1xf32>
    %107 = vector.broadcast %97 : vector<16x1xf32> to vector<16x128xf32>
    %108 = arith.subf %93, %107 : vector<16x128xf32>
    %cst_36 = arith.constant 9.99999974E-6 : f32
    %109 = vector.broadcast %cst_36 : f32 to vector<16x1xf32>
    %110 = arith.addf %106, %109 : vector<16x1xf32>
    %111 = math.rsqrt %110 : vector<16x1xf32>
    %112 = vector.broadcast %111 : vector<16x1xf32> to vector<16x128xf32>
    %113 = arith.mulf %108, %112 : vector<16x128xf32>
    %114 = vector.broadcast %17 : vector<1x128xf32> to vector<16x128xf32>
    %115 = arith.mulf %113, %114 : vector<16x128xf32>
    %116 = vector.broadcast %18 : vector<1x128xf32> to vector<16x128xf32>
    %117 = arith.addf %115, %116 : vector<16x128xf32>
    %cst_37 = arith.constant 0.000000e+00 : f32
    %118 = vector.broadcast %cst_37 : f32 to vector<16x128xf32>
    %119 = arith.cmpf ogt, %117, %118 : vector<16x128xf32>
    %cst_38 = arith.constant 0.00999999977 : f32
    %120 = vector.broadcast %cst_38 : f32 to vector<16x128xf32>
    %121 = arith.mulf %120, %117 : vector<16x128xf32>
    %122 = arith.select %119, %117, %121 : vector<16x128xi1>, vector<16x128xf32>
    %c2_i32_39 = arith.constant 2 : i32
    %123 = tpu.memref_slice %arg12[%c2_i32_39] : memref<3x!tpu.dma_semaphore, #tpu.memory_space<semaphore_mem>> -> memref<1x!tpu.dma_semaphore, #tpu.memory_space<semaphore_mem>>
    %124 = tpu.memref_squeeze %123 : memref<1x!tpu.dma_semaphore, #tpu.memory_space<semaphore_mem>> -> memref<!tpu.dma_semaphore, #tpu.memory_space<semaphore_mem>>
    tpu.wait_dma2 semaphore(%124 : memref<!tpu.dma_semaphore, #tpu.memory_space<semaphore_mem>>) src(%arg7 : memref<128x128xbf16, #tpu.memory_space<any>>) dst(%arg11 : memref<128x128xbf16, #tpu.memory_space<vmem>>)
    %c0_40 = arith.constant 0 : index
    %c0_41 = arith.constant 0 : index
    %125 = vector.load %arg11[%c0_40, %c0_41] : memref<128x128xbf16, #tpu.memory_space<vmem>>, vector<128x128xbf16>
    %126 = arith.truncf %122 : vector<16x128xf32> to vector<16x128xbf16>
    %cst_42 = arith.constant dense<0.000000e+00> : vector<16x128xf32>
    %127 = tpu.matmul %126, %125, %cst_42 {dimension_numbers = #tpu.dot_dimension_numbers<[1], [0], [0], [1], [0, 0, 1, 1], [], []>} : vector<16x128xbf16>, vector<128x128xbf16>, vector<16x128xf32> -> vector<16x128xf32>
    %128 = vector.broadcast %9 : vector<1x128xf32> to vector<16x128xf32>
    %129 = arith.addf %127, %128 : vector<16x128xf32>
    %c0_43 = arith.constant 0 : index
    %c0_44 = arith.constant 0 : index
    %130 = vector.load %arg8[%c0_43, %c0_44] : memref<16x128xf32, #tpu.memory_space<vmem>>, vector<16x128xf32>
    tpu.vector_store %arg8[%c0_43, %c0_44], %129 {strides = array<i32>} : memref<16x128xf32, #tpu.memory_space<vmem>>, vector<16x128xf32>,
    return
  }
  func.func @transform_0(%arg0: i32) -> (i32, i32) {
    %c0_i32 = arith.constant 0 : i32
    %c0_i32_0 = arith.constant 0 : i32
    return %arg0, %c0_i32 : i32, i32
  }
  func.func @transform_1(%arg0: i32) -> (i32, i32) {
    %c0_i32 = arith.constant 0 : i32
    %c0_i32_0 = arith.constant 0 : i32
    %c0_i32_1 = arith.constant 0 : i32
    return %c0_i32, %c0_i32_0 : i32, i32
  }
  func.func @transform_2(%arg0: i32) -> (i32, i32) {
    %c0_i32 = arith.constant 0 : i32
    %c0_i32_0 = arith.constant 0 : i32
    %c0_i32_1 = arith.constant 0 : i32
    return %c0_i32, %c0_i32_0 : i32, i32
  }
  func.func @transform_3(%arg0: i32) -> (i32, i32) {
    %c0_i32 = arith.constant 0 : i32
    %c0_i32_0 = arith.constant 0 : i32
    %c0_i32_1 = arith.constant 0 : i32
    return %c0_i32, %c0_i32_0 : i32, i32
  }
  func.func @transform_7(%arg0: i32) -> (i32, i32) {
    %c0_i32 = arith.constant 0 : i32
    %c0_i32_0 = arith.constant 0 : i32
    return %arg0, %c0_i32 : i32, i32
  }
}

module attributes {stable_mosaic.version = 11 : i64} {
  func.func @mlp_kernel_pipelined(%arg0: i32, %arg1: memref<16x128xbf16, #tpu.memory_space<vmem>>, %arg2: memref<128x128xbf16, #tpu.memory_space<vmem>>, %arg3: memref<128x128xbf16, #tpu.memory_space<vmem>>, %arg4: memref<128x128xbf16, #tpu.memory_space<vmem>>, %arg5: memref<128x128xbf16, #tpu.memory_space<vmem>>, %arg6: memref<16x128xf32, #tpu.memory_space<vmem>>, %arg7: memref<1x128xf32, #tpu.memory_space<vmem>>, %arg8: memref<16x128xf32, #tpu.memory_space<vmem>>) attributes {dimension_semantics = [#tpu.dimension_semantics<parallel>], iteration_bounds = array<i64: 1>, scalar_prefetch = 0 : i64, scratch_operands = 0 : i64, tpu.core_type = #tpu.core_type<tc>, window_params = [{transform_indices = @transform_0, window_bounds = array<i64: 16, 128>}, {pipeline_mode = #tpu.pipeline_mode<synchronous>, transform_indices = @transform_1, window_bounds = array<i64: 128, 128>}, {pipeline_mode = #tpu.pipeline_mode<synchronous>, transform_indices = @transform_2, window_bounds = array<i64: 128, 128>}, {pipeline_mode = #tpu.pipeline_mode<synchronous>, transform_indices = @transform_3, window_bounds = array<i64: 128, 128>}, {pipeline_mode = #tpu.pipeline_mode<synchronous>, transform_indices = @transform_4, window_bounds = array<i64: 128, 128>}, {pipeline_mode = #tpu.pipeline_mode<synchronous>, transform_indices = @transform_5, window_bounds = array<i64: 16, 128>}, {pipeline_mode = #tpu.pipeline_mode<synchronous>, transform_indices = @transform_6, window_bounds = array<i64: 1, 128>}, {transform_indices = @transform_7, window_bounds = array<i64: 16, 128>}]} {
    %c0 = arith.constant 0 : index
    %c0_0 = arith.constant 0 : index
    %0 = vector.load %arg1[%c0, %c0_0] : memref<16x128xbf16, #tpu.memory_space<vmem>>, vector<16x128xbf16>
    %c0_1 = arith.constant 0 : index
    %c0_2 = arith.constant 0 : index
    %1 = vector.load %arg2[%c0_1, %c0_2] : memref<128x128xbf16, #tpu.memory_space<vmem>>, vector<128x128xbf16>
    %c0_3 = arith.constant 0 : index
    %c0_4 = arith.constant 0 : index
    %2 = vector.load %arg6[%c0_3, %c0_4] : memref<16x128xf32, #tpu.memory_space<vmem>>, vector<16x128xf32>
    %c0_5 = arith.constant 0 : index
    %c0_6 = arith.constant 0 : index
    %3 = vector.load %arg7[%c0_5, %c0_6] : memref<1x128xf32, #tpu.memory_space<vmem>>, vector<1x128xf32>
    %4 = vector.extract_strided_slice %2 {offsets = [0, 0], sizes = [1, 128], strides = [1, 1]} : vector<16x128xf32> to vector<1x128xf32>
    %5 = vector.extract_strided_slice %2 {offsets = [1, 0], sizes = [1, 128], strides = [1, 1]} : vector<16x128xf32> to vector<1x128xf32>
    %6 = vector.extract_strided_slice %2 {offsets = [2, 0], sizes = [1, 128], strides = [1, 1]} : vector<16x128xf32> to vector<1x128xf32>
    %7 = vector.extract_strided_slice %2 {offsets = [3, 0], sizes = [1, 128], strides = [1, 1]} : vector<16x128xf32> to vector<1x128xf32>
    %8 = vector.extract_strided_slice %2 {offsets = [4, 0], sizes = [1, 128], strides = [1, 1]} : vector<16x128xf32> to vector<1x128xf32>
    %9 = vector.extract_strided_slice %2 {offsets = [5, 0], sizes = [1, 128], strides = [1, 1]} : vector<16x128xf32> to vector<1x128xf32>
    %10 = vector.extract_strided_slice %2 {offsets = [6, 0], sizes = [1, 128], strides = [1, 1]} : vector<16x128xf32> to vector<1x128xf32>
    %11 = vector.extract_strided_slice %2 {offsets = [7, 0], sizes = [1, 128], strides = [1, 1]} : vector<16x128xf32> to vector<1x128xf32>
    %12 = vector.extract_strided_slice %2 {offsets = [8, 0], sizes = [1, 128], strides = [1, 1]} : vector<16x128xf32> to vector<1x128xf32>
    %cst = arith.constant dense<0.000000e+00> : vector<16x128xf32>
    %13 = tpu.matmul %0, %1, %cst {dimension_numbers = #tpu.dot_dimension_numbers<[1], [0], [0], [1], [0, 0, 1, 1], [], []>} : vector<16x128xbf16>, vector<128x128xbf16>, vector<16x128xf32> -> vector<16x128xf32>
    %14 = vector.broadcast %4 : vector<1x128xf32> to vector<16x128xf32>
    %15 = arith.addf %13, %14 : vector<16x128xf32>
    %cst_7 = arith.constant dense<0.000000e+00> : vector<16xf32>
    %16 = vector.multi_reduction <add>, %15, %cst_7 [1] : vector<16x128xf32> to vector<16xf32>
    %17 = vector.shape_cast %16 : vector<16xf32> to vector<16x1xf32>
    %cst_8 = arith.constant 1.562500e-02 : f32
    %18 = vector.broadcast %cst_8 : f32 to vector<16x1xf32>
    %19 = arith.mulf %17, %18 : vector<16x1xf32>
    %20 = arith.mulf %15, %15 : vector<16x128xf32>
    %cst_9 = arith.constant dense<0.000000e+00> : vector<16xf32>
    %21 = vector.multi_reduction <add>, %20, %cst_9 [1] : vector<16x128xf32> to vector<16xf32>
    %22 = vector.shape_cast %21 : vector<16xf32> to vector<16x1xf32>
    %cst_10 = arith.constant 1.562500e-02 : f32
    %23 = vector.broadcast %cst_10 : f32 to vector<16x1xf32>
    %24 = arith.mulf %22, %23 : vector<16x1xf32>
    %25 = arith.mulf %19, %19 : vector<16x1xf32>
    %26 = arith.subf %24, %25 : vector<16x1xf32>
    %cst_11 = arith.constant 0.000000e+00 : f32
    %27 = vector.broadcast %cst_11 : f32 to vector<16x1xf32>
    %28 = arith.maximumf %26, %27 : vector<16x1xf32>
    %29 = vector.broadcast %19 : vector<16x1xf32> to vector<16x128xf32>
    %30 = arith.subf %15, %29 : vector<16x128xf32>
    %cst_12 = arith.constant 9.99999974E-6 : f32
    %31 = vector.broadcast %cst_12 : f32 to vector<16x1xf32>
    %32 = arith.addf %28, %31 : vector<16x1xf32>
    %33 = math.rsqrt %32 : vector<16x1xf32>
    %34 = vector.broadcast %33 : vector<16x1xf32> to vector<16x128xf32>
    %35 = arith.mulf %30, %34 : vector<16x128xf32>
    %36 = vector.broadcast %5 : vector<1x128xf32> to vector<16x128xf32>
    %37 = arith.mulf %35, %36 : vector<16x128xf32>
    %38 = vector.broadcast %6 : vector<1x128xf32> to vector<16x128xf32>
    %39 = arith.addf %37, %38 : vector<16x128xf32>
    %cst_13 = arith.constant 0.000000e+00 : f32
    %40 = vector.broadcast %cst_13 : f32 to vector<16x128xf32>
    %41 = arith.cmpf ogt, %39, %40 : vector<16x128xf32>
    %cst_14 = arith.constant 0.00999999977 : f32
    %42 = vector.broadcast %cst_14 : f32 to vector<16x128xf32>
    %43 = arith.mulf %42, %39 : vector<16x128xf32>
    %44 = arith.select %41, %39, %43 : vector<16x128xi1>, vector<16x128xf32>
    %c0_15 = arith.constant 0 : index
    %c0_16 = arith.constant 0 : index
    %45 = vector.load %arg3[%c0_15, %c0_16] : memref<128x128xbf16, #tpu.memory_space<vmem>>, vector<128x128xbf16>
    %46 = arith.truncf %44 : vector<16x128xf32> to vector<16x128xbf16>
    %cst_17 = arith.constant dense<0.000000e+00> : vector<16x128xf32>
    %47 = tpu.matmul %46, %45, %cst_17 {dimension_numbers = #tpu.dot_dimension_numbers<[1], [0], [0], [1], [0, 0, 1, 1], [], []>} : vector<16x128xbf16>, vector<128x128xbf16>, vector<16x128xf32> -> vector<16x128xf32>
    %48 = vector.broadcast %7 : vector<1x128xf32> to vector<16x128xf32>
    %49 = arith.addf %47, %48 : vector<16x128xf32>
    %cst_18 = arith.constant dense<0.000000e+00> : vector<16xf32>
    %50 = vector.multi_reduction <add>, %49, %cst_18 [1] : vector<16x128xf32> to vector<16xf32>
    %51 = vector.shape_cast %50 : vector<16xf32> to vector<16x1xf32>
    %cst_19 = arith.constant 1.562500e-02 : f32
    %52 = vector.broadcast %cst_19 : f32 to vector<16x1xf32>
    %53 = arith.mulf %51, %52 : vector<16x1xf32>
    %54 = arith.mulf %49, %49 : vector<16x128xf32>
    %cst_20 = arith.constant dense<0.000000e+00> : vector<16xf32>
    %55 = vector.multi_reduction <add>, %54, %cst_20 [1] : vector<16x128xf32> to vector<16xf32>
    %56 = vector.shape_cast %55 : vector<16xf32> to vector<16x1xf32>
    %cst_21 = arith.constant 1.562500e-02 : f32
    %57 = vector.broadcast %cst_21 : f32 to vector<16x1xf32>
    %58 = arith.mulf %56, %57 : vector<16x1xf32>
    %59 = arith.mulf %53, %53 : vector<16x1xf32>
    %60 = arith.subf %58, %59 : vector<16x1xf32>
    %cst_22 = arith.constant 0.000000e+00 : f32
    %61 = vector.broadcast %cst_22 : f32 to vector<16x1xf32>
    %62 = arith.maximumf %60, %61 : vector<16x1xf32>
    %63 = vector.broadcast %53 : vector<16x1xf32> to vector<16x128xf32>
    %64 = arith.subf %49, %63 : vector<16x128xf32>
    %cst_23 = arith.constant 9.99999974E-6 : f32
    %65 = vector.broadcast %cst_23 : f32 to vector<16x1xf32>
    %66 = arith.addf %62, %65 : vector<16x1xf32>
    %67 = math.rsqrt %66 : vector<16x1xf32>
    %68 = vector.broadcast %67 : vector<16x1xf32> to vector<16x128xf32>
    %69 = arith.mulf %64, %68 : vector<16x128xf32>
    %70 = vector.broadcast %8 : vector<1x128xf32> to vector<16x128xf32>
    %71 = arith.mulf %69, %70 : vector<16x128xf32>
    %72 = vector.broadcast %9 : vector<1x128xf32> to vector<16x128xf32>
    %73 = arith.addf %71, %72 : vector<16x128xf32>
    %cst_24 = arith.constant 0.000000e+00 : f32
    %74 = vector.broadcast %cst_24 : f32 to vector<16x128xf32>
    %75 = arith.cmpf ogt, %73, %74 : vector<16x128xf32>
    %cst_25 = arith.constant 0.00999999977 : f32
    %76 = vector.broadcast %cst_25 : f32 to vector<16x128xf32>
    %77 = arith.mulf %76, %73 : vector<16x128xf32>
    %78 = arith.select %75, %73, %77 : vector<16x128xi1>, vector<16x128xf32>
    %c0_26 = arith.constant 0 : index
    %c0_27 = arith.constant 0 : index
    %79 = vector.load %arg4[%c0_26, %c0_27] : memref<128x128xbf16, #tpu.memory_space<vmem>>, vector<128x128xbf16>
    %80 = arith.truncf %78 : vector<16x128xf32> to vector<16x128xbf16>
    %cst_28 = arith.constant dense<0.000000e+00> : vector<16x128xf32>
    %81 = tpu.matmul %80, %79, %cst_28 {dimension_numbers = #tpu.dot_dimension_numbers<[1], [0], [0], [1], [0, 0, 1, 1], [], []>} : vector<16x128xbf16>, vector<128x128xbf16>, vector<16x128xf32> -> vector<16x128xf32>
    %82 = vector.broadcast %10 : vector<1x128xf32> to vector<16x128xf32>
    %83 = arith.addf %81, %82 : vector<16x128xf32>
    %cst_29 = arith.constant dense<0.000000e+00> : vector<16xf32>
    %84 = vector.multi_reduction <add>, %83, %cst_29 [1] : vector<16x128xf32> to vector<16xf32>
    %85 = vector.shape_cast %84 : vector<16xf32> to vector<16x1xf32>
    %cst_30 = arith.constant 1.562500e-02 : f32
    %86 = vector.broadcast %cst_30 : f32 to vector<16x1xf32>
    %87 = arith.mulf %85, %86 : vector<16x1xf32>
    %88 = arith.mulf %83, %83 : vector<16x128xf32>
    %cst_31 = arith.constant dense<0.000000e+00> : vector<16xf32>
    %89 = vector.multi_reduction <add>, %88, %cst_31 [1] : vector<16x128xf32> to vector<16xf32>
    %90 = vector.shape_cast %89 : vector<16xf32> to vector<16x1xf32>
    %cst_32 = arith.constant 1.562500e-02 : f32
    %91 = vector.broadcast %cst_32 : f32 to vector<16x1xf32>
    %92 = arith.mulf %90, %91 : vector<16x1xf32>
    %93 = arith.mulf %87, %87 : vector<16x1xf32>
    %94 = arith.subf %92, %93 : vector<16x1xf32>
    %cst_33 = arith.constant 0.000000e+00 : f32
    %95 = vector.broadcast %cst_33 : f32 to vector<16x1xf32>
    %96 = arith.maximumf %94, %95 : vector<16x1xf32>
    %97 = vector.broadcast %87 : vector<16x1xf32> to vector<16x128xf32>
    %98 = arith.subf %83, %97 : vector<16x128xf32>
    %cst_34 = arith.constant 9.99999974E-6 : f32
    %99 = vector.broadcast %cst_34 : f32 to vector<16x1xf32>
    %100 = arith.addf %96, %99 : vector<16x1xf32>
    %101 = math.rsqrt %100 : vector<16x1xf32>
    %102 = vector.broadcast %101 : vector<16x1xf32> to vector<16x128xf32>
    %103 = arith.mulf %98, %102 : vector<16x128xf32>
    %104 = vector.broadcast %11 : vector<1x128xf32> to vector<16x128xf32>
    %105 = arith.mulf %103, %104 : vector<16x128xf32>
    %106 = vector.broadcast %12 : vector<1x128xf32> to vector<16x128xf32>
    %107 = arith.addf %105, %106 : vector<16x128xf32>
    %cst_35 = arith.constant 0.000000e+00 : f32
    %108 = vector.broadcast %cst_35 : f32 to vector<16x128xf32>
    %109 = arith.cmpf ogt, %107, %108 : vector<16x128xf32>
    %cst_36 = arith.constant 0.00999999977 : f32
    %110 = vector.broadcast %cst_36 : f32 to vector<16x128xf32>
    %111 = arith.mulf %110, %107 : vector<16x128xf32>
    %112 = arith.select %109, %107, %111 : vector<16x128xi1>, vector<16x128xf32>
    %c0_37 = arith.constant 0 : index
    %c0_38 = arith.constant 0 : index
    %113 = vector.load %arg5[%c0_37, %c0_38] : memref<128x128xbf16, #tpu.memory_space<vmem>>, vector<128x128xbf16>
    %114 = arith.truncf %112 : vector<16x128xf32> to vector<16x128xbf16>
    %cst_39 = arith.constant dense<0.000000e+00> : vector<16x128xf32>
    %115 = tpu.matmul %114, %113, %cst_39 {dimension_numbers = #tpu.dot_dimension_numbers<[1], [0], [0], [1], [0, 0, 1, 1], [], []>} : vector<16x128xbf16>, vector<128x128xbf16>, vector<16x128xf32> -> vector<16x128xf32>
    %116 = vector.broadcast %3 : vector<1x128xf32> to vector<16x128xf32>
    %117 = arith.addf %115, %116 : vector<16x128xf32>
    %c0_40 = arith.constant 0 : index
    %c0_41 = arith.constant 0 : index
    %118 = vector.load %arg8[%c0_40, %c0_41] : memref<16x128xf32, #tpu.memory_space<vmem>>, vector<16x128xf32>
    tpu.vector_store %arg8[%c0_40, %c0_41], %117 {strides = array<i32>} : memref<16x128xf32, #tpu.memory_space<vmem>>, vector<16x128xf32>,
    return
  }
  func.func @transform_0(%arg0: i32) -> (i32, i32) {
    %c0_i32 = arith.constant 0 : i32
    %c0_i32_0 = arith.constant 0 : i32
    return %arg0, %c0_i32 : i32, i32
  }
  func.func @transform_1(%arg0: i32) -> (i32, i32) {
    %c0_i32 = arith.constant 0 : i32
    %c0_i32_0 = arith.constant 0 : i32
    %c0_i32_1 = arith.constant 0 : i32
    return %c0_i32, %c0_i32_0 : i32, i32
  }
  func.func @transform_2(%arg0: i32) -> (i32, i32) {
    %c0_i32 = arith.constant 0 : i32
    %c0_i32_0 = arith.constant 0 : i32
    %c0_i32_1 = arith.constant 0 : i32
    return %c0_i32, %c0_i32_0 : i32, i32
  }
  func.func @transform_3(%arg0: i32) -> (i32, i32) {
    %c0_i32 = arith.constant 0 : i32
    %c0_i32_0 = arith.constant 0 : i32
    %c0_i32_1 = arith.constant 0 : i32
    return %c0_i32, %c0_i32_0 : i32, i32
  }
  func.func @transform_4(%arg0: i32) -> (i32, i32) {
    %c0_i32 = arith.constant 0 : i32
    %c0_i32_0 = arith.constant 0 : i32
    %c0_i32_1 = arith.constant 0 : i32
    return %c0_i32, %c0_i32_0 : i32, i32
  }
  func.func @transform_5(%arg0: i32) -> (i32, i32) {
    %c0_i32 = arith.constant 0 : i32
    %c0_i32_0 = arith.constant 0 : i32
    %c0_i32_1 = arith.constant 0 : i32
    return %c0_i32, %c0_i32_0 : i32, i32
  }
  func.func @transform_6(%arg0: i32) -> (i32, i32) {
    %c0_i32 = arith.constant 0 : i32
    %c0_i32_0 = arith.constant 0 : i32
    %c0_i32_1 = arith.constant 0 : i32
    return %c0_i32, %c0_i32_0 : i32, i32
  }
  func.func @transform_7(%arg0: i32) -> (i32, i32) {
    %c0_i32 = arith.constant 0 : i32
    %c0_i32_0 = arith.constant 0 : i32
    return %arg0, %c0_i32 : i32, i32
  }
}

module attributes {stable_mosaic.version = 11 : i64} {
  func.func @mlp_kernel_pipelined(%arg0: i32, %arg1: memref<16x128xbf16, #tpu.memory_space<vmem>>, %arg2: memref<128x128xbf16, #tpu.memory_space<vmem>>, %arg3: memref<128x128xbf16, #tpu.memory_space<vmem>>, %arg4: memref<128x128xbf16, #tpu.memory_space<vmem>>, %arg5: memref<128x128xbf16, #tpu.memory_space<vmem>>, %arg6: memref<16x128xf32, #tpu.memory_space<vmem>>, %arg7: memref<1x128xf32, #tpu.memory_space<vmem>>, %arg8: memref<16x128xf32, #tpu.memory_space<vmem>>) attributes {dimension_semantics = [#tpu.dimension_semantics<parallel>], iteration_bounds = array<i64: 1>, scalar_prefetch = 0 : i64, scratch_operands = 0 : i64, tpu.core_type = #tpu.core_type<tc>, window_params = [{transform_indices = @transform_0, window_bounds = array<i64: 16, 128>}, {pipeline_mode = #tpu.pipeline_mode<synchronous>, transform_indices = @transform_1, window_bounds = array<i64: 128, 128>}, {pipeline_mode = #tpu.pipeline_mode<synchronous>, transform_indices = @transform_2, window_bounds = array<i64: 128, 128>}, {pipeline_mode = #tpu.pipeline_mode<synchronous>, transform_indices = @transform_3, window_bounds = array<i64: 128, 128>}, {pipeline_mode = #tpu.pipeline_mode<synchronous>, transform_indices = @transform_4, window_bounds = array<i64: 128, 128>}, {pipeline_mode = #tpu.pipeline_mode<synchronous>, transform_indices = @transform_5, window_bounds = array<i64: 16, 128>}, {pipeline_mode = #tpu.pipeline_mode<synchronous>, transform_indices = @transform_6, window_bounds = array<i64: 1, 128>}, {transform_indices = @transform_7, window_bounds = array<i64: 16, 128>}]} {
    %c0 = arith.constant 0 : index
    %c0_0 = arith.constant 0 : index
    %0 = vector.load %arg1[%c0, %c0_0] : memref<16x128xbf16, #tpu.memory_space<vmem>>, vector<16x128xbf16>
    %c0_1 = arith.constant 0 : index
    %c0_2 = arith.constant 0 : index
    %1 = vector.load %arg2[%c0_1, %c0_2] : memref<128x128xbf16, #tpu.memory_space<vmem>>, vector<128x128xbf16>
    %c0_3 = arith.constant 0 : index
    %c0_4 = arith.constant 0 : index
    %2 = vector.load %arg6[%c0_3, %c0_4] : memref<16x128xf32, #tpu.memory_space<vmem>>, vector<16x128xf32>
    %c0_5 = arith.constant 0 : index
    %c0_6 = arith.constant 0 : index
    %3 = vector.load %arg7[%c0_5, %c0_6] : memref<1x128xf32, #tpu.memory_space<vmem>>, vector<1x128xf32>
    %4 = vector.extract_strided_slice %2 {offsets = [0, 0], sizes = [1, 128], strides = [1, 1]} : vector<16x128xf32> to vector<1x128xf32>
    %5 = vector.extract_strided_slice %2 {offsets = [1, 0], sizes = [1, 128], strides = [1, 1]} : vector<16x128xf32> to vector<1x128xf32>
    %6 = vector.extract_strided_slice %2 {offsets = [2, 0], sizes = [1, 128], strides = [1, 1]} : vector<16x128xf32> to vector<1x128xf32>
    %7 = vector.extract_strided_slice %2 {offsets = [3, 0], sizes = [1, 128], strides = [1, 1]} : vector<16x128xf32> to vector<1x128xf32>
    %8 = vector.extract_strided_slice %2 {offsets = [4, 0], sizes = [1, 128], strides = [1, 1]} : vector<16x128xf32> to vector<1x128xf32>
    %9 = vector.extract_strided_slice %2 {offsets = [5, 0], sizes = [1, 128], strides = [1, 1]} : vector<16x128xf32> to vector<1x128xf32>
    %10 = vector.extract_strided_slice %2 {offsets = [6, 0], sizes = [1, 128], strides = [1, 1]} : vector<16x128xf32> to vector<1x128xf32>
    %11 = vector.extract_strided_slice %2 {offsets = [7, 0], sizes = [1, 128], strides = [1, 1]} : vector<16x128xf32> to vector<1x128xf32>
    %12 = vector.extract_strided_slice %2 {offsets = [8, 0], sizes = [1, 128], strides = [1, 1]} : vector<16x128xf32> to vector<1x128xf32>
    %cst = arith.constant dense<0.000000e+00> : vector<16x128xf32>
    %13 = tpu.matmul %0, %1, %cst {dimension_numbers = #tpu.dot_dimension_numbers<[1], [0], [0], [1], [0, 0, 1, 1], [], []>} : vector<16x128xbf16>, vector<128x128xbf16>, vector<16x128xf32> -> vector<16x128xf32>
    %14 = vector.broadcast %4 : vector<1x128xf32> to vector<16x128xf32>
    %15 = arith.addf %13, %14 : vector<16x128xf32>
    %cst_7 = arith.constant dense<0.000000e+00> : vector<16xf32>
    %16 = vector.multi_reduction <add>, %15, %cst_7 [1] : vector<16x128xf32> to vector<16xf32>
    %17 = vector.shape_cast %16 : vector<16xf32> to vector<16x1xf32>
    %cst_8 = arith.constant 1.562500e-02 : f32
    %18 = vector.broadcast %cst_8 : f32 to vector<16x1xf32>
    %19 = arith.mulf %17, %18 : vector<16x1xf32>
    %20 = arith.mulf %15, %15 : vector<16x128xf32>
    %cst_9 = arith.constant dense<0.000000e+00> : vector<16xf32>
    %21 = vector.multi_reduction <add>, %20, %cst_9 [1] : vector<16x128xf32> to vector<16xf32>
    %22 = vector.shape_cast %21 : vector<16xf32> to vector<16x1xf32>
    %cst_10 = arith.constant 1.562500e-02 : f32
    %23 = vector.broadcast %cst_10 : f32 to vector<16x1xf32>
    %24 = arith.mulf %22, %23 : vector<16x1xf32>
    %25 = arith.mulf %19, %19 : vector<16x1xf32>
    %26 = arith.subf %24, %25 : vector<16x1xf32>
    %cst_11 = arith.constant 0.000000e+00 : f32
    %27 = vector.broadcast %cst_11 : f32 to vector<16x1xf32>
    %28 = arith.maximumf %26, %27 : vector<16x1xf32>
    %29 = vector.broadcast %19 : vector<16x1xf32> to vector<16x128xf32>
    %30 = arith.subf %15, %29 : vector<16x128xf32>
    %cst_12 = arith.constant 9.99999974E-6 : f32
    %31 = vector.broadcast %cst_12 : f32 to vector<16x1xf32>
    %32 = arith.addf %28, %31 : vector<16x1xf32>
    %33 = math.rsqrt %32 : vector<16x1xf32>
    %34 = vector.broadcast %33 : vector<16x1xf32> to vector<16x128xf32>
    %35 = arith.mulf %30, %34 : vector<16x128xf32>
    %36 = vector.broadcast %5 : vector<1x128xf32> to vector<16x128xf32>
    %37 = arith.mulf %35, %36 : vector<16x128xf32>
    %38 = vector.broadcast %6 : vector<1x128xf32> to vector<16x128xf32>
    %39 = arith.addf %37, %38 : vector<16x128xf32>
    %cst_13 = arith.constant 0.000000e+00 : f32
    %40 = vector.broadcast %cst_13 : f32 to vector<16x128xf32>
    %41 = arith.cmpf ogt, %39, %40 : vector<16x128xf32>
    %cst_14 = arith.constant 0.00999999977 : f32
    %42 = vector.broadcast %cst_14 : f32 to vector<16x128xf32>
    %43 = arith.mulf %42, %39 : vector<16x128xf32>
    %44 = arith.select %41, %39, %43 : vector<16x128xi1>, vector<16x128xf32>
    %c0_15 = arith.constant 0 : index
    %c0_16 = arith.constant 0 : index
    %45 = vector.load %arg3[%c0_15, %c0_16] : memref<128x128xbf16, #tpu.memory_space<vmem>>, vector<128x128xbf16>
    %46 = arith.truncf %44 : vector<16x128xf32> to vector<16x128xbf16>
    %cst_17 = arith.constant dense<0.000000e+00> : vector<16x128xf32>
    %47 = tpu.matmul %46, %45, %cst_17 {dimension_numbers = #tpu.dot_dimension_numbers<[1], [0], [0], [1], [0, 0, 1, 1], [], []>} : vector<16x128xbf16>, vector<128x128xbf16>, vector<16x128xf32> -> vector<16x128xf32>
    %48 = vector.broadcast %7 : vector<1x128xf32> to vector<16x128xf32>
    %49 = arith.addf %47, %48 : vector<16x128xf32>
    %cst_18 = arith.constant dense<0.000000e+00> : vector<16xf32>
    %50 = vector.multi_reduction <add>, %49, %cst_18 [1] : vector<16x128xf32> to vector<16xf32>
    %51 = vector.shape_cast %50 : vector<16xf32> to vector<16x1xf32>
    %cst_19 = arith.constant 1.562500e-02 : f32
    %52 = vector.broadcast %cst_19 : f32 to vector<16x1xf32>
    %53 = arith.mulf %51, %52 : vector<16x1xf32>
    %54 = arith.mulf %49, %49 : vector<16x128xf32>
    %cst_20 = arith.constant dense<0.000000e+00> : vector<16xf32>
    %55 = vector.multi_reduction <add>, %54, %cst_20 [1] : vector<16x128xf32> to vector<16xf32>
    %56 = vector.shape_cast %55 : vector<16xf32> to vector<16x1xf32>
    %cst_21 = arith.constant 1.562500e-02 : f32
    %57 = vector.broadcast %cst_21 : f32 to vector<16x1xf32>
    %58 = arith.mulf %56, %57 : vector<16x1xf32>
    %59 = arith.mulf %53, %53 : vector<16x1xf32>
    %60 = arith.subf %58, %59 : vector<16x1xf32>
    %cst_22 = arith.constant 0.000000e+00 : f32
    %61 = vector.broadcast %cst_22 : f32 to vector<16x1xf32>
    %62 = arith.maximumf %60, %61 : vector<16x1xf32>
    %63 = vector.broadcast %53 : vector<16x1xf32> to vector<16x128xf32>
    %64 = arith.subf %49, %63 : vector<16x128xf32>
    %cst_23 = arith.constant 9.99999974E-6 : f32
    %65 = vector.broadcast %cst_23 : f32 to vector<16x1xf32>
    %66 = arith.addf %62, %65 : vector<16x1xf32>
    %67 = math.rsqrt %66 : vector<16x1xf32>
    %68 = vector.broadcast %67 : vector<16x1xf32> to vector<16x128xf32>
    %69 = arith.mulf %64, %68 : vector<16x128xf32>
    %70 = vector.broadcast %8 : vector<1x128xf32> to vector<16x128xf32>
    %71 = arith.mulf %69, %70 : vector<16x128xf32>
    %72 = vector.broadcast %9 : vector<1x128xf32> to vector<16x128xf32>
    %73 = arith.addf %71, %72 : vector<16x128xf32>
    %cst_24 = arith.constant 0.000000e+00 : f32
    %74 = vector.broadcast %cst_24 : f32 to vector<16x128xf32>
    %75 = arith.cmpf ogt, %73, %74 : vector<16x128xf32>
    %cst_25 = arith.constant 0.00999999977 : f32
    %76 = vector.broadcast %cst_25 : f32 to vector<16x128xf32>
    %77 = arith.mulf %76, %73 : vector<16x128xf32>
    %78 = arith.select %75, %73, %77 : vector<16x128xi1>, vector<16x128xf32>
    %c0_26 = arith.constant 0 : index
    %c0_27 = arith.constant 0 : index
    %79 = vector.load %arg4[%c0_26, %c0_27] : memref<128x128xbf16, #tpu.memory_space<vmem>>, vector<128x128xbf16>
    %80 = arith.truncf %78 : vector<16x128xf32> to vector<16x128xbf16>
    %cst_28 = arith.constant dense<0.000000e+00> : vector<16x128xf32>
    %81 = tpu.matmul %80, %79, %cst_28 {dimension_numbers = #tpu.dot_dimension_numbers<[1], [0], [0], [1], [0, 0, 1, 1], [], []>} : vector<16x128xbf16>, vector<128x128xbf16>, vector<16x128xf32> -> vector<16x128xf32>
    %82 = vector.broadcast %10 : vector<1x128xf32> to vector<16x128xf32>
    %83 = arith.addf %81, %82 : vector<16x128xf32>
    %cst_29 = arith.constant dense<0.000000e+00> : vector<16xf32>
    %84 = vector.multi_reduction <add>, %83, %cst_29 [1] : vector<16x128xf32> to vector<16xf32>
    %85 = vector.shape_cast %84 : vector<16xf32> to vector<16x1xf32>
    %cst_30 = arith.constant 1.562500e-02 : f32
    %86 = vector.broadcast %cst_30 : f32 to vector<16x1xf32>
    %87 = arith.mulf %85, %86 : vector<16x1xf32>
    %88 = arith.mulf %83, %83 : vector<16x128xf32>
    %cst_31 = arith.constant dense<0.000000e+00> : vector<16xf32>
    %89 = vector.multi_reduction <add>, %88, %cst_31 [1] : vector<16x128xf32> to vector<16xf32>
    %90 = vector.shape_cast %89 : vector<16xf32> to vector<16x1xf32>
    %cst_32 = arith.constant 1.562500e-02 : f32
    %91 = vector.broadcast %cst_32 : f32 to vector<16x1xf32>
    %92 = arith.mulf %90, %91 : vector<16x1xf32>
    %93 = arith.mulf %87, %87 : vector<16x1xf32>
    %94 = arith.subf %92, %93 : vector<16x1xf32>
    %cst_33 = arith.constant 0.000000e+00 : f32
    %95 = vector.broadcast %cst_33 : f32 to vector<16x1xf32>
    %96 = arith.maximumf %94, %95 : vector<16x1xf32>
    %97 = vector.broadcast %87 : vector<16x1xf32> to vector<16x128xf32>
    %98 = arith.subf %83, %97 : vector<16x128xf32>
    %cst_34 = arith.constant 9.99999974E-6 : f32
    %99 = vector.broadcast %cst_34 : f32 to vector<16x1xf32>
    %100 = arith.addf %96, %99 : vector<16x1xf32>
    %101 = math.rsqrt %100 : vector<16x1xf32>
    %102 = vector.broadcast %101 : vector<16x1xf32> to vector<16x128xf32>
    %103 = arith.mulf %98, %102 : vector<16x128xf32>
    %104 = vector.broadcast %11 : vector<1x128xf32> to vector<16x128xf32>
    %105 = arith.mulf %103, %104 : vector<16x128xf32>
    %106 = vector.broadcast %12 : vector<1x128xf32> to vector<16x128xf32>
    %107 = arith.addf %105, %106 : vector<16x128xf32>
    %cst_35 = arith.constant 0.000000e+00 : f32
    %108 = vector.broadcast %cst_35 : f32 to vector<16x128xf32>
    %109 = arith.cmpf ogt, %107, %108 : vector<16x128xf32>
    %cst_36 = arith.constant 0.00999999977 : f32
    %110 = vector.broadcast %cst_36 : f32 to vector<16x128xf32>
    %111 = arith.mulf %110, %107 : vector<16x128xf32>
    %112 = arith.select %109, %107, %111 : vector<16x128xi1>, vector<16x128xf32>
    %c0_37 = arith.constant 0 : index
    %c0_38 = arith.constant 0 : index
    %113 = vector.load %arg5[%c0_37, %c0_38] : memref<128x128xbf16, #tpu.memory_space<vmem>>, vector<128x128xbf16>
    %114 = arith.truncf %112 : vector<16x128xf32> to vector<16x128xbf16>
    %cst_39 = arith.constant dense<0.000000e+00> : vector<16x128xf32>
    %115 = tpu.matmul %114, %113, %cst_39 {dimension_numbers = #tpu.dot_dimension_numbers<[1], [0], [0], [1], [0, 0, 1, 1], [], []>} : vector<16x128xbf16>, vector<128x128xbf16>, vector<16x128xf32> -> vector<16x128xf32>
    %116 = vector.broadcast %3 : vector<1x128xf32> to vector<16x128xf32>
    %117 = arith.addf %115, %116 : vector<16x128xf32>
    %c0_40 = arith.constant 0 : index
    %c0_41 = arith.constant 0 : index
    %118 = vector.load %arg8[%c0_40, %c0_41] : memref<16x128xf32, #tpu.memory_space<vmem>>, vector<16x128xf32>
    tpu.vector_store %arg8[%c0_40, %c0_41], %117 {strides = array<i32>} : memref<16x128xf32, #tpu.memory_space<vmem>>, vector<16x128xf32>,
    return
  }
  func.func @transform_0(%arg0: i32) -> (i32, i32) {
    %c0_i32 = arith.constant 0 : i32
    %c0_i32_0 = arith.constant 0 : i32
    return %arg0, %c0_i32 : i32, i32
  }
  func.func @transform_1(%arg0: i32) -> (i32, i32) {
    %c0_i32 = arith.constant 0 : i32
    %c0_i32_0 = arith.constant 0 : i32
    %c0_i32_1 = arith.constant 0 : i32
    return %c0_i32, %c0_i32_0 : i32, i32
  }
  func.func @transform_2(%arg0: i32) -> (i32, i32) {
    %c0_i32 = arith.constant 0 : i32
    %c0_i32_0 = arith.constant 0 : i32
    %c0_i32_1 = arith.constant 0 : i32
    return %c0_i32, %c0_i32_0 : i32, i32
  }
  func.func @transform_3(%arg0: i32) -> (i32, i32) {
    %c0_i32 = arith.constant 0 : i32
    %c0_i32_0 = arith.constant 0 : i32
    %c0_i32_1 = arith.constant 0 : i32
    return %c0_i32, %c0_i32_0 : i32, i32
  }
  func.func @transform_4(%arg0: i32) -> (i32, i32) {
    %c0_i32 = arith.constant 0 : i32
    %c0_i32_0 = arith.constant 0 : i32
    %c0_i32_1 = arith.constant 0 : i32
    return %c0_i32, %c0_i32_0 : i32, i32
  }
  func.func @transform_5(%arg0: i32) -> (i32, i32) {
    %c0_i32 = arith.constant 0 : i32
    %c0_i32_0 = arith.constant 0 : i32
    %c0_i32_1 = arith.constant 0 : i32
    return %c0_i32, %c0_i32_0 : i32, i32
  }
  func.func @transform_6(%arg0: i32) -> (i32, i32) {
    %c0_i32 = arith.constant 0 : i32
    %c0_i32_0 = arith.constant 0 : i32
    %c0_i32_1 = arith.constant 0 : i32
    return %c0_i32, %c0_i32_0 : i32, i32
  }
  func.func @transform_7(%arg0: i32) -> (i32, i32) {
    %c0_i32 = arith.constant 0 : i32
    %c0_i32_0 = arith.constant 0 : i32
    return %arg0, %c0_i32 : i32, i32
  }
}

</mosaic_0001>

<llo_original>
// kernel: tpu_custom_call.1
$region0: #{tpu_custom_call.1}
  #allocation0 [shape = 'u32[]', space=smem, size = 0x4, offset = 0x4, fixed_abs, tag = 'smem constant byte address 0x4 - core index']
  #allocation1 [shape = 'u32[72,128]{1,0:T(1,128)}', space=vmem, size = 0x9000, scoped, tag = 'internal scratch']
  #allocation2 [shape = 'bf16[128,128]{1,0:T(8,128)(2,1)}', space=vmem, size = 0x8000, scoped, tag = 'scratch operand']
  #allocation3 [shape = 'bf16[128,128]{1,0:T(8,128)(2,1)}', space=vmem, size = 0x8000, scoped, tag = 'scratch operand']
  #allocation4 [shape = 'bf16[128,128]{1,0:T(8,128)(2,1)}', space=vmem, size = 0x8000, scoped, tag = 'scratch operand']
  #allocation5 [shape = 's32[3]{0}', space=sflag, size = 0xc, scoped, tag = 'scratch operand']
  #allocation13 [shape = 's32[]', space=sflag, size = 0x4, offset = 0, fixed_abs, tag = 'sflag constant byte address 0x0 - dummy sync flag']
  #allocation14 [shape = 's32[]', space=sflag, size = 0x4, offset = 0, fixed_abs, tag = 'sflag constant byte address 0x0 - dummy sync flag']
  #allocation15 [shape = 'u32[]', space=smem, size = 0x4, offset = 0x44, fixed_abs, tag = 'smem constant byte address 0x44 - assertion arg 0']
  #allocation16 [shape = 'u32[]', space=smem, size = 0x4, offset = 0x48, fixed_abs, tag = 'smem constant byte address 0x48 - assertion arg 1']
  #allocation17 [shape = 's32[]', space=sflag, size = 0x4, offset = 0, fixed_abs, tag = 'sflag constant byte address 0x0 - dummy sync flag']
  #allocation18 [shape = 's32[]', space=sflag, size = 0x4, offset = 0, fixed_abs, tag = 'sflag constant byte address 0x0 - dummy sync flag']
  #allocation19 [shape = 's32[]', space=sflag, size = 0x4, offset = 0, fixed_abs, tag = 'sflag constant byte address 0x0 - dummy sync flag']
  #allocation20 [shape = 's32[]', space=sflag, size = 0x4, offset = 0, fixed_abs, tag = 'sflag constant byte address 0x0 - dummy sync flag']
  %s0 = inlined_call_operand.hbm [shape: bf16[16,128], index: 0, kind: input, shape index: {}]
  %s1 = inlined_call_operand.hbm [shape: bf16[128,128], index: 1, kind: input, shape index: {}]
  %s2 = inlined_call_operand.hbm [shape: f32[16,128], index: 2, kind: input, shape index: {}]
  %s3 = inlined_call_operand.vmem [shape: f32[1,128], index: 3, kind: input, shape index: {}]
  %s4 = inlined_call_operand.hbm [shape: bf16[128,128], index: 4, kind: input, shape index: {}]
  %s5 = inlined_call_operand.hbm [shape: bf16[128,128], index: 5, kind: input, shape index: {}]
  %s6 = inlined_call_operand.hbm [shape: bf16[128,128], index: 6, kind: input, shape index: {}]
  %s7 = inlined_call_operand.hbm [shape: f32[16,128], index: 7, kind: output, shape index: {}]
  %s8 = sld [smem:[#allocation0]]
  $region50: #{tpu_custom_call.1} parent=0
    _
  %s10 = ssub.s32 1, %s8
  %s11 = scalar_select 0, %s10, %s8
  $region1: #{tpu_custom_call.1} parent=0
    #allocation6 [shape = 'u8[4096]{0}', space=vmem, size = 0x1000, scoped, tag = 'input window, operand 0, single buffered']
    #allocation7 [shape = 's32[1]{0}', space=sflag, size = 0x4, scoped, tag = 'scoped memory for tpu_custom_call.1']
    #allocation8 [shape = 's32[1]{0}', space=sflag, size = 0x4, scoped, tag = 'scoped memory for tpu_custom_call.1']
    #allocation9 [shape = 'u8[32768]{0}', space=vmem, size = 0x8000, scoped, tag = 'input window, operand 1, single buffered']
    #allocation10 [shape = 's32[1]{0}', space=sflag, size = 0x4, scoped, tag = 'scoped memory for tpu_custom_call.1']
    #allocation11 [shape = 'u8[8192]{0}', space=vmem, size = 0x2000, scoped, tag = 'input window, operand 2, single buffered']
    #allocation12 [shape = 'u8[8192]{0}', space=vmem, size = 0x2000, scoped, tag = 'output window, operand 0, single buffered']
    %12 = vsyncpa [#allocation7], 0
    %13 = vsyncpa [#allocation10], 0
    %14 = vsyncpa [#allocation8], 0
    // Predicated region
    $region2: #{tpu_custom_call.1} parent=1 // pred_check
      _
    $region3: #{tpu_custom_call.1} parent=1 // pred_check_branch
      %16 = sbr.rel (0) target = $region5
    $region4: #{tpu_custom_call.1} parent=1 // pred_region
      %18 = vsyncadd [#allocation7], 0
      %s19 = sshll.u32 %s0, 4
      %s20 = int_to_ptr.hbm [resolvable:$true] %s19
      %s21 = sshll.u32 [#allocation6], 4
      %s22 = int_to_ptr.vmem [resolvable:$true] %s21
      %27 = dma.hbm_to_vmem [thread:$0]  %s20, 128, %s22, [#allocation7], 64, 64, 4
    $region5: #{tpu_custom_call.1} parent=1 // pred_fallthru
      _
    // Predicated region
    $region6: #{tpu_custom_call.1} parent=1 // pred_check
      _
    $region7: #{tpu_custom_call.1} parent=1 // pred_check_branch
      %29 = sbr.rel (0) target = $region9
    $region8: #{tpu_custom_call.1} parent=1 // pred_region
      %31 = vsyncadd [#allocation10], 0
      %s32 = sshll.u32 %s1, 4
      %s33 = int_to_ptr.hbm [resolvable:$true] %s32
      %s34 = sshll.u32 [#allocation9], 4
      %s35 = int_to_ptr.vmem [resolvable:$true] %s34
      %40 = dma.hbm_to_vmem [thread:$0]  %s33, 1024, %s35, [#allocation10], 64, 64, 4
    $region9: #{tpu_custom_call.1} parent=1 // pred_fallthru
      _
    // Predicated region
    $region10: #{tpu_custom_call.1} parent=1 // pred_check
      _
    $region11: #{tpu_custom_call.1} parent=1 // pred_check_branch
      %42 = sbr.rel (0) target = $region13
    $region12: #{tpu_custom_call.1} parent=1 // pred_region
      %44 = vsyncadd [#allocation10], 0
      %s45 = sshll.u32 %s2, 4
      %s46 = int_to_ptr.hbm [resolvable:$true] %s45
      %s47 = sshll.u32 [#allocation11], 4
      %s48 = int_to_ptr.vmem [resolvable:$true] %s47
      %53 = dma.hbm_to_vmem [thread:$0]  %s46, 256, %s48, [#allocation10], 128, 128, 8
    $region13: #{tpu_custom_call.1} parent=1 // pred_fallthru
      _
    // Predicated region
    $region14: #{tpu_custom_call.1} parent=1 // pred_check
      _
    $region15: #{tpu_custom_call.1} parent=1 // pred_check_branch
      %55 = sbr.rel (0) target = $region17
    $region16: #{tpu_custom_call.1} parent=1 // pred_region
      _
    $region17: #{tpu_custom_call.1} parent=1 // pred_fallthru
      _
    // Predicated region
    $region18: #{tpu_custom_call.1} parent=1 // pred_check
      _
    $region19: #{tpu_custom_call.1} parent=1 // pred_check_branch
      %57 = sbr.rel (0) target = $region21
    $region20: #{tpu_custom_call.1} parent=1 // pred_region
      %59 = dma.done [#allocation7], 128
    $region21: #{tpu_custom_call.1} parent=1 // pred_fallthru
      _
    // Predicated region
    $region22: #{tpu_custom_call.1} parent=1 // pred_check
      _
    $region23: #{tpu_custom_call.1} parent=1 // pred_check_branch
      %61 = sbr.rel (0) target = $region25
    $region24: #{tpu_custom_call.1} parent=1 // pred_region
      %63 = dma.done [#allocation10], 1024
    $region25: #{tpu_custom_call.1} parent=1 // pred_fallthru
      _
    // Predicated region
    $region26: #{tpu_custom_call.1} parent=1 // pred_check
      _
    $region27: #{tpu_custom_call.1} parent=1 // pred_check_branch
      %65 = sbr.rel (0) target = $region29
    $region28: #{tpu_custom_call.1} parent=1 // pred_region
      %67 = dma.done [#allocation10], 256
    $region29: #{tpu_custom_call.1} parent=1 // pred_fallthru
      _
    // Predicated region
    $region30: #{tpu_custom_call.1} parent=1 // pred_check
      _
    $region31: #{tpu_custom_call.1} parent=1 // pred_check_branch
      %69 = sbr.rel target = $region33
    $region32: #{tpu_custom_call.1} parent=1 // pred_region
      %70 = sst [smem:[#allocation15]] [#allocation14]
      %71 = sst [smem:[#allocation16]] [#allocation13]
    $region33: #{tpu_custom_call.1} parent=1 // pred_fallthru
      _
    %73 = shalt.err (0)
    %s75 = sshll.u32 %s4, 4
    %s76 = int_to_ptr.hbm [resolvable:$true] %s75
    %s77 = sshll.u32 [#allocation2], 4
    %s78 = int_to_ptr.vmem [resolvable:$true] %s77
    %80 = dma.hbm_to_vmem [thread:$0]  %s76, 1024, %s78, [#allocation5]
    %s81 = scalar_lea.sflag [#allocation5], 1
    // Predicated region
    $region34: #{tpu_custom_call.1} parent=1 // pred_check
      _
    $region35: #{tpu_custom_call.1} parent=1 // pred_check_branch
      %83 = sbr.rel target = $region37
    $region36: #{tpu_custom_call.1} parent=1 // pred_region
      %84 = sst [smem:[#allocation15]] [#allocation18]
      %85 = sst [smem:[#allocation16]] [#allocation17]
    $region37: #{tpu_custom_call.1} parent=1 // pred_fallthru
      _
    %87 = shalt.err (0)
    %s89 = sshll.u32 %s5, 4
    %s90 = int_to_ptr.hbm [resolvable:$true] %s89
    %s91 = sshll.u32 [#allocation3], 4
    %s92 = int_to_ptr.vmem [resolvable:$true] %s91
    %94 = dma.hbm_to_vmem [thread:$0]  %s90, 1024, %s92, %s81
    %s95 = scalar_lea.sflag [#allocation5], 2
    // Predicated region
    $region38: #{tpu_custom_call.1} parent=1 // pred_check
      _
    $region39: #{tpu_custom_call.1} parent=1 // pred_check_branch
      %97 = sbr.rel target = $region41
    $region40: #{tpu_custom_call.1} parent=1 // pred_region
      %98 = sst [smem:[#allocation15]] [#allocation20]
      %99 = sst [smem:[#allocation16]] [#allocation19]
    $region41: #{tpu_custom_call.1} parent=1 // pred_fallthru
      _
    %101 = shalt.err (0)
    %s103 = sshll.u32 %s6, 4
    %s104 = int_to_ptr.hbm [resolvable:$true] %s103
    %s105 = sshll.u32 [#allocation4], 4
    %s106 = int_to_ptr.vmem [resolvable:$true] %s105
    %108 = dma.hbm_to_vmem [thread:$0]  %s104, 1024, %s106, %s95
    %v109 = vld [vmem:[#allocation6] sm:$0xf]
    %v110 = vld [vmem:[#allocation6 + $0x4] sm:$0xf]
    %v111 = vld [vmem:[#allocation9] sm:$0xf]
    %v112 = vld [vmem:[#allocation9 + $0x4] sm:$0xf]
    %v113 = vld [vmem:[#allocation9 + $0x8] sm:$0xf]
    %v114 = vld [vmem:[#allocation9 + $0xc] sm:$0xf]
    %v115 = vld [vmem:[#allocation9 + $0x10] sm:$0xf]
    %v116 = vld [vmem:[#allocation9 + $0x14] sm:$0xf]
    %v117 = vld [vmem:[#allocation9 + $0x18] sm:$0xf]
    %v118 = vld [vmem:[#allocation9 + $0x1c] sm:$0xf]
    %v119 = vld [vmem:[#allocation9 + $0x20] sm:$0xf]
    %v120 = vld [vmem:[#allocation9 + $0x24] sm:$0xf]
    %v121 = vld [vmem:[#allocation9 + $0x28] sm:$0xf]
    %v122 = vld [vmem:[#allocation9 + $0x2c] sm:$0xf]
    %v123 = vld [vmem:[#allocation9 + $0x30] sm:$0xf]
    %v124 = vld [vmem:[#allocation9 + $0x34] sm:$0xf]
    %v125 = vld [vmem:[#allocation9 + $0x38] sm:$0xf]
    %v126 = vld [vmem:[#allocation9 + $0x3c] sm:$0xf]
    %v127 = vld [vmem:[#allocation11] sm:$0xff]
    %v128 = vld [vmem:[#allocation11 + $0x8] sm:$0xff]
    %v129 = vld [vmem:[%s3] sm:$0x1]
    %v130 = vperm.slane %v127, 0
    %v133 = vunpack.c.l.b16 %v109
    %v134 = vunpack.c.l.b16 %v110
    %v135 = vpack.c.b16 %v134, %v133
    %v153 = vunpack.c.l.b16 %v111
    %v154 = vunpack.c.l.b16 %v112
    %v155 = vunpack.c.l.b16 %v113
    %v156 = vunpack.c.l.b16 %v114
    %v157 = vunpack.c.l.b16 %v115
    %v158 = vunpack.c.l.b16 %v116
    %v159 = vunpack.c.l.b16 %v117
    %v160 = vunpack.c.l.b16 %v118
    %v161 = vunpack.c.l.b16 %v119
    %v162 = vunpack.c.l.b16 %v120
    %v163 = vunpack.c.l.b16 %v121
    %v164 = vunpack.c.l.b16 %v122
    %v165 = vunpack.c.l.b16 %v123
    %v166 = vunpack.c.l.b16 %v124
    %v167 = vunpack.c.l.b16 %v125
    %v168 = vunpack.c.l.b16 %v126
    %v169 = vpack.c.b16 %v154, %v153
    %v170 = vpack.c.b16 %v156, %v155
    %v171 = vpack.c.b16 %v158, %v157
    %v172 = vpack.c.b16 %v160, %v159
    %v173 = vpack.c.b16 %v162, %v161
    %v174 = vpack.c.b16 %v164, %v163
    %v175 = vpack.c.b16 %v166, %v165
    %v176 = vpack.c.b16 %v168, %v167
    %185 = vmatpush.bf16.msra.mxu0 %v176
    %186 = vmatpush.bf16.msra.mxu0 %v175
    %187 = vmatpush.bf16.msra.mxu0 %v174
    %188 = vmatpush.bf16.msra.mxu0 %v173
    %189 = vmatpush.bf16.msra.mxu0 %v172
    %190 = vmatpush.bf16.msra.mxu0 %v171
    %191 = vmatpush.bf16.msra.mxu0 %v170
    %192 = vmatpush.bf16.msra.mxu0 %v169
    %193 = vmatmul.bf16.gmra.mxu0 %v135
    %v194 = vpop.f32.mrf.mxu0
    %v195 = vadd.f32 %v130, %v194
    %v196 = vpop.f32.mrf.mxu0
    %v197 = vadd.f32 %v130, %v196
    %198 = vdwg.mxu0
    %199 = vadd.xlane.f32.xlu0 %v195
    %v200 = vpop.xlane.xlu0 %199
    %201 = vadd.xlane.f32.xlu0 %v197
    %v202 = vpop.xlane.xlu0 %201
    %v203 = vmul.f32 %v200, 0.015625
    %v204 = vmul.f32 %v202, 0.015625
    %v205 = vmul.f32 %v195, %v195
    %v206 = vmul.f32 %v197, %v197
    %207 = vadd.xlane.f32.xlu0 %v205
    %v208 = vpop.xlane.xlu0 %207
    %209 = vadd.xlane.f32.xlu0 %v206
    %v210 = vpop.xlane.xlu0 %209
    %v211 = vmul.f32 %v208, 0.015625
    %v212 = vmul.f32 %v210, 0.015625
    %v213 = vmul.f32 %v203, %v203
    %v214 = vmul.f32 %v204, %v204
    %v215 = vsub.f32 %v211, %v213
    %v216 = vsub.f32 %v212, %v214
    %v217 = vmax.f32 %v215, 0.0
    %v218 = vmax.f32 %v216, 0.0
    %v219 = vsub.f32 %v195, %v203
    %v220 = vsub.f32 %v197, %v204
    %v221 = vadd.f32 %v217, 1e-05
    %v222 = vadd.f32 %v218, 1e-05
    %v223 = vrsqrt.pop %v221
    %v224 = vmul.f32 %v223, %v221
    %v225 = vmul.f32 %v224, %v223
    %v226 = vmul.f32 0.5, %v225
    %v227 = vsub.f32 1.5, %v226
    %v228 = vmul.f32 %v223, %v227
    %vm229 = vweird.f32 %v221
    %vm230 = vweird.f32 %v223
    %vm231 = vmor %vm229, %vm230
    %v232 = vsel %vm231, %v223, %v228
    %v233 = vrsqrt.pop %v222
    %v234 = vmul.f32 %v233, %v222
    %v235 = vmul.f32 %v234, %v233
    %v236 = vmul.f32 0.5, %v235
    %v237 = vsub.f32 1.5, %v236
    %v238 = vmul.f32 %v233, %v237
    %vm239 = vweird.f32 %v222
    %vm240 = vweird.f32 %v233
    %vm241 = vmor %vm239, %vm240
    %v242 = vsel %vm241, %v233, %v238
    %v243 = vmul.f32 %v219, %v232
    %v244 = vmul.f32 %v220, %v242
    %v245 = vperm.slane %v127, 1
    %v246 = vmul.f32 %v243, %v245
    %v247 = vmul.f32 %v244, %v245
    %v248 = vperm.slane %v127, 2
    %v249 = vadd.f32 %v246, %v248
    %v250 = vadd.f32 %v247, %v248
    %vm251 = vcmp.gt.f32.partialorder %v249, 0.0
    %vm252 = vcmp.gt.f32.partialorder %v250, 0.0
    %v253 = vmul.f32 %v249, 0.01
    %v254 = vmul.f32 %v250, 0.01
    %v255 = vsel %vm251, %v249, %v253
    %v256 = vsel %vm252, %v250, %v254
    %s257 = smul.u32 4, 16
    %s258 = smul.u32 %s257, 1
    %s259 = sshll.u32 %s258, 4
    %260 = dma.done [#allocation5], %s259
    %v261 = vld [vmem:[#allocation2] sm:$0xf]
    %v262 = vld [vmem:[#allocation2 + $0x4] sm:$0xf]
    %v263 = vld [vmem:[#allocation2 + $0x8] sm:$0xf]
    %v264 = vld [vmem:[#allocation2 + $0xc] sm:$0xf]
    %v265 = vld [vmem:[#allocation2 + $0x10] sm:$0xf]
    %v266 = vld [vmem:[#allocation2 + $0x14] sm:$0xf]
    %v267 = vld [vmem:[#allocation2 + $0x18] sm:$0xf]
    %v268 = vld [vmem:[#allocation2 + $0x1c] sm:$0xf]
    %v269 = vld [vmem:[#allocation2 + $0x20] sm:$0xf]
    %v270 = vld [vmem:[#allocation2 + $0x24] sm:$0xf]
    %v271 = vld [vmem:[#allocation2 + $0x28] sm:$0xf]
    %v272 = vld [vmem:[#allocation2 + $0x2c] sm:$0xf]
    %v273 = vld [vmem:[#allocation2 + $0x30] sm:$0xf]
    %v274 = vld [vmem:[#allocation2 + $0x34] sm:$0xf]
    %v275 = vld [vmem:[#allocation2 + $0x38] sm:$0xf]
    %v276 = vld [vmem:[#allocation2 + $0x3c] sm:$0xf]
    %v277 = vpack.c.bf16 %v256, %v255
    %v278 = vperm.slane %v127, 3
    %v295 = vunpack.c.l.b16 %v261
    %v296 = vunpack.c.l.b16 %v262
    %v297 = vunpack.c.l.b16 %v263
    %v298 = vunpack.c.l.b16 %v264
    %v299 = vunpack.c.l.b16 %v265
    %v300 = vunpack.c.l.b16 %v266
    %v301 = vunpack.c.l.b16 %v267
    %v302 = vunpack.c.l.b16 %v268
    %v303 = vunpack.c.l.b16 %v269
    %v304 = vunpack.c.l.b16 %v270
    %v305 = vunpack.c.l.b16 %v271
    %v306 = vunpack.c.l.b16 %v272
    %v307 = vunpack.c.l.b16 %v273
    %v308 = vunpack.c.l.b16 %v274
    %v309 = vunpack.c.l.b16 %v275
    %v310 = vunpack.c.l.b16 %v276
    %v311 = vpack.c.b16 %v296, %v295
    %v312 = vpack.c.b16 %v298, %v297
    %v313 = vpack.c.b16 %v300, %v299
    %v314 = vpack.c.b16 %v302, %v301
    %v315 = vpack.c.b16 %v304, %v303
    %v316 = vpack.c.b16 %v306, %v305
    %v317 = vpack.c.b16 %v308, %v307
    %v318 = vpack.c.b16 %v310, %v309
    %327 = vmatpush.bf16.msra.mxu0 %v318
    %328 = vmatpush.bf16.msra.mxu0 %v317
    %329 = vmatpush.bf16.msra.mxu0 %v316
    %330 = vmatpush.bf16.msra.mxu0 %v315
    %331 = vmatpush.bf16.msra.mxu0 %v314
    %332 = vmatpush.bf16.msra.mxu0 %v313
    %333 = vmatpush.bf16.msra.mxu0 %v312
    %334 = vmatpush.bf16.msra.mxu0 %v311
    %335 = vmatmul.bf16.gmra.mxu0 %v277
    %v336 = vpop.f32.mrf.mxu0
    %v337 = vadd.f32 %v278, %v336
    %v338 = vpop.f32.mrf.mxu0
    %v339 = vadd.f32 %v278, %v338
    %340 = vdwg.mxu0
    %341 = vadd.xlane.f32.xlu0 %v337
    %v342 = vpop.xlane.xlu0 %341
    %343 = vadd.xlane.f32.xlu0 %v339
    %v344 = vpop.xlane.xlu0 %343
    %v345 = vmul.f32 %v342, 0.015625
    %v346 = vmul.f32 %v344, 0.015625
    %v347 = vmul.f32 %v337, %v337
    %v348 = vmul.f32 %v339, %v339
    %349 = vadd.xlane.f32.xlu0 %v347
    %v350 = vpop.xlane.xlu0 %349
    %351 = vadd.xlane.f32.xlu0 %v348
    %v352 = vpop.xlane.xlu0 %351
    %v353 = vmul.f32 %v350, 0.015625
    %v354 = vmul.f32 %v352, 0.015625
    %v355 = vmul.f32 %v345, %v345
    %v356 = vmul.f32 %v346, %v346
    %v357 = vsub.f32 %v353, %v355
    %v358 = vsub.f32 %v354, %v356
    %v359 = vmax.f32 %v357, 0.0
    %v360 = vmax.f32 %v358, 0.0
    %v361 = vsub.f32 %v337, %v345
    %v362 = vsub.f32 %v339, %v346
    %v363 = vadd.f32 %v359, 1e-05
    %v364 = vadd.f32 %v360, 1e-05
    %v365 = vrsqrt.pop %v363
    %v366 = vmul.f32 %v365, %v363
    %v367 = vmul.f32 %v366, %v365
    %v368 = vmul.f32 0.5, %v367
    %v369 = vsub.f32 1.5, %v368
    %v370 = vmul.f32 %v365, %v369
    %vm371 = vweird.f32 %v363
    %vm372 = vweird.f32 %v365
    %vm373 = vmor %vm371, %vm372
    %v374 = vsel %vm373, %v365, %v370
    %v375 = vrsqrt.pop %v364
    %v376 = vmul.f32 %v375, %v364
    %v377 = vmul.f32 %v376, %v375
    %v378 = vmul.f32 0.5, %v377
    %v379 = vsub.f32 1.5, %v378
    %v380 = vmul.f32 %v375, %v379
    %vm381 = vweird.f32 %v364
    %vm382 = vweird.f32 %v375
    %vm383 = vmor %vm381, %vm382
    %v384 = vsel %vm383, %v375, %v380
    %v385 = vmul.f32 %v361, %v374
    %v386 = vmul.f32 %v362, %v384
    %v387 = vperm.slane %v127, 4
    %v388 = vmul.f32 %v385, %v387
    %v389 = vmul.f32 %v386, %v387
    %v390 = vperm.slane %v127, 5
    %v391 = vadd.f32 %v388, %v390
    %v392 = vadd.f32 %v389, %v390
    %vm393 = vcmp.gt.f32.partialorder %v391, 0.0
    %vm394 = vcmp.gt.f32.partialorder %v392, 0.0
    %v395 = vmul.f32 %v391, 0.01
    %v396 = vmul.f32 %v392, 0.01
    %v397 = vsel %vm393, %v391, %v395
    %v398 = vsel %vm394, %v392, %v396
    %s399 = sshll.u32 %s258, 4
    %400 = dma.done %s81, %s399
    %v401 = vld [vmem:[#allocation3] sm:$0xf]
    %v402 = vld [vmem:[#allocation3 + $0x4] sm:$0xf]
    %v403 = vld [vmem:[#allocation3 + $0x8] sm:$0xf]
    %v404 = vld [vmem:[#allocation3 + $0xc] sm:$0xf]
    %v405 = vld [vmem:[#allocation3 + $0x10] sm:$0xf]
    %v406 = vld [vmem:[#allocation3 + $0x14] sm:$0xf]
    %v407 = vld [vmem:[#allocation3 + $0x18] sm:$0xf]
    %v408 = vld [vmem:[#allocation3 + $0x1c] sm:$0xf]
    %v409 = vld [vmem:[#allocation3 + $0x20] sm:$0xf]
    %v410 = vld [vmem:[#allocation3 + $0x24] sm:$0xf]
    %v411 = vld [vmem:[#allocation3 + $0x28] sm:$0xf]
    %v412 = vld [vmem:[#allocation3 + $0x2c] sm:$0xf]
    %v413 = vld [vmem:[#allocation3 + $0x30] sm:$0xf]
    %v414 = vld [vmem:[#allocation3 + $0x34] sm:$0xf]
    %v415 = vld [vmem:[#allocation3 + $0x38] sm:$0xf]
    %v416 = vld [vmem:[#allocation3 + $0x3c] sm:$0xf]
    %v417 = vpack.c.bf16 %v398, %v397
    %v418 = vperm.slane %v127, 6
    %v435 = vunpack.c.l.b16 %v401
    %v436 = vunpack.c.l.b16 %v402
    %v437 = vunpack.c.l.b16 %v403
    %v438 = vunpack.c.l.b16 %v404
    %v439 = vunpack.c.l.b16 %v405
    %v440 = vunpack.c.l.b16 %v406
    %v441 = vunpack.c.l.b16 %v407
    %v442 = vunpack.c.l.b16 %v408
    %v443 = vunpack.c.l.b16 %v409
    %v444 = vunpack.c.l.b16 %v410
    %v445 = vunpack.c.l.b16 %v411
    %v446 = vunpack.c.l.b16 %v412
    %v447 = vunpack.c.l.b16 %v413
    %v448 = vunpack.c.l.b16 %v414
    %v449 = vunpack.c.l.b16 %v415
    %v450 = vunpack.c.l.b16 %v416
    %v451 = vpack.c.b16 %v436, %v435
    %v452 = vpack.c.b16 %v438, %v437
    %v453 = vpack.c.b16 %v440, %v439
    %v454 = vpack.c.b16 %v442, %v441
    %v455 = vpack.c.b16 %v444, %v443
    %v456 = vpack.c.b16 %v446, %v445
    %v457 = vpack.c.b16 %v448, %v447
    %v458 = vpack.c.b16 %v450, %v449
    %467 = vmatpush.bf16.msra.mxu0 %v458
    %468 = vmatpush.bf16.msra.mxu0 %v457
    %469 = vmatpush.bf16.msra.mxu0 %v456
    %470 = vmatpush.bf16.msra.mxu0 %v455
    %471 = vmatpush.bf16.msra.mxu0 %v454
    %472 = vmatpush.bf16.msra.mxu0 %v453
    %473 = vmatpush.bf16.msra.mxu0 %v452
    %474 = vmatpush.bf16.msra.mxu0 %v451
    %475 = vmatmul.bf16.gmra.mxu0 %v417
    %v476 = vpop.f32.mrf.mxu0
    %v477 = vadd.f32 %v418, %v476
    %v478 = vpop.f32.mrf.mxu0
    %v479 = vadd.f32 %v418, %v478
    %480 = vdwg.mxu0
    %481 = vadd.xlane.f32.xlu0 %v477
    %v482 = vpop.xlane.xlu0 %481
    %483 = vadd.xlane.f32.xlu0 %v479
    %v484 = vpop.xlane.xlu0 %483
    %v485 = vmul.f32 %v482, 0.015625
    %v486 = vmul.f32 %v484, 0.015625
    %v487 = vmul.f32 %v477, %v477
    %v488 = vmul.f32 %v479, %v479
    %489 = vadd.xlane.f32.xlu0 %v487
    %v490 = vpop.xlane.xlu0 %489
    %491 = vadd.xlane.f32.xlu0 %v488
    %v492 = vpop.xlane.xlu0 %491
    %v493 = vmul.f32 %v490, 0.015625
    %v494 = vmul.f32 %v492, 0.015625
    %v495 = vmul.f32 %v485, %v485
    %v496 = vmul.f32 %v486, %v486
    %v497 = vsub.f32 %v493, %v495
    %v498 = vsub.f32 %v494, %v496
    %v499 = vmax.f32 %v497, 0.0
    %v500 = vmax.f32 %v498, 0.0
    %v501 = vsub.f32 %v477, %v485
    %v502 = vsub.f32 %v479, %v486
    %v503 = vadd.f32 %v499, 1e-05
    %v504 = vadd.f32 %v500, 1e-05
    %v505 = vrsqrt.pop %v503
    %v506 = vmul.f32 %v505, %v503
    %v507 = vmul.f32 %v506, %v505
    %v508 = vmul.f32 0.5, %v507
    %v509 = vsub.f32 1.5, %v508
    %v510 = vmul.f32 %v505, %v509
    %vm511 = vweird.f32 %v503
    %vm512 = vweird.f32 %v505
    %vm513 = vmor %vm511, %vm512
    %v514 = vsel %vm513, %v505, %v510
    %v515 = vrsqrt.pop %v504
    %v516 = vmul.f32 %v515, %v504
    %v517 = vmul.f32 %v516, %v515
    %v518 = vmul.f32 0.5, %v517
    %v519 = vsub.f32 1.5, %v518
    %v520 = vmul.f32 %v515, %v519
    %vm521 = vweird.f32 %v504
    %vm522 = vweird.f32 %v515
    %vm523 = vmor %vm521, %vm522
    %v524 = vsel %vm523, %v515, %v520
    %v525 = vmul.f32 %v501, %v514
    %v526 = vmul.f32 %v502, %v524
    %v527 = vperm.slane %v127, 7
    %v528 = vmul.f32 %v525, %v527
    %v529 = vmul.f32 %v526, %v527
    %v530 = vperm.slane %v128, 0
    %v531 = vadd.f32 %v528, %v530
    %v532 = vadd.f32 %v529, %v530
    %vm533 = vcmp.gt.f32.partialorder %v531, 0.0
    %vm534 = vcmp.gt.f32.partialorder %v532, 0.0
    %v535 = vmul.f32 %v531, 0.01
    %v536 = vmul.f32 %v532, 0.01
    %v537 = vsel %vm533, %v531, %v535
    %v538 = vsel %vm534, %v532, %v536
    %s539 = sshll.u32 %s258, 4
    %540 = dma.done %s95, %s539
    %v541 = vld [vmem:[#allocation4] sm:$0xf]
    %v542 = vld [vmem:[#allocation4 + $0x4] sm:$0xf]
    %v543 = vld [vmem:[#allocation4 + $0x8] sm:$0xf]
    %v544 = vld [vmem:[#allocation4 + $0xc] sm:$0xf]
    %v545 = vld [vmem:[#allocation4 + $0x10] sm:$0xf]
    %v546 = vld [vmem:[#allocation4 + $0x14] sm:$0xf]
    %v547 = vld [vmem:[#allocation4 + $0x18] sm:$0xf]
    %v548 = vld [vmem:[#allocation4 + $0x1c] sm:$0xf]
    %v549 = vld [vmem:[#allocation4 + $0x20] sm:$0xf]
    %v550 = vld [vmem:[#allocation4 + $0x24] sm:$0xf]
    %v551 = vld [vmem:[#allocation4 + $0x28] sm:$0xf]
    %v552 = vld [vmem:[#allocation4 + $0x2c] sm:$0xf]
    %v553 = vld [vmem:[#allocation4 + $0x30] sm:$0xf]
    %v554 = vld [vmem:[#allocation4 + $0x34] sm:$0xf]
    %v555 = vld [vmem:[#allocation4 + $0x38] sm:$0xf]
    %v556 = vld [vmem:[#allocation4 + $0x3c] sm:$0xf]
    %v557 = vpack.c.bf16 %v538, %v537
    %v559 = vperm.slane %v129, 0
    %v577 = vunpack.c.l.b16 %v541
    %v578 = vunpack.c.l.b16 %v542
    %v579 = vunpack.c.l.b16 %v543
    %v580 = vunpack.c.l.b16 %v544
    %v581 = vunpack.c.l.b16 %v545
    %v582 = vunpack.c.l.b16 %v546
    %v583 = vunpack.c.l.b16 %v547
    %v584 = vunpack.c.l.b16 %v548
    %v585 = vunpack.c.l.b16 %v549
    %v586 = vunpack.c.l.b16 %v550
    %v587 = vunpack.c.l.b16 %v551
    %v588 = vunpack.c.l.b16 %v552
    %v589 = vunpack.c.l.b16 %v553
    %v590 = vunpack.c.l.b16 %v554
    %v591 = vunpack.c.l.b16 %v555
    %v592 = vunpack.c.l.b16 %v556
    %v593 = vpack.c.b16 %v578, %v577
    %v594 = vpack.c.b16 %v580, %v579
    %v595 = vpack.c.b16 %v582, %v581
    %v596 = vpack.c.b16 %v584, %v583
    %v597 = vpack.c.b16 %v586, %v585
    %v598 = vpack.c.b16 %v588, %v587
    %v599 = vpack.c.b16 %v590, %v589
    %v600 = vpack.c.b16 %v592, %v591
    %609 = vmatpush.bf16.msra.mxu0 %v600
    %610 = vmatpush.bf16.msra.mxu0 %v599
    %611 = vmatpush.bf16.msra.mxu0 %v598
    %612 = vmatpush.bf16.msra.mxu0 %v597
    %613 = vmatpush.bf16.msra.mxu0 %v596
    %614 = vmatpush.bf16.msra.mxu0 %v595
    %615 = vmatpush.bf16.msra.mxu0 %v594
    %616 = vmatpush.bf16.msra.mxu0 %v593
    %617 = vmatmul.bf16.gmra.mxu0 %v557
    %v618 = vpop.f32.mrf.mxu0
    %v619 = vadd.f32 %v559, %v618
    %v620 = vpop.f32.mrf.mxu0
    %v621 = vadd.f32 %v559, %v620
    %622 = vdwg.mxu0
    %623 = vst [vmem:[#allocation12] sm:$0xff] %v619
    %624 = vst [vmem:[#allocation12 + $0x8] sm:$0xff] %v621
    // Predicated region
    $region42: #{tpu_custom_call.1} parent=1 // pred_check
      _
    $region43: #{tpu_custom_call.1} parent=1 // pred_check_branch
      %626 = sbr.rel (0) target = $region45
    $region44: #{tpu_custom_call.1} parent=1 // pred_region
      %628 = vsyncadd [#allocation8], 0
      %s629 = sshll.u32 [#allocation12], 4
      %s630 = int_to_ptr.vmem [resolvable:$true] %s629
      %s631 = sshll.u32 %s7, 4
      %s632 = int_to_ptr.hbm [resolvable:$true] %s631
      %637 = dma.vmem_to_hbm [thread:$0]  %s630, 256, %s632, [#allocation8], 128, 128, 8
    $region45: #{tpu_custom_call.1} parent=1 // pred_fallthru
      _
    // Predicated region
    $region46: #{tpu_custom_call.1} parent=1 // pred_check
      _
    $region47: #{tpu_custom_call.1} parent=1 // pred_check_branch
      %639 = sbr.rel (0) target = $region49
    $region48: #{tpu_custom_call.1} parent=1 // pred_region
      %641 = dma.done [#allocation8], 256
    $region49: #{tpu_custom_call.1} parent=1 // pred_fallthru
      _
    %642 = vsyncpa [#allocation7], 1
    %643 = vsyncpa [#allocation10], 1
    %644 = vsyncpa [#allocation8], 1
  %645 = vsyncmov [#allocation5]
  %s646 = vpop.sfrf %645
  %p647 = scmp.eq.s32.totalorder %s646, 0
  %p648 = pneg %p647
  %650 = shalt.err (%p648)
  %s651 = scalar_lea.sflag [#allocation5], 1
  %652 = vsyncmov %s651
  %s653 = vpop.sfrf %652
  %p654 = scmp.eq.s32.totalorder %s653, 0
  %p655 = pneg %p654
  %657 = shalt.err (%p655)
  %s658 = scalar_lea.sflag [#allocation5], 2
  %659 = vsyncmov %s658
  %s660 = vpop.sfrf %659
  %p661 = scmp.eq.s32.totalorder %s660, 0
  %p662 = pneg %p661
  %664 = shalt.err (%p662)

// kernel: tpu_custom_call.1
$region0: #{tpu_custom_call.1}
  #allocation0 [shape = 'u32[]', space=smem, size = 0x4, offset = 0x4, fixed_abs, tag = 'smem constant byte address 0x4 - core index']
  #allocation1 [shape = 'u32[72,128]{1,0:T(1,128)}', space=vmem, size = 0x9000, scoped, tag = 'internal scratch']
  #allocation2 [shape = 'bf16[128,128]{1,0:T(8,128)(2,1)}', space=vmem, size = 0x8000, scoped, tag = 'scratch operand']
  #allocation3 [shape = 'bf16[128,128]{1,0:T(8,128)(2,1)}', space=vmem, size = 0x8000, scoped, tag = 'scratch operand']
  #allocation4 [shape = 'bf16[128,128]{1,0:T(8,128)(2,1)}', space=vmem, size = 0x8000, scoped, tag = 'scratch operand']
  #allocation5 [shape = 's32[3]{0}', space=sflag, size = 0xc, scoped, tag = 'scratch operand']
  #allocation13 [shape = 's32[]', space=sflag, size = 0x4, offset = 0, fixed_abs, tag = 'sflag constant byte address 0x0 - dummy sync flag']
  #allocation14 [shape = 's32[]', space=sflag, size = 0x4, offset = 0, fixed_abs, tag = 'sflag constant byte address 0x0 - dummy sync flag']
  #allocation15 [shape = 'u32[]', space=smem, size = 0x4, offset = 0x44, fixed_abs, tag = 'smem constant byte address 0x44 - assertion arg 0']
  #allocation16 [shape = 'u32[]', space=smem, size = 0x4, offset = 0x48, fixed_abs, tag = 'smem constant byte address 0x48 - assertion arg 1']
  #allocation17 [shape = 's32[]', space=sflag, size = 0x4, offset = 0, fixed_abs, tag = 'sflag constant byte address 0x0 - dummy sync flag']
  #allocation18 [shape = 's32[]', space=sflag, size = 0x4, offset = 0, fixed_abs, tag = 'sflag constant byte address 0x0 - dummy sync flag']
  #allocation19 [shape = 's32[]', space=sflag, size = 0x4, offset = 0, fixed_abs, tag = 'sflag constant byte address 0x0 - dummy sync flag']
  #allocation20 [shape = 's32[]', space=sflag, size = 0x4, offset = 0, fixed_abs, tag = 'sflag constant byte address 0x0 - dummy sync flag']
  %s0 = inlined_call_operand.hbm [shape: bf16[16,128], index: 0, kind: input, shape index: {}]
  %s1 = inlined_call_operand.hbm [shape: bf16[128,128], index: 1, kind: input, shape index: {}]
  %s2 = inlined_call_operand.hbm [shape: f32[16,128], index: 2, kind: input, shape index: {}]
  %s3 = inlined_call_operand.vmem [shape: f32[1,128], index: 3, kind: input, shape index: {}]
  %s4 = inlined_call_operand.hbm [shape: bf16[128,128], index: 4, kind: input, shape index: {}]
  %s5 = inlined_call_operand.hbm [shape: bf16[128,128], index: 5, kind: input, shape index: {}]
  %s6 = inlined_call_operand.hbm [shape: bf16[128,128], index: 6, kind: input, shape index: {}]
  %s7 = inlined_call_operand.hbm [shape: f32[16,128], index: 7, kind: output, shape index: {}]
  %s8 = sld [smem:[#allocation0]]
  $region50: #{tpu_custom_call.1} parent=0
    _
  %s10 = ssub.s32 1, %s8
  %s11 = scalar_select 0, %s10, %s8
  $region1: #{tpu_custom_call.1} parent=0
    #allocation6 [shape = 'u8[4096]{0}', space=vmem, size = 0x1000, scoped, tag = 'input window, operand 0, single buffered']
    #allocation7 [shape = 's32[1]{0}', space=sflag, size = 0x4, scoped, tag = 'scoped memory for tpu_custom_call.1']
    #allocation8 [shape = 's32[1]{0}', space=sflag, size = 0x4, scoped, tag = 'scoped memory for tpu_custom_call.1']
    #allocation9 [shape = 'u8[32768]{0}', space=vmem, size = 0x8000, scoped, tag = 'input window, operand 1, single buffered']
    #allocation10 [shape = 's32[1]{0}', space=sflag, size = 0x4, scoped, tag = 'scoped memory for tpu_custom_call.1']
    #allocation11 [shape = 'u8[8192]{0}', space=vmem, size = 0x2000, scoped, tag = 'input window, operand 2, single buffered']
    #allocation12 [shape = 'u8[8192]{0}', space=vmem, size = 0x2000, scoped, tag = 'output window, operand 0, single buffered']
    %12 = vsyncpa [#allocation7], 0
    %13 = vsyncpa [#allocation10], 0
    %14 = vsyncpa [#allocation8], 0
    // Predicated region
    $region2: #{tpu_custom_call.1} parent=1 // pred_check
      _
    $region3: #{tpu_custom_call.1} parent=1 // pred_check_branch
      %16 = sbr.rel (0) target = $region5
    $region4: #{tpu_custom_call.1} parent=1 // pred_region
      %18 = vsyncadd [#allocation7], 0
      %s19 = sshll.u32 %s0, 4
      %s20 = int_to_ptr.hbm [resolvable:$true] %s19
      %s21 = sshll.u32 [#allocation6], 4
      %s22 = int_to_ptr.vmem [resolvable:$true] %s21
      %27 = dma.hbm_to_vmem [thread:$0]  %s20, 128, %s22, [#allocation7], 64, 64, 4
    $region5: #{tpu_custom_call.1} parent=1 // pred_fallthru
      _
    // Predicated region
    $region6: #{tpu_custom_call.1} parent=1 // pred_check
      _
    $region7: #{tpu_custom_call.1} parent=1 // pred_check_branch
      %29 = sbr.rel (0) target = $region9
    $region8: #{tpu_custom_call.1} parent=1 // pred_region
      %31 = vsyncadd [#allocation10], 0
      %s32 = sshll.u32 %s1, 4
      %s33 = int_to_ptr.hbm [resolvable:$true] %s32
      %s34 = sshll.u32 [#allocation9], 4
      %s35 = int_to_ptr.vmem [resolvable:$true] %s34
      %40 = dma.hbm_to_vmem [thread:$0]  %s33, 1024, %s35, [#allocation10], 64, 64, 4
    $region9: #{tpu_custom_call.1} parent=1 // pred_fallthru
      _
    // Predicated region
    $region10: #{tpu_custom_call.1} parent=1 // pred_check
      _
    $region11: #{tpu_custom_call.1} parent=1 // pred_check_branch
      %42 = sbr.rel (0) target = $region13
    $region12: #{tpu_custom_call.1} parent=1 // pred_region
      %44 = vsyncadd [#allocation10], 0
      %s45 = sshll.u32 %s2, 4
      %s46 = int_to_ptr.hbm [resolvable:$true] %s45
      %s47 = sshll.u32 [#allocation11], 4
      %s48 = int_to_ptr.vmem [resolvable:$true] %s47
      %53 = dma.hbm_to_vmem [thread:$0]  %s46, 256, %s48, [#allocation10], 128, 128, 8
    $region13: #{tpu_custom_call.1} parent=1 // pred_fallthru
      _
    // Predicated region
    $region14: #{tpu_custom_call.1} parent=1 // pred_check
      _
    $region15: #{tpu_custom_call.1} parent=1 // pred_check_branch
      %55 = sbr.rel (0) target = $region17
    $region16: #{tpu_custom_call.1} parent=1 // pred_region
      _
    $region17: #{tpu_custom_call.1} parent=1 // pred_fallthru
      _
    // Predicated region
    $region18: #{tpu_custom_call.1} parent=1 // pred_check
      _
    $region19: #{tpu_custom_call.1} parent=1 // pred_check_branch
      %57 = sbr.rel (0) target = $region21
    $region20: #{tpu_custom_call.1} parent=1 // pred_region
      %59 = dma.done [#allocation7], 128
    $region21: #{tpu_custom_call.1} parent=1 // pred_fallthru
      _
    // Predicated region
    $region22: #{tpu_custom_call.1} parent=1 // pred_check
      _
    $region23: #{tpu_custom_call.1} parent=1 // pred_check_branch
      %61 = sbr.rel (0) target = $region25
    $region24: #{tpu_custom_call.1} parent=1 // pred_region
      %63 = dma.done [#allocation10], 1024
    $region25: #{tpu_custom_call.1} parent=1 // pred_fallthru
      _
    // Predicated region
    $region26: #{tpu_custom_call.1} parent=1 // pred_check
      _
    $region27: #{tpu_custom_call.1} parent=1 // pred_check_branch
      %65 = sbr.rel (0) target = $region29
    $region28: #{tpu_custom_call.1} parent=1 // pred_region
      %67 = dma.done [#allocation10], 256
    $region29: #{tpu_custom_call.1} parent=1 // pred_fallthru
      _
    // Predicated region
    $region30: #{tpu_custom_call.1} parent=1 // pred_check
      _
    $region31: #{tpu_custom_call.1} parent=1 // pred_check_branch
      %69 = sbr.rel target = $region33
    $region32: #{tpu_custom_call.1} parent=1 // pred_region
      %70 = sst [smem:[#allocation15]] [#allocation14]
      %71 = sst [smem:[#allocation16]] [#allocation13]
    $region33: #{tpu_custom_call.1} parent=1 // pred_fallthru
      _
    %73 = shalt.err (0)
    %s75 = sshll.u32 %s4, 4
    %s76 = int_to_ptr.hbm [resolvable:$true] %s75
    %s77 = sshll.u32 [#allocation2], 4
    %s78 = int_to_ptr.vmem [resolvable:$true] %s77
    %80 = dma.hbm_to_vmem [thread:$0]  %s76, 1024, %s78, [#allocation5]
    %s81 = scalar_lea.sflag [#allocation5], 1
    // Predicated region
    $region34: #{tpu_custom_call.1} parent=1 // pred_check
      _
    $region35: #{tpu_custom_call.1} parent=1 // pred_check_branch
      %83 = sbr.rel target = $region37
    $region36: #{tpu_custom_call.1} parent=1 // pred_region
      %84 = sst [smem:[#allocation15]] [#allocation18]
      %85 = sst [smem:[#allocation16]] [#allocation17]
    $region37: #{tpu_custom_call.1} parent=1 // pred_fallthru
      _
    %87 = shalt.err (0)
    %s89 = sshll.u32 %s5, 4
    %s90 = int_to_ptr.hbm [resolvable:$true] %s89
    %s91 = sshll.u32 [#allocation3], 4
    %s92 = int_to_ptr.vmem [resolvable:$true] %s91
    %94 = dma.hbm_to_vmem [thread:$0]  %s90, 1024, %s92, %s81
    %s95 = scalar_lea.sflag [#allocation5], 2
    // Predicated region
    $region38: #{tpu_custom_call.1} parent=1 // pred_check
      _
    $region39: #{tpu_custom_call.1} parent=1 // pred_check_branch
      %97 = sbr.rel target = $region41
    $region40: #{tpu_custom_call.1} parent=1 // pred_region
      %98 = sst [smem:[#allocation15]] [#allocation20]
      %99 = sst [smem:[#allocation16]] [#allocation19]
    $region41: #{tpu_custom_call.1} parent=1 // pred_fallthru
      _
    %101 = shalt.err (0)
    %s103 = sshll.u32 %s6, 4
    %s104 = int_to_ptr.hbm [resolvable:$true] %s103
    %s105 = sshll.u32 [#allocation4], 4
    %s106 = int_to_ptr.vmem [resolvable:$true] %s105
    %108 = dma.hbm_to_vmem [thread:$0]  %s104, 1024, %s106, %s95
    %v109 = vld [vmem:[#allocation6] sm:$0xf]
    %v110 = vld [vmem:[#allocation6 + $0x4] sm:$0xf]
    %v111 = vld [vmem:[#allocation9] sm:$0xf]
    %v112 = vld [vmem:[#allocation9 + $0x4] sm:$0xf]
    %v113 = vld [vmem:[#allocation9 + $0x8] sm:$0xf]
    %v114 = vld [vmem:[#allocation9 + $0xc] sm:$0xf]
    %v115 = vld [vmem:[#allocation9 + $0x10] sm:$0xf]
    %v116 = vld [vmem:[#allocation9 + $0x14] sm:$0xf]
    %v117 = vld [vmem:[#allocation9 + $0x18] sm:$0xf]
    %v118 = vld [vmem:[#allocation9 + $0x1c] sm:$0xf]
    %v119 = vld [vmem:[#allocation9 + $0x20] sm:$0xf]
    %v120 = vld [vmem:[#allocation9 + $0x24] sm:$0xf]
    %v121 = vld [vmem:[#allocation9 + $0x28] sm:$0xf]
    %v122 = vld [vmem:[#allocation9 + $0x2c] sm:$0xf]
    %v123 = vld [vmem:[#allocation9 + $0x30] sm:$0xf]
    %v124 = vld [vmem:[#allocation9 + $0x34] sm:$0xf]
    %v125 = vld [vmem:[#allocation9 + $0x38] sm:$0xf]
    %v126 = vld [vmem:[#allocation9 + $0x3c] sm:$0xf]
    %v127 = vld [vmem:[#allocation11] sm:$0xff]
    %v128 = vld [vmem:[#allocation11 + $0x8] sm:$0xff]
    %v129 = vld [vmem:[%s3] sm:$0x1]
    %v130 = vperm.slane %v127, 0
    %v133 = vunpack.c.l.b16 %v109
    %v134 = vunpack.c.l.b16 %v110
    %v135 = vpack.c.b16 %v134, %v133
    %v153 = vunpack.c.l.b16 %v111
    %v154 = vunpack.c.l.b16 %v112
    %v155 = vunpack.c.l.b16 %v113
    %v156 = vunpack.c.l.b16 %v114
    %v157 = vunpack.c.l.b16 %v115
    %v158 = vunpack.c.l.b16 %v116
    %v159 = vunpack.c.l.b16 %v117
    %v160 = vunpack.c.l.b16 %v118
    %v161 = vunpack.c.l.b16 %v119
    %v162 = vunpack.c.l.b16 %v120
    %v163 = vunpack.c.l.b16 %v121
    %v164 = vunpack.c.l.b16 %v122
    %v165 = vunpack.c.l.b16 %v123
    %v166 = vunpack.c.l.b16 %v124
    %v167 = vunpack.c.l.b16 %v125
    %v168 = vunpack.c.l.b16 %v126
    %v169 = vpack.c.b16 %v154, %v153
    %v170 = vpack.c.b16 %v156, %v155
    %v171 = vpack.c.b16 %v158, %v157
    %v172 = vpack.c.b16 %v160, %v159
    %v173 = vpack.c.b16 %v162, %v161
    %v174 = vpack.c.b16 %v164, %v163
    %v175 = vpack.c.b16 %v166, %v165
    %v176 = vpack.c.b16 %v168, %v167
    %185 = vmatpush.bf16.msra.mxu0 %v176
    %186 = vmatpush.bf16.msra.mxu0 %v175
    %187 = vmatpush.bf16.msra.mxu0 %v174
    %188 = vmatpush.bf16.msra.mxu0 %v173
    %189 = vmatpush.bf16.msra.mxu0 %v172
    %190 = vmatpush.bf16.msra.mxu0 %v171
    %191 = vmatpush.bf16.msra.mxu0 %v170
    %192 = vmatpush.bf16.msra.mxu0 %v169
    %193 = vmatmul.bf16.gmra.mxu0 %v135
    %v194 = vpop.f32.mrf.mxu0
    %v195 = vadd.f32 %v130, %v194
    %v196 = vpop.f32.mrf.mxu0
    %v197 = vadd.f32 %v130, %v196
    %198 = vdwg.mxu0
    %199 = vadd.xlane.f32.xlu0 %v195
    %v200 = vpop.xlane.xlu0 %199
    %201 = vadd.xlane.f32.xlu0 %v197
    %v202 = vpop.xlane.xlu0 %201
    %v203 = vmul.f32 %v200, 0.015625
    %v204 = vmul.f32 %v202, 0.015625
    %v205 = vmul.f32 %v195, %v195
    %v206 = vmul.f32 %v197, %v197
    %207 = vadd.xlane.f32.xlu0 %v205
    %v208 = vpop.xlane.xlu0 %207
    %209 = vadd.xlane.f32.xlu0 %v206
    %v210 = vpop.xlane.xlu0 %209
    %v211 = vmul.f32 %v208, 0.015625
    %v212 = vmul.f32 %v210, 0.015625
    %v213 = vmul.f32 %v203, %v203
    %v214 = vmul.f32 %v204, %v204
    %v215 = vsub.f32 %v211, %v213
    %v216 = vsub.f32 %v212, %v214
    %v217 = vmax.f32 %v215, 0.0
    %v218 = vmax.f32 %v216, 0.0
    %v219 = vsub.f32 %v195, %v203
    %v220 = vsub.f32 %v197, %v204
    %v221 = vadd.f32 %v217, 1e-05
    %v222 = vadd.f32 %v218, 1e-05
    %v223 = vrsqrt.pop %v221
    %v224 = vmul.f32 %v223, %v221
    %v225 = vmul.f32 %v224, %v223
    %v226 = vmul.f32 0.5, %v225
    %v227 = vsub.f32 1.5, %v226
    %v228 = vmul.f32 %v223, %v227
    %vm229 = vweird.f32 %v221
    %vm230 = vweird.f32 %v223
    %vm231 = vmor %vm229, %vm230
    %v232 = vsel %vm231, %v223, %v228
    %v233 = vrsqrt.pop %v222
    %v234 = vmul.f32 %v233, %v222
    %v235 = vmul.f32 %v234, %v233
    %v236 = vmul.f32 0.5, %v235
    %v237 = vsub.f32 1.5, %v236
    %v238 = vmul.f32 %v233, %v237
    %vm239 = vweird.f32 %v222
    %vm240 = vweird.f32 %v233
    %vm241 = vmor %vm239, %vm240
    %v242 = vsel %vm241, %v233, %v238
    %v243 = vmul.f32 %v219, %v232
    %v244 = vmul.f32 %v220, %v242
    %v245 = vperm.slane %v127, 1
    %v246 = vmul.f32 %v243, %v245
    %v247 = vmul.f32 %v244, %v245
    %v248 = vperm.slane %v127, 2
    %v249 = vadd.f32 %v246, %v248
    %v250 = vadd.f32 %v247, %v248
    %vm251 = vcmp.gt.f32.partialorder %v249, 0.0
    %vm252 = vcmp.gt.f32.partialorder %v250, 0.0
    %v253 = vmul.f32 %v249, 0.01
    %v254 = vmul.f32 %v250, 0.01
    %v255 = vsel %vm251, %v249, %v253
    %v256 = vsel %vm252, %v250, %v254
    %s257 = smul.u32 4, 16
    %s258 = smul.u32 %s257, 1
    %s259 = sshll.u32 %s258, 4
    %260 = dma.done [#allocation5], %s259
    %v261 = vld [vmem:[#allocation2] sm:$0xf]
    %v262 = vld [vmem:[#allocation2 + $0x4] sm:$0xf]
    %v263 = vld [vmem:[#allocation2 + $0x8] sm:$0xf]
    %v264 = vld [vmem:[#allocation2 + $0xc] sm:$0xf]
    %v265 = vld [vmem:[#allocation2 + $0x10] sm:$0xf]
    %v266 = vld [vmem:[#allocation2 + $0x14] sm:$0xf]
    %v267 = vld [vmem:[#allocation2 + $0x18] sm:$0xf]
    %v268 = vld [vmem:[#allocation2 + $0x1c] sm:$0xf]
    %v269 = vld [vmem:[#allocation2 + $0x20] sm:$0xf]
    %v270 = vld [vmem:[#allocation2 + $0x24] sm:$0xf]
    %v271 = vld [vmem:[#allocation2 + $0x28] sm:$0xf]
    %v272 = vld [vmem:[#allocation2 + $0x2c] sm:$0xf]
    %v273 = vld [vmem:[#allocation2 + $0x30] sm:$0xf]
    %v274 = vld [vmem:[#allocation2 + $0x34] sm:$0xf]
    %v275 = vld [vmem:[#allocation2 + $0x38] sm:$0xf]
    %v276 = vld [vmem:[#allocation2 + $0x3c] sm:$0xf]
    %v277 = vpack.c.bf16 %v256, %v255
    %v278 = vperm.slane %v127, 3
    %v295 = vunpack.c.l.b16 %v261
    %v296 = vunpack.c.l.b16 %v262
    %v297 = vunpack.c.l.b16 %v263
    %v298 = vunpack.c.l.b16 %v264
    %v299 = vunpack.c.l.b16 %v265
    %v300 = vunpack.c.l.b16 %v266
    %v301 = vunpack.c.l.b16 %v267
    %v302 = vunpack.c.l.b16 %v268
    %v303 = vunpack.c.l.b16 %v269
    %v304 = vunpack.c.l.b16 %v270
    %v305 = vunpack.c.l.b16 %v271
    %v306 = vunpack.c.l.b16 %v272
    %v307 = vunpack.c.l.b16 %v273
    %v308 = vunpack.c.l.b16 %v274
    %v309 = vunpack.c.l.b16 %v275
    %v310 = vunpack.c.l.b16 %v276
    %v311 = vpack.c.b16 %v296, %v295
    %v312 = vpack.c.b16 %v298, %v297
    %v313 = vpack.c.b16 %v300, %v299
    %v314 = vpack.c.b16 %v302, %v301
    %v315 = vpack.c.b16 %v304, %v303
    %v316 = vpack.c.b16 %v306, %v305
    %v317 = vpack.c.b16 %v308, %v307
    %v318 = vpack.c.b16 %v310, %v309
    %327 = vmatpush.bf16.msra.mxu0 %v318
    %328 = vmatpush.bf16.msra.mxu0 %v317
    %329 = vmatpush.bf16.msra.mxu0 %v316
    %330 = vmatpush.bf16.msra.mxu0 %v315
    %331 = vmatpush.bf16.msra.mxu0 %v314
    %332 = vmatpush.bf16.msra.mxu0 %v313
    %333 = vmatpush.bf16.msra.mxu0 %v312
    %334 = vmatpush.bf16.msra.mxu0 %v311
    %335 = vmatmul.bf16.gmra.mxu0 %v277
    %v336 = vpop.f32.mrf.mxu0
    %v337 = vadd.f32 %v278, %v336
    %v338 = vpop.f32.mrf.mxu0
    %v339 = vadd.f32 %v278, %v338
    %340 = vdwg.mxu0
    %341 = vadd.xlane.f32.xlu0 %v337
    %v342 = vpop.xlane.xlu0 %341
    %343 = vadd.xlane.f32.xlu0 %v339
    %v344 = vpop.xlane.xlu0 %343
    %v345 = vmul.f32 %v342, 0.015625
    %v346 = vmul.f32 %v344, 0.015625
    %v347 = vmul.f32 %v337, %v337
    %v348 = vmul.f32 %v339, %v339
    %349 = vadd.xlane.f32.xlu0 %v347
    %v350 = vpop.xlane.xlu0 %349
    %351 = vadd.xlane.f32.xlu0 %v348
    %v352 = vpop.xlane.xlu0 %351
    %v353 = vmul.f32 %v350, 0.015625
    %v354 = vmul.f32 %v352, 0.015625
    %v355 = vmul.f32 %v345, %v345
    %v356 = vmul.f32 %v346, %v346
    %v357 = vsub.f32 %v353, %v355
    %v358 = vsub.f32 %v354, %v356
    %v359 = vmax.f32 %v357, 0.0
    %v360 = vmax.f32 %v358, 0.0
    %v361 = vsub.f32 %v337, %v345
    %v362 = vsub.f32 %v339, %v346
    %v363 = vadd.f32 %v359, 1e-05
    %v364 = vadd.f32 %v360, 1e-05
    %v365 = vrsqrt.pop %v363
    %v366 = vmul.f32 %v365, %v363
    %v367 = vmul.f32 %v366, %v365
    %v368 = vmul.f32 0.5, %v367
    %v369 = vsub.f32 1.5, %v368
    %v370 = vmul.f32 %v365, %v369
    %vm371 = vweird.f32 %v363
    %vm372 = vweird.f32 %v365
    %vm373 = vmor %vm371, %vm372
    %v374 = vsel %vm373, %v365, %v370
    %v375 = vrsqrt.pop %v364
    %v376 = vmul.f32 %v375, %v364
    %v377 = vmul.f32 %v376, %v375
    %v378 = vmul.f32 0.5, %v377
    %v379 = vsub.f32 1.5, %v378
    %v380 = vmul.f32 %v375, %v379
    %vm381 = vweird.f32 %v364
    %vm382 = vweird.f32 %v375
    %vm383 = vmor %vm381, %vm382
    %v384 = vsel %vm383, %v375, %v380
    %v385 = vmul.f32 %v361, %v374
    %v386 = vmul.f32 %v362, %v384
    %v387 = vperm.slane %v127, 4
    %v388 = vmul.f32 %v385, %v387
    %v389 = vmul.f32 %v386, %v387
    %v390 = vperm.slane %v127, 5
    %v391 = vadd.f32 %v388, %v390
    %v392 = vadd.f32 %v389, %v390
    %vm393 = vcmp.gt.f32.partialorder %v391, 0.0
    %vm394 = vcmp.gt.f32.partialorder %v392, 0.0
    %v395 = vmul.f32 %v391, 0.01
    %v396 = vmul.f32 %v392, 0.01
    %v397 = vsel %vm393, %v391, %v395
    %v398 = vsel %vm394, %v392, %v396
    %s399 = sshll.u32 %s258, 4
    %400 = dma.done %s81, %s399
    %v401 = vld [vmem:[#allocation3] sm:$0xf]
    %v402 = vld [vmem:[#allocation3 + $0x4] sm:$0xf]
    %v403 = vld [vmem:[#allocation3 + $0x8] sm:$0xf]
    %v404 = vld [vmem:[#allocation3 + $0xc] sm:$0xf]
    %v405 = vld [vmem:[#allocation3 + $0x10] sm:$0xf]
    %v406 = vld [vmem:[#allocation3 + $0x14] sm:$0xf]
    %v407 = vld [vmem:[#allocation3 + $0x18] sm:$0xf]
    %v408 = vld [vmem:[#allocation3 + $0x1c] sm:$0xf]
    %v409 = vld [vmem:[#allocation3 + $0x20] sm:$0xf]
    %v410 = vld [vmem:[#allocation3 + $0x24] sm:$0xf]
    %v411 = vld [vmem:[#allocation3 + $0x28] sm:$0xf]
    %v412 = vld [vmem:[#allocation3 + $0x2c] sm:$0xf]
    %v413 = vld [vmem:[#allocation3 + $0x30] sm:$0xf]
    %v414 = vld [vmem:[#allocation3 + $0x34] sm:$0xf]
    %v415 = vld [vmem:[#allocation3 + $0x38] sm:$0xf]
    %v416 = vld [vmem:[#allocation3 + $0x3c] sm:$0xf]
    %v417 = vpack.c.bf16 %v398, %v397
    %v418 = vperm.slane %v127, 6
    %v435 = vunpack.c.l.b16 %v401
    %v436 = vunpack.c.l.b16 %v402
    %v437 = vunpack.c.l.b16 %v403
    %v438 = vunpack.c.l.b16 %v404
    %v439 = vunpack.c.l.b16 %v405
    %v440 = vunpack.c.l.b16 %v406
    %v441 = vunpack.c.l.b16 %v407
    %v442 = vunpack.c.l.b16 %v408
    %v443 = vunpack.c.l.b16 %v409
    %v444 = vunpack.c.l.b16 %v410
    %v445 = vunpack.c.l.b16 %v411
    %v446 = vunpack.c.l.b16 %v412
    %v447 = vunpack.c.l.b16 %v413
    %v448 = vunpack.c.l.b16 %v414
    %v449 = vunpack.c.l.b16 %v415
    %v450 = vunpack.c.l.b16 %v416
    %v451 = vpack.c.b16 %v436, %v435
    %v452 = vpack.c.b16 %v438, %v437
    %v453 = vpack.c.b16 %v440, %v439
    %v454 = vpack.c.b16 %v442, %v441
    %v455 = vpack.c.b16 %v444, %v443
    %v456 = vpack.c.b16 %v446, %v445
    %v457 = vpack.c.b16 %v448, %v447
    %v458 = vpack.c.b16 %v450, %v449
    %467 = vmatpush.bf16.msra.mxu0 %v458
    %468 = vmatpush.bf16.msra.mxu0 %v457
    %469 = vmatpush.bf16.msra.mxu0 %v456
    %470 = vmatpush.bf16.msra.mxu0 %v455
    %471 = vmatpush.bf16.msra.mxu0 %v454
    %472 = vmatpush.bf16.msra.mxu0 %v453
    %473 = vmatpush.bf16.msra.mxu0 %v452
    %474 = vmatpush.bf16.msra.mxu0 %v451
    %475 = vmatmul.bf16.gmra.mxu0 %v417
    %v476 = vpop.f32.mrf.mxu0
    %v477 = vadd.f32 %v418, %v476
    %v478 = vpop.f32.mrf.mxu0
    %v479 = vadd.f32 %v418, %v478
    %480 = vdwg.mxu0
    %481 = vadd.xlane.f32.xlu0 %v477
    %v482 = vpop.xlane.xlu0 %481
    %483 = vadd.xlane.f32.xlu0 %v479
    %v484 = vpop.xlane.xlu0 %483
    %v485 = vmul.f32 %v482, 0.015625
    %v486 = vmul.f32 %v484, 0.015625
    %v487 = vmul.f32 %v477, %v477
    %v488 = vmul.f32 %v479, %v479
    %489 = vadd.xlane.f32.xlu0 %v487
    %v490 = vpop.xlane.xlu0 %489
    %491 = vadd.xlane.f32.xlu0 %v488
    %v492 = vpop.xlane.xlu0 %491
    %v493 = vmul.f32 %v490, 0.015625
    %v494 = vmul.f32 %v492, 0.015625
    %v495 = vmul.f32 %v485, %v485
    %v496 = vmul.f32 %v486, %v486
    %v497 = vsub.f32 %v493, %v495
    %v498 = vsub.f32 %v494, %v496
    %v499 = vmax.f32 %v497, 0.0
    %v500 = vmax.f32 %v498, 0.0
    %v501 = vsub.f32 %v477, %v485
    %v502 = vsub.f32 %v479, %v486
    %v503 = vadd.f32 %v499, 1e-05
    %v504 = vadd.f32 %v500, 1e-05
    %v505 = vrsqrt.pop %v503
    %v506 = vmul.f32 %v505, %v503
    %v507 = vmul.f32 %v506, %v505
    %v508 = vmul.f32 0.5, %v507
    %v509 = vsub.f32 1.5, %v508
    %v510 = vmul.f32 %v505, %v509
    %vm511 = vweird.f32 %v503
    %vm512 = vweird.f32 %v505
    %vm513 = vmor %vm511, %vm512
    %v514 = vsel %vm513, %v505, %v510
    %v515 = vrsqrt.pop %v504
    %v516 = vmul.f32 %v515, %v504
    %v517 = vmul.f32 %v516, %v515
    %v518 = vmul.f32 0.5, %v517
    %v519 = vsub.f32 1.5, %v518
    %v520 = vmul.f32 %v515, %v519
    %vm521 = vweird.f32 %v504
    %vm522 = vweird.f32 %v515
    %vm523 = vmor %vm521, %vm522
    %v524 = vsel %vm523, %v515, %v520
    %v525 = vmul.f32 %v501, %v514
    %v526 = vmul.f32 %v502, %v524
    %v527 = vperm.slane %v127, 7
    %v528 = vmul.f32 %v525, %v527
    %v529 = vmul.f32 %v526, %v527
    %v530 = vperm.slane %v128, 0
    %v531 = vadd.f32 %v528, %v530
    %v532 = vadd.f32 %v529, %v530
    %vm533 = vcmp.gt.f32.partialorder %v531, 0.0
    %vm534 = vcmp.gt.f32.partialorder %v532, 0.0
    %v535 = vmul.f32 %v531, 0.01
    %v536 = vmul.f32 %v532, 0.01
    %v537 = vsel %vm533, %v531, %v535
    %v538 = vsel %vm534, %v532, %v536
    %s539 = sshll.u32 %s258, 4
    %540 = dma.done %s95, %s539
    %v541 = vld [vmem:[#allocation4] sm:$0xf]
    %v542 = vld [vmem:[#allocation4 + $0x4] sm:$0xf]
    %v543 = vld [vmem:[#allocation4 + $0x8] sm:$0xf]
    %v544 = vld [vmem:[#allocation4 + $0xc] sm:$0xf]
    %v545 = vld [vmem:[#allocation4 + $0x10] sm:$0xf]
    %v546 = vld [vmem:[#allocation4 + $0x14] sm:$0xf]
    %v547 = vld [vmem:[#allocation4 + $0x18] sm:$0xf]
    %v548 = vld [vmem:[#allocation4 + $0x1c] sm:$0xf]
    %v549 = vld [vmem:[#allocation4 + $0x20] sm:$0xf]
    %v550 = vld [vmem:[#allocation4 + $0x24] sm:$0xf]
    %v551 = vld [vmem:[#allocation4 + $0x28] sm:$0xf]
    %v552 = vld [vmem:[#allocation4 + $0x2c] sm:$0xf]
    %v553 = vld [vmem:[#allocation4 + $0x30] sm:$0xf]
    %v554 = vld [vmem:[#allocation4 + $0x34] sm:$0xf]
    %v555 = vld [vmem:[#allocation4 + $0x38] sm:$0xf]
    %v556 = vld [vmem:[#allocation4 + $0x3c] sm:$0xf]
    %v557 = vpack.c.bf16 %v538, %v537
    %v559 = vperm.slane %v129, 0
    %v577 = vunpack.c.l.b16 %v541
    %v578 = vunpack.c.l.b16 %v542
    %v579 = vunpack.c.l.b16 %v543
    %v580 = vunpack.c.l.b16 %v544
    %v581 = vunpack.c.l.b16 %v545
    %v582 = vunpack.c.l.b16 %v546
    %v583 = vunpack.c.l.b16 %v547
    %v584 = vunpack.c.l.b16 %v548
    %v585 = vunpack.c.l.b16 %v549
    %v586 = vunpack.c.l.b16 %v550
    %v587 = vunpack.c.l.b16 %v551
    %v588 = vunpack.c.l.b16 %v552
    %v589 = vunpack.c.l.b16 %v553
    %v590 = vunpack.c.l.b16 %v554
    %v591 = vunpack.c.l.b16 %v555
    %v592 = vunpack.c.l.b16 %v556
    %v593 = vpack.c.b16 %v578, %v577
    %v594 = vpack.c.b16 %v580, %v579
    %v595 = vpack.c.b16 %v582, %v581
    %v596 = vpack.c.b16 %v584, %v583
    %v597 = vpack.c.b16 %v586, %v585
    %v598 = vpack.c.b16 %v588, %v587
    %v599 = vpack.c.b16 %v590, %v589
    %v600 = vpack.c.b16 %v592, %v591
    %609 = vmatpush.bf16.msra.mxu0 %v600
    %610 = vmatpush.bf16.msra.mxu0 %v599
    %611 = vmatpush.bf16.msra.mxu0 %v598
    %612 = vmatpush.bf16.msra.mxu0 %v597
    %613 = vmatpush.bf16.msra.mxu0 %v596
    %614 = vmatpush.bf16.msra.mxu0 %v595
    %615 = vmatpush.bf16.msra.mxu0 %v594
    %616 = vmatpush.bf16.msra.mxu0 %v593
    %617 = vmatmul.bf16.gmra.mxu0 %v557
    %v618 = vpop.f32.mrf.mxu0
    %v619 = vadd.f32 %v559, %v618
    %v620 = vpop.f32.mrf.mxu0
    %v621 = vadd.f32 %v559, %v620
    %622 = vdwg.mxu0
    %623 = vst [vmem:[#allocation12] sm:$0xff] %v619
    %624 = vst [vmem:[#allocation12 + $0x8] sm:$0xff] %v621
    // Predicated region
    $region42: #{tpu_custom_call.1} parent=1 // pred_check
      _
    $region43: #{tpu_custom_call.1} parent=1 // pred_check_branch
      %626 = sbr.rel (0) target = $region45
    $region44: #{tpu_custom_call.1} parent=1 // pred_region
      %628 = vsyncadd [#allocation8], 0
      %s629 = sshll.u32 [#allocation12], 4
      %s630 = int_to_ptr.vmem [resolvable:$true] %s629
      %s631 = sshll.u32 %s7, 4
      %s632 = int_to_ptr.hbm [resolvable:$true] %s631
      %637 = dma.vmem_to_hbm [thread:$0]  %s630, 256, %s632, [#allocation8], 128, 128, 8
    $region45: #{tpu_custom_call.1} parent=1 // pred_fallthru
      _
    // Predicated region
    $region46: #{tpu_custom_call.1} parent=1 // pred_check
      _
    $region47: #{tpu_custom_call.1} parent=1 // pred_check_branch
      %639 = sbr.rel (0) target = $region49
    $region48: #{tpu_custom_call.1} parent=1 // pred_region
      %641 = dma.done [#allocation8], 256
    $region49: #{tpu_custom_call.1} parent=1 // pred_fallthru
      _
    %642 = vsyncpa [#allocation7], 1
    %643 = vsyncpa [#allocation10], 1
    %644 = vsyncpa [#allocation8], 1
  %645 = vsyncmov [#allocation5]
  %s646 = vpop.sfrf %645
  %p647 = scmp.eq.s32.totalorder %s646, 0
  %p648 = pneg %p647
  %650 = shalt.err (%p648)
  %s651 = scalar_lea.sflag [#allocation5], 1
  %652 = vsyncmov %s651
  %s653 = vpop.sfrf %652
  %p654 = scmp.eq.s32.totalorder %s653, 0
  %p655 = pneg %p654
  %657 = shalt.err (%p655)
  %s658 = scalar_lea.sflag [#allocation5], 2
  %659 = vsyncmov %s658
  %s660 = vpop.sfrf %659
  %p661 = scmp.eq.s32.totalorder %s660, 0
  %p662 = pneg %p661
  %664 = shalt.err (%p662)

// kernel: tpu_custom_call.1
$region0: #{tpu_custom_call.1}
  #allocation0 [shape = 'u32[]', space=smem, size = 0x4, offset = 0x4, fixed_abs, tag = 'smem constant byte address 0x4 - core index']
  #allocation1 [shape = 'u32[72,128]{1,0:T(1,128)}', space=vmem, size = 0x9000, scoped, tag = 'internal scratch']
  %s0 = inlined_call_operand.hbm [shape: bf16[16,128], index: 0, kind: input, shape index: {}]
  %s1 = inlined_call_operand.hbm [shape: bf16[128,128], index: 1, kind: input, shape index: {}]
  %s2 = inlined_call_operand.hbm [shape: bf16[128,128], index: 2, kind: input, shape index: {}]
  %s3 = inlined_call_operand.hbm [shape: bf16[128,128], index: 3, kind: input, shape index: {}]
  %s4 = inlined_call_operand.hbm [shape: bf16[128,128], index: 4, kind: input, shape index: {}]
  %s5 = inlined_call_operand.hbm [shape: f32[16,128], index: 5, kind: input, shape index: {}]
  %s6 = inlined_call_operand.vmem [shape: f32[1,128], index: 6, kind: input, shape index: {}]
  %s7 = inlined_call_operand.hbm [shape: f32[16,128], index: 7, kind: output, shape index: {}]
  %s8 = sld [smem:[#allocation0]]
  $region62: #{tpu_custom_call.1} parent=0
    _
  %s10 = ssub.s32 1, %s8
  %s11 = scalar_select 0, %s10, %s8
  $region1: #{tpu_custom_call.1} parent=0
    #allocation2 [shape = 'u8[4096]{0}', space=vmem, size = 0x1000, scoped, tag = 'input window, operand 0, single buffered']
    #allocation3 [shape = 's32[1]{0}', space=sflag, size = 0x4, scoped, tag = 'scoped memory for tpu_custom_call.1']
    #allocation4 [shape = 's32[1]{0}', space=sflag, size = 0x4, scoped, tag = 'scoped memory for tpu_custom_call.1']
    #allocation5 [shape = 'u8[32768]{0}', space=vmem, size = 0x8000, scoped, tag = 'input window, operand 1, single buffered']
    #allocation6 [shape = 's32[1]{0}', space=sflag, size = 0x4, scoped, tag = 'scoped memory for tpu_custom_call.1']
    #allocation7 [shape = 'u8[32768]{0}', space=vmem, size = 0x8000, scoped, tag = 'input window, operand 2, single buffered']
    #allocation8 [shape = 'u8[32768]{0}', space=vmem, size = 0x8000, scoped, tag = 'input window, operand 3, single buffered']
    #allocation9 [shape = 's32[1]{0}', space=sflag, size = 0x4, scoped, tag = 'scoped memory for tpu_custom_call.1']
    #allocation10 [shape = 'u8[32768]{0}', space=vmem, size = 0x8000, scoped, tag = 'input window, operand 4, single buffered']
    #allocation11 [shape = 'u8[8192]{0}', space=vmem, size = 0x2000, scoped, tag = 'input window, operand 5, single buffered']
    #allocation12 [shape = 's32[1]{0}', space=sflag, size = 0x4, scoped, tag = 'scoped memory for tpu_custom_call.1']
    #allocation13 [shape = 'u8[8192]{0}', space=vmem, size = 0x2000, scoped, tag = 'output window, operand 0, single buffered']
    %12 = vsyncpa [#allocation3], 0
    %13 = vsyncpa [#allocation6], 0
    %14 = vsyncpa [#allocation9], 0
    %15 = vsyncpa [#allocation12], 0
    %16 = vsyncpa [#allocation4], 0
    // Predicated region
    $region2: #{tpu_custom_call.1} parent=1 // pred_check
      _
    $region3: #{tpu_custom_call.1} parent=1 // pred_check_branch
      %18 = sbr.rel (0) target = $region5
    $region4: #{tpu_custom_call.1} parent=1 // pred_region
      %20 = vsyncadd [#allocation3], 0
      %s21 = sshll.u32 %s0, 4
      %s22 = int_to_ptr.hbm [resolvable:$true] %s21
      %s23 = sshll.u32 [#allocation2], 4
      %s24 = int_to_ptr.vmem [resolvable:$true] %s23
      %29 = dma.hbm_to_vmem [thread:$0]  %s22, 128, %s24, [#allocation3], 64, 64, 4
    $region5: #{tpu_custom_call.1} parent=1 // pred_fallthru
      _
    // Predicated region
    $region6: #{tpu_custom_call.1} parent=1 // pred_check
      _
    $region7: #{tpu_custom_call.1} parent=1 // pred_check_branch
      %31 = sbr.rel (0) target = $region9
    $region8: #{tpu_custom_call.1} parent=1 // pred_region
      %33 = vsyncadd [#allocation6], 0
      %s34 = sshll.u32 %s1, 4
      %s35 = int_to_ptr.hbm [resolvable:$true] %s34
      %s36 = sshll.u32 [#allocation5], 4
      %s37 = int_to_ptr.vmem [resolvable:$true] %s36
      %42 = dma.hbm_to_vmem [thread:$0]  %s35, 1024, %s37, [#allocation6], 64, 64, 4
    $region9: #{tpu_custom_call.1} parent=1 // pred_fallthru
      _
    // Predicated region
    $region10: #{tpu_custom_call.1} parent=1 // pred_check
      _
    $region11: #{tpu_custom_call.1} parent=1 // pred_check_branch
      %44 = sbr.rel (0) target = $region13
    $region12: #{tpu_custom_call.1} parent=1 // pred_region
      %46 = vsyncadd [#allocation6], 0
      %s47 = sshll.u32 %s2, 4
      %s48 = int_to_ptr.hbm [resolvable:$true] %s47
      %s49 = sshll.u32 [#allocation7], 4
      %s50 = int_to_ptr.vmem [resolvable:$true] %s49
      %55 = dma.hbm_to_vmem [thread:$0]  %s48, 1024, %s50, [#allocation6], 64, 64, 4
    $region13: #{tpu_custom_call.1} parent=1 // pred_fallthru
      _
    // Predicated region
    $region14: #{tpu_custom_call.1} parent=1 // pred_check
      _
    $region15: #{tpu_custom_call.1} parent=1 // pred_check_branch
      %57 = sbr.rel (0) target = $region17
    $region16: #{tpu_custom_call.1} parent=1 // pred_region
      %59 = vsyncadd [#allocation9], 0
      %s60 = sshll.u32 %s3, 4
      %s61 = int_to_ptr.hbm [resolvable:$true] %s60
      %s62 = sshll.u32 [#allocation8], 4
      %s63 = int_to_ptr.vmem [resolvable:$true] %s62
      %68 = dma.hbm_to_vmem [thread:$0]  %s61, 1024, %s63, [#allocation9], 64, 64, 4
    $region17: #{tpu_custom_call.1} parent=1 // pred_fallthru
      _
    // Predicated region
    $region18: #{tpu_custom_call.1} parent=1 // pred_check
      _
    $region19: #{tpu_custom_call.1} parent=1 // pred_check_branch
      %70 = sbr.rel (0) target = $region21
    $region20: #{tpu_custom_call.1} parent=1 // pred_region
      %72 = vsyncadd [#allocation9], 0
      %s73 = sshll.u32 %s4, 4
      %s74 = int_to_ptr.hbm [resolvable:$true] %s73
      %s75 = sshll.u32 [#allocation10], 4
      %s76 = int_to_ptr.vmem [resolvable:$true] %s75
      %81 = dma.hbm_to_vmem [thread:$0]  %s74, 1024, %s76, [#allocation9], 64, 64, 4
    $region21: #{tpu_custom_call.1} parent=1 // pred_fallthru
      _
    // Predicated region
    $region22: #{tpu_custom_call.1} parent=1 // pred_check
      _
    $region23: #{tpu_custom_call.1} parent=1 // pred_check_branch
      %83 = sbr.rel (0) target = $region25
    $region24: #{tpu_custom_call.1} parent=1 // pred_region
      %85 = vsyncadd [#allocation12], 0
      %s86 = sshll.u32 %s5, 4
      %s87 = int_to_ptr.hbm [resolvable:$true] %s86
      %s88 = sshll.u32 [#allocation11], 4
      %s89 = int_to_ptr.vmem [resolvable:$true] %s88
      %94 = dma.hbm_to_vmem [thread:$0]  %s87, 256, %s89, [#allocation12], 128, 128, 8
    $region25: #{tpu_custom_call.1} parent=1 // pred_fallthru
      _
    // Predicated region
    $region26: #{tpu_custom_call.1} parent=1 // pred_check
      _
    $region27: #{tpu_custom_call.1} parent=1 // pred_check_branch
      %96 = sbr.rel (0) target = $region29
    $region28: #{tpu_custom_call.1} parent=1 // pred_region
      _
    $region29: #{tpu_custom_call.1} parent=1 // pred_fallthru
      _
    // Predicated region
    $region30: #{tpu_custom_call.1} parent=1 // pred_check
      _
    $region31: #{tpu_custom_call.1} parent=1 // pred_check_branch
      %98 = sbr.rel (0) target = $region33
    $region32: #{tpu_custom_call.1} parent=1 // pred_region
      %100 = dma.done [#allocation3], 128
    $region33: #{tpu_custom_call.1} parent=1 // pred_fallthru
      _
    // Predicated region
    $region34: #{tpu_custom_call.1} parent=1 // pred_check
      _
    $region35: #{tpu_custom_call.1} parent=1 // pred_check_branch
      %102 = sbr.rel (0) target = $region37
    $region36: #{tpu_custom_call.1} parent=1 // pred_region
      %104 = dma.done [#allocation6], 1024
    $region37: #{tpu_custom_call.1} parent=1 // pred_fallthru
      _
    // Predicated region
    $region38: #{tpu_custom_call.1} parent=1 // pred_check
      _
    $region39: #{tpu_custom_call.1} parent=1 // pred_check_branch
      %106 = sbr.rel (0) target = $region41
    $region40: #{tpu_custom_call.1} parent=1 // pred_region
      %108 = dma.done [#allocation6], 1024
    $region41: #{tpu_custom_call.1} parent=1 // pred_fallthru
      _
    // Predicated region
    $region42: #{tpu_custom_call.1} parent=1 // pred_check
      _
    $region43: #{tpu_custom_call.1} parent=1 // pred_check_branch
      %110 = sbr.rel (0) target = $region45
    $region44: #{tpu_custom_call.1} parent=1 // pred_region
      %112 = dma.done [#allocation9], 1024
    $region45: #{tpu_custom_call.1} parent=1 // pred_fallthru
      _
    // Predicated region
    $region46: #{tpu_custom_call.1} parent=1 // pred_check
      _
    $region47: #{tpu_custom_call.1} parent=1 // pred_check_branch
      %114 = sbr.rel (0) target = $region49
    $region48: #{tpu_custom_call.1} parent=1 // pred_region
      %116 = dma.done [#allocation9], 1024
    $region49: #{tpu_custom_call.1} parent=1 // pred_fallthru
      _
    // Predicated region
    $region50: #{tpu_custom_call.1} parent=1 // pred_check
      _
    $region51: #{tpu_custom_call.1} parent=1 // pred_check_branch
      %118 = sbr.rel (0) target = $region53
    $region52: #{tpu_custom_call.1} parent=1 // pred_region
      %120 = dma.done [#allocation12], 256
    $region53: #{tpu_custom_call.1} parent=1 // pred_fallthru
      _
    %v121 = vld [vmem:[#allocation2] sm:$0xf]
    %v122 = vld [vmem:[#allocation2 + $0x4] sm:$0xf]
    %v123 = vld [vmem:[#allocation5] sm:$0xf]
    %v124 = vld [vmem:[#allocation5 + $0x4] sm:$0xf]
    %v125 = vld [vmem:[#allocation5 + $0x8] sm:$0xf]
    %v126 = vld [vmem:[#allocation5 + $0xc] sm:$0xf]
    %v127 = vld [vmem:[#allocation5 + $0x10] sm:$0xf]
    %v128 = vld [vmem:[#allocation5 + $0x14] sm:$0xf]
    %v129 = vld [vmem:[#allocation5 + $0x18] sm:$0xf]
    %v130 = vld [vmem:[#allocation5 + $0x1c] sm:$0xf]
    %v131 = vld [vmem:[#allocation5 + $0x20] sm:$0xf]
    %v132 = vld [vmem:[#allocation5 + $0x24] sm:$0xf]
    %v133 = vld [vmem:[#allocation5 + $0x28] sm:$0xf]
    %v134 = vld [vmem:[#allocation5 + $0x2c] sm:$0xf]
    %v135 = vld [vmem:[#allocation5 + $0x30] sm:$0xf]
    %v136 = vld [vmem:[#allocation5 + $0x34] sm:$0xf]
    %v137 = vld [vmem:[#allocation5 + $0x38] sm:$0xf]
    %v138 = vld [vmem:[#allocation5 + $0x3c] sm:$0xf]
    %v139 = vld [vmem:[#allocation11] sm:$0xff]
    %v140 = vld [vmem:[#allocation11 + $0x8] sm:$0xff]
    %v141 = vld [vmem:[%s6] sm:$0x1]
    %v142 = vperm.slane %v139, 0
    %v145 = vunpack.c.l.b16 %v121
    %v146 = vunpack.c.l.b16 %v122
    %v147 = vpack.c.b16 %v146, %v145
    %v165 = vunpack.c.l.b16 %v123
    %v166 = vunpack.c.l.b16 %v124
    %v167 = vunpack.c.l.b16 %v125
    %v168 = vunpack.c.l.b16 %v126
    %v169 = vunpack.c.l.b16 %v127
    %v170 = vunpack.c.l.b16 %v128
    %v171 = vunpack.c.l.b16 %v129
    %v172 = vunpack.c.l.b16 %v130
    %v173 = vunpack.c.l.b16 %v131
    %v174 = vunpack.c.l.b16 %v132
    %v175 = vunpack.c.l.b16 %v133
    %v176 = vunpack.c.l.b16 %v134
    %v177 = vunpack.c.l.b16 %v135
    %v178 = vunpack.c.l.b16 %v136
    %v179 = vunpack.c.l.b16 %v137
    %v180 = vunpack.c.l.b16 %v138
    %v181 = vpack.c.b16 %v166, %v165
    %v182 = vpack.c.b16 %v168, %v167
    %v183 = vpack.c.b16 %v170, %v169
    %v184 = vpack.c.b16 %v172, %v171
    %v185 = vpack.c.b16 %v174, %v173
    %v186 = vpack.c.b16 %v176, %v175
    %v187 = vpack.c.b16 %v178, %v177
    %v188 = vpack.c.b16 %v180, %v179
    %197 = vmatpush.bf16.msra.mxu0 %v188
    %198 = vmatpush.bf16.msra.mxu0 %v187
    %199 = vmatpush.bf16.msra.mxu0 %v186
    %200 = vmatpush.bf16.msra.mxu0 %v185
    %201 = vmatpush.bf16.msra.mxu0 %v184
    %202 = vmatpush.bf16.msra.mxu0 %v183
    %203 = vmatpush.bf16.msra.mxu0 %v182
    %204 = vmatpush.bf16.msra.mxu0 %v181
    %205 = vmatmul.bf16.gmra.mxu0 %v147
    %v206 = vpop.f32.mrf.mxu0
    %v207 = vadd.f32 %v142, %v206
    %v208 = vpop.f32.mrf.mxu0
    %v209 = vadd.f32 %v142, %v208
    %210 = vdwg.mxu0
    %211 = vadd.xlane.f32.xlu0 %v207
    %v212 = vpop.xlane.xlu0 %211
    %213 = vadd.xlane.f32.xlu0 %v209
    %v214 = vpop.xlane.xlu0 %213
    %v215 = vmul.f32 %v212, 0.015625
    %v216 = vmul.f32 %v214, 0.015625
    %v217 = vmul.f32 %v207, %v207
    %v218 = vmul.f32 %v209, %v209
    %219 = vadd.xlane.f32.xlu0 %v217
    %v220 = vpop.xlane.xlu0 %219
    %221 = vadd.xlane.f32.xlu0 %v218
    %v222 = vpop.xlane.xlu0 %221
    %v223 = vmul.f32 %v220, 0.015625
    %v224 = vmul.f32 %v222, 0.015625
    %v225 = vmul.f32 %v215, %v215
    %v226 = vmul.f32 %v216, %v216
    %v227 = vsub.f32 %v223, %v225
    %v228 = vsub.f32 %v224, %v226
    %v229 = vmax.f32 %v227, 0.0
    %v230 = vmax.f32 %v228, 0.0
    %v231 = vsub.f32 %v207, %v215
    %v232 = vsub.f32 %v209, %v216
    %v233 = vadd.f32 %v229, 1e-05
    %v234 = vadd.f32 %v230, 1e-05
    %v235 = vrsqrt.pop %v233
    %v236 = vmul.f32 %v235, %v233
    %v237 = vmul.f32 %v236, %v235
    %v238 = vmul.f32 0.5, %v237
    %v239 = vsub.f32 1.5, %v238
    %v240 = vmul.f32 %v235, %v239
    %vm241 = vweird.f32 %v233
    %vm242 = vweird.f32 %v235
    %vm243 = vmor %vm241, %vm242
    %v244 = vsel %vm243, %v235, %v240
    %v245 = vrsqrt.pop %v234
    %v246 = vmul.f32 %v245, %v234
    %v247 = vmul.f32 %v246, %v245
    %v248 = vmul.f32 0.5, %v247
    %v249 = vsub.f32 1.5, %v248
    %v250 = vmul.f32 %v245, %v249
    %vm251 = vweird.f32 %v234
    %vm252 = vweird.f32 %v245
    %vm253 = vmor %vm251, %vm252
    %v254 = vsel %vm253, %v245, %v250
    %v255 = vmul.f32 %v231, %v244
    %v256 = vmul.f32 %v232, %v254
    %v257 = vperm.slane %v139, 1
    %v258 = vmul.f32 %v255, %v257
    %v259 = vmul.f32 %v256, %v257
    %v260 = vperm.slane %v139, 2
    %v261 = vadd.f32 %v258, %v260
    %v262 = vadd.f32 %v259, %v260
    %vm263 = vcmp.gt.f32.partialorder %v261, 0.0
    %vm264 = vcmp.gt.f32.partialorder %v262, 0.0
    %v265 = vmul.f32 %v261, 0.01
    %v266 = vmul.f32 %v262, 0.01
    %v267 = vsel %vm263, %v261, %v265
    %v268 = vsel %vm264, %v262, %v266
    %v269 = vld [vmem:[#allocation7] sm:$0xf]
    %v270 = vld [vmem:[#allocation7 + $0x4] sm:$0xf]
    %v271 = vld [vmem:[#allocation7 + $0x8] sm:$0xf]
    %v272 = vld [vmem:[#allocation7 + $0xc] sm:$0xf]
    %v273 = vld [vmem:[#allocation7 + $0x10] sm:$0xf]
    %v274 = vld [vmem:[#allocation7 + $0x14] sm:$0xf]
    %v275 = vld [vmem:[#allocation7 + $0x18] sm:$0xf]
    %v276 = vld [vmem:[#allocation7 + $0x1c] sm:$0xf]
    %v277 = vld [vmem:[#allocation7 + $0x20] sm:$0xf]
    %v278 = vld [vmem:[#allocation7 + $0x24] sm:$0xf]
    %v279 = vld [vmem:[#allocation7 + $0x28] sm:$0xf]
    %v280 = vld [vmem:[#allocation7 + $0x2c] sm:$0xf]
    %v281 = vld [vmem:[#allocation7 + $0x30] sm:$0xf]
    %v282 = vld [vmem:[#allocation7 + $0x34] sm:$0xf]
    %v283 = vld [vmem:[#allocation7 + $0x38] sm:$0xf]
    %v284 = vld [vmem:[#allocation7 + $0x3c] sm:$0xf]
    %v285 = vpack.c.bf16 %v268, %v267
    %v286 = vperm.slane %v139, 3
    %v303 = vunpack.c.l.b16 %v269
    %v304 = vunpack.c.l.b16 %v270
    %v305 = vunpack.c.l.b16 %v271
    %v306 = vunpack.c.l.b16 %v272
    %v307 = vunpack.c.l.b16 %v273
    %v308 = vunpack.c.l.b16 %v274
    %v309 = vunpack.c.l.b16 %v275
    %v310 = vunpack.c.l.b16 %v276
    %v311 = vunpack.c.l.b16 %v277
    %v312 = vunpack.c.l.b16 %v278
    %v313 = vunpack.c.l.b16 %v279
    %v314 = vunpack.c.l.b16 %v280
    %v315 = vunpack.c.l.b16 %v281
    %v316 = vunpack.c.l.b16 %v282
    %v317 = vunpack.c.l.b16 %v283
    %v318 = vunpack.c.l.b16 %v284
    %v319 = vpack.c.b16 %v304, %v303
    %v320 = vpack.c.b16 %v306, %v305
    %v321 = vpack.c.b16 %v308, %v307
    %v322 = vpack.c.b16 %v310, %v309
    %v323 = vpack.c.b16 %v312, %v311
    %v324 = vpack.c.b16 %v314, %v313
    %v325 = vpack.c.b16 %v316, %v315
    %v326 = vpack.c.b16 %v318, %v317
    %335 = vmatpush.bf16.msra.mxu0 %v326
    %336 = vmatpush.bf16.msra.mxu0 %v325
    %337 = vmatpush.bf16.msra.mxu0 %v324
    %338 = vmatpush.bf16.msra.mxu0 %v323
    %339 = vmatpush.bf16.msra.mxu0 %v322
    %340 = vmatpush.bf16.msra.mxu0 %v321
    %341 = vmatpush.bf16.msra.mxu0 %v320
    %342 = vmatpush.bf16.msra.mxu0 %v319
    %343 = vmatmul.bf16.gmra.mxu0 %v285
    %v344 = vpop.f32.mrf.mxu0
    %v345 = vadd.f32 %v286, %v344
    %v346 = vpop.f32.mrf.mxu0
    %v347 = vadd.f32 %v286, %v346
    %348 = vdwg.mxu0
    %349 = vadd.xlane.f32.xlu0 %v345
    %v350 = vpop.xlane.xlu0 %349
    %351 = vadd.xlane.f32.xlu0 %v347
    %v352 = vpop.xlane.xlu0 %351
    %v353 = vmul.f32 %v350, 0.015625
    %v354 = vmul.f32 %v352, 0.015625
    %v355 = vmul.f32 %v345, %v345
    %v356 = vmul.f32 %v347, %v347
    %357 = vadd.xlane.f32.xlu0 %v355
    %v358 = vpop.xlane.xlu0 %357
    %359 = vadd.xlane.f32.xlu0 %v356
    %v360 = vpop.xlane.xlu0 %359
    %v361 = vmul.f32 %v358, 0.015625
    %v362 = vmul.f32 %v360, 0.015625
    %v363 = vmul.f32 %v353, %v353
    %v364 = vmul.f32 %v354, %v354
    %v365 = vsub.f32 %v361, %v363
    %v366 = vsub.f32 %v362, %v364
    %v367 = vmax.f32 %v365, 0.0
    %v368 = vmax.f32 %v366, 0.0
    %v369 = vsub.f32 %v345, %v353
    %v370 = vsub.f32 %v347, %v354
    %v371 = vadd.f32 %v367, 1e-05
    %v372 = vadd.f32 %v368, 1e-05
    %v373 = vrsqrt.pop %v371
    %v374 = vmul.f32 %v373, %v371
    %v375 = vmul.f32 %v374, %v373
    %v376 = vmul.f32 0.5, %v375
    %v377 = vsub.f32 1.5, %v376
    %v378 = vmul.f32 %v373, %v377
    %vm379 = vweird.f32 %v371
    %vm380 = vweird.f32 %v373
    %vm381 = vmor %vm379, %vm380
    %v382 = vsel %vm381, %v373, %v378
    %v383 = vrsqrt.pop %v372
    %v384 = vmul.f32 %v383, %v372
    %v385 = vmul.f32 %v384, %v383
    %v386 = vmul.f32 0.5, %v385
    %v387 = vsub.f32 1.5, %v386
    %v388 = vmul.f32 %v383, %v387
    %vm389 = vweird.f32 %v372
    %vm390 = vweird.f32 %v383
    %vm391 = vmor %vm389, %vm390
    %v392 = vsel %vm391, %v383, %v388
    %v393 = vmul.f32 %v369, %v382
    %v394 = vmul.f32 %v370, %v392
    %v395 = vperm.slane %v139, 4
    %v396 = vmul.f32 %v393, %v395
    %v397 = vmul.f32 %v394, %v395
    %v398 = vperm.slane %v139, 5
    %v399 = vadd.f32 %v396, %v398
    %v400 = vadd.f32 %v397, %v398
    %vm401 = vcmp.gt.f32.partialorder %v399, 0.0
    %vm402 = vcmp.gt.f32.partialorder %v400, 0.0
    %v403 = vmul.f32 %v399, 0.01
    %v404 = vmul.f32 %v400, 0.01
    %v405 = vsel %vm401, %v399, %v403
    %v406 = vsel %vm402, %v400, %v404
    %v407 = vld [vmem:[#allocation8] sm:$0xf]
    %v408 = vld [vmem:[#allocation8 + $0x4] sm:$0xf]
    %v409 = vld [vmem:[#allocation8 + $0x8] sm:$0xf]
    %v410 = vld [vmem:[#allocation8 + $0xc] sm:$0xf]
    %v411 = vld [vmem:[#allocation8 + $0x10] sm:$0xf]
    %v412 = vld [vmem:[#allocation8 + $0x14] sm:$0xf]
    %v413 = vld [vmem:[#allocation8 + $0x18] sm:$0xf]
    %v414 = vld [vmem:[#allocation8 + $0x1c] sm:$0xf]
    %v415 = vld [vmem:[#allocation8 + $0x20] sm:$0xf]
    %v416 = vld [vmem:[#allocation8 + $0x24] sm:$0xf]
    %v417 = vld [vmem:[#allocation8 + $0x28] sm:$0xf]
    %v418 = vld [vmem:[#allocation8 + $0x2c] sm:$0xf]
    %v419 = vld [vmem:[#allocation8 + $0x30] sm:$0xf]
    %v420 = vld [vmem:[#allocation8 + $0x34] sm:$0xf]
    %v421 = vld [vmem:[#allocation8 + $0x38] sm:$0xf]
    %v422 = vld [vmem:[#allocation8 + $0x3c] sm:$0xf]
    %v423 = vpack.c.bf16 %v406, %v405
    %v424 = vperm.slane %v139, 6
    %v441 = vunpack.c.l.b16 %v407
    %v442 = vunpack.c.l.b16 %v408
    %v443 = vunpack.c.l.b16 %v409
    %v444 = vunpack.c.l.b16 %v410
    %v445 = vunpack.c.l.b16 %v411
    %v446 = vunpack.c.l.b16 %v412
    %v447 = vunpack.c.l.b16 %v413
    %v448 = vunpack.c.l.b16 %v414
    %v449 = vunpack.c.l.b16 %v415
    %v450 = vunpack.c.l.b16 %v416
    %v451 = vunpack.c.l.b16 %v417
    %v452 = vunpack.c.l.b16 %v418
    %v453 = vunpack.c.l.b16 %v419
    %v454 = vunpack.c.l.b16 %v420
    %v455 = vunpack.c.l.b16 %v421
    %v456 = vunpack.c.l.b16 %v422
    %v457 = vpack.c.b16 %v442, %v441
    %v458 = vpack.c.b16 %v444, %v443
    %v459 = vpack.c.b16 %v446, %v445
    %v460 = vpack.c.b16 %v448, %v447
    %v461 = vpack.c.b16 %v450, %v449
    %v462 = vpack.c.b16 %v452, %v451
    %v463 = vpack.c.b16 %v454, %v453
    %v464 = vpack.c.b16 %v456, %v455
    %473 = vmatpush.bf16.msra.mxu0 %v464
    %474 = vmatpush.bf16.msra.mxu0 %v463
    %475 = vmatpush.bf16.msra.mxu0 %v462
    %476 = vmatpush.bf16.msra.mxu0 %v461
    %477 = vmatpush.bf16.msra.mxu0 %v460
    %478 = vmatpush.bf16.msra.mxu0 %v459
    %479 = vmatpush.bf16.msra.mxu0 %v458
    %480 = vmatpush.bf16.msra.mxu0 %v457
    %481 = vmatmul.bf16.gmra.mxu0 %v423
    %v482 = vpop.f32.mrf.mxu0
    %v483 = vadd.f32 %v424, %v482
    %v484 = vpop.f32.mrf.mxu0
    %v485 = vadd.f32 %v424, %v484
    %486 = vdwg.mxu0
    %487 = vadd.xlane.f32.xlu0 %v483
    %v488 = vpop.xlane.xlu0 %487
    %489 = vadd.xlane.f32.xlu0 %v485
    %v490 = vpop.xlane.xlu0 %489
    %v491 = vmul.f32 %v488, 0.015625
    %v492 = vmul.f32 %v490, 0.015625
    %v493 = vmul.f32 %v483, %v483
    %v494 = vmul.f32 %v485, %v485
    %495 = vadd.xlane.f32.xlu0 %v493
    %v496 = vpop.xlane.xlu0 %495
    %497 = vadd.xlane.f32.xlu0 %v494
    %v498 = vpop.xlane.xlu0 %497
    %v499 = vmul.f32 %v496, 0.015625
    %v500 = vmul.f32 %v498, 0.015625
    %v501 = vmul.f32 %v491, %v491
    %v502 = vmul.f32 %v492, %v492
    %v503 = vsub.f32 %v499, %v501
    %v504 = vsub.f32 %v500, %v502
    %v505 = vmax.f32 %v503, 0.0
    %v506 = vmax.f32 %v504, 0.0
    %v507 = vsub.f32 %v483, %v491
    %v508 = vsub.f32 %v485, %v492
    %v509 = vadd.f32 %v505, 1e-05
    %v510 = vadd.f32 %v506, 1e-05
    %v511 = vrsqrt.pop %v509
    %v512 = vmul.f32 %v511, %v509
    %v513 = vmul.f32 %v512, %v511
    %v514 = vmul.f32 0.5, %v513
    %v515 = vsub.f32 1.5, %v514
    %v516 = vmul.f32 %v511, %v515
    %vm517 = vweird.f32 %v509
    %vm518 = vweird.f32 %v511
    %vm519 = vmor %vm517, %vm518
    %v520 = vsel %vm519, %v511, %v516
    %v521 = vrsqrt.pop %v510
    %v522 = vmul.f32 %v521, %v510
    %v523 = vmul.f32 %v522, %v521
    %v524 = vmul.f32 0.5, %v523
    %v525 = vsub.f32 1.5, %v524
    %v526 = vmul.f32 %v521, %v525
    %vm527 = vweird.f32 %v510
    %vm528 = vweird.f32 %v521
    %vm529 = vmor %vm527, %vm528
    %v530 = vsel %vm529, %v521, %v526
    %v531 = vmul.f32 %v507, %v520
    %v532 = vmul.f32 %v508, %v530
    %v533 = vperm.slane %v139, 7
    %v534 = vmul.f32 %v531, %v533
    %v535 = vmul.f32 %v532, %v533
    %v536 = vperm.slane %v140, 0
    %v537 = vadd.f32 %v534, %v536
    %v538 = vadd.f32 %v535, %v536
    %vm539 = vcmp.gt.f32.partialorder %v537, 0.0
    %vm540 = vcmp.gt.f32.partialorder %v538, 0.0
    %v541 = vmul.f32 %v537, 0.01
    %v542 = vmul.f32 %v538, 0.01
    %v543 = vsel %vm539, %v537, %v541
    %v544 = vsel %vm540, %v538, %v542
    %v545 = vld [vmem:[#allocation10] sm:$0xf]
    %v546 = vld [vmem:[#allocation10 + $0x4] sm:$0xf]
    %v547 = vld [vmem:[#allocation10 + $0x8] sm:$0xf]
    %v548 = vld [vmem:[#allocation10 + $0xc] sm:$0xf]
    %v549 = vld [vmem:[#allocation10 + $0x10] sm:$0xf]
    %v550 = vld [vmem:[#allocation10 + $0x14] sm:$0xf]
    %v551 = vld [vmem:[#allocation10 + $0x18] sm:$0xf]
    %v552 = vld [vmem:[#allocation10 + $0x1c] sm:$0xf]
    %v553 = vld [vmem:[#allocation10 + $0x20] sm:$0xf]
    %v554 = vld [vmem:[#allocation10 + $0x24] sm:$0xf]
    %v555 = vld [vmem:[#allocation10 + $0x28] sm:$0xf]
    %v556 = vld [vmem:[#allocation10 + $0x2c] sm:$0xf]
    %v557 = vld [vmem:[#allocation10 + $0x30] sm:$0xf]
    %v558 = vld [vmem:[#allocation10 + $0x34] sm:$0xf]
    %v559 = vld [vmem:[#allocation10 + $0x38] sm:$0xf]
    %v560 = vld [vmem:[#allocation10 + $0x3c] sm:$0xf]
    %v561 = vpack.c.bf16 %v544, %v543
    %v563 = vperm.slane %v141, 0
    %v581 = vunpack.c.l.b16 %v545
    %v582 = vunpack.c.l.b16 %v546
    %v583 = vunpack.c.l.b16 %v547
    %v584 = vunpack.c.l.b16 %v548
    %v585 = vunpack.c.l.b16 %v549
    %v586 = vunpack.c.l.b16 %v550
    %v587 = vunpack.c.l.b16 %v551
    %v588 = vunpack.c.l.b16 %v552
    %v589 = vunpack.c.l.b16 %v553
    %v590 = vunpack.c.l.b16 %v554
    %v591 = vunpack.c.l.b16 %v555
    %v592 = vunpack.c.l.b16 %v556
    %v593 = vunpack.c.l.b16 %v557
    %v594 = vunpack.c.l.b16 %v558
    %v595 = vunpack.c.l.b16 %v559
    %v596 = vunpack.c.l.b16 %v560
    %v597 = vpack.c.b16 %v582, %v581
    %v598 = vpack.c.b16 %v584, %v583
    %v599 = vpack.c.b16 %v586, %v585
    %v600 = vpack.c.b16 %v588, %v587
    %v601 = vpack.c.b16 %v590, %v589
    %v602 = vpack.c.b16 %v592, %v591
    %v603 = vpack.c.b16 %v594, %v593
    %v604 = vpack.c.b16 %v596, %v595
    %613 = vmatpush.bf16.msra.mxu0 %v604
    %614 = vmatpush.bf16.msra.mxu0 %v603
    %615 = vmatpush.bf16.msra.mxu0 %v602
    %616 = vmatpush.bf16.msra.mxu0 %v601
    %617 = vmatpush.bf16.msra.mxu0 %v600
    %618 = vmatpush.bf16.msra.mxu0 %v599
    %619 = vmatpush.bf16.msra.mxu0 %v598
    %620 = vmatpush.bf16.msra.mxu0 %v597
    %621 = vmatmul.bf16.gmra.mxu0 %v561
    %v622 = vpop.f32.mrf.mxu0
    %v623 = vadd.f32 %v563, %v622
    %v624 = vpop.f32.mrf.mxu0
    %v625 = vadd.f32 %v563, %v624
    %626 = vdwg.mxu0
    %627 = vst [vmem:[#allocation13] sm:$0xff] %v623
    %628 = vst [vmem:[#allocation13 + $0x8] sm:$0xff] %v625
    // Predicated region
    $region54: #{tpu_custom_call.1} parent=1 // pred_check
      _
    $region55: #{tpu_custom_call.1} parent=1 // pred_check_branch
      %630 = sbr.rel (0) target = $region57
    $region56: #{tpu_custom_call.1} parent=1 // pred_region
      %632 = vsyncadd [#allocation4], 0
      %s633 = sshll.u32 [#allocation13], 4
      %s634 = int_to_ptr.vmem [resolvable:$true] %s633
      %s635 = sshll.u32 %s7, 4
      %s636 = int_to_ptr.hbm [resolvable:$true] %s635
      %641 = dma.vmem_to_hbm [thread:$0]  %s634, 256, %s636, [#allocation4], 128, 128, 8
    $region57: #{tpu_custom_call.1} parent=1 // pred_fallthru
      _
    // Predicated region
    $region58: #{tpu_custom_call.1} parent=1 // pred_check
      _
    $region59: #{tpu_custom_call.1} parent=1 // pred_check_branch
      %643 = sbr.rel (0) target = $region61
    $region60: #{tpu_custom_call.1} parent=1 // pred_region
      %645 = dma.done [#allocation4], 256
    $region61: #{tpu_custom_call.1} parent=1 // pred_fallthru
      _
    %646 = vsyncpa [#allocation3], 1
    %647 = vsyncpa [#allocation6], 1
    %648 = vsyncpa [#allocation9], 1
    %649 = vsyncpa [#allocation12], 1
    %650 = vsyncpa [#allocation4], 1

// kernel: tpu_custom_call.1
$region0: #{tpu_custom_call.1}
  #allocation0 [shape = 'u32[]', space=smem, size = 0x4, offset = 0x4, fixed_abs, tag = 'smem constant byte address 0x4 - core index']
  #allocation1 [shape = 'u32[72,128]{1,0:T(1,128)}', space=vmem, size = 0x9000, scoped, tag = 'internal scratch']
  %s0 = inlined_call_operand.hbm [shape: bf16[16,128], index: 0, kind: input, shape index: {}]
  %s1 = inlined_call_operand.hbm [shape: bf16[128,128], index: 1, kind: input, shape index: {}]
  %s2 = inlined_call_operand.hbm [shape: bf16[128,128], index: 2, kind: input, shape index: {}]
  %s3 = inlined_call_operand.hbm [shape: bf16[128,128], index: 3, kind: input, shape index: {}]
  %s4 = inlined_call_operand.hbm [shape: bf16[128,128], index: 4, kind: input, shape index: {}]
  %s5 = inlined_call_operand.hbm [shape: f32[16,128], index: 5, kind: input, shape index: {}]
  %s6 = inlined_call_operand.vmem [shape: f32[1,128], index: 6, kind: input, shape index: {}]
  %s7 = inlined_call_operand.hbm [shape: f32[16,128], index: 7, kind: output, shape index: {}]
  %s8 = sld [smem:[#allocation0]]
  $region62: #{tpu_custom_call.1} parent=0
    _
  %s10 = ssub.s32 1, %s8
  %s11 = scalar_select 0, %s10, %s8
  $region1: #{tpu_custom_call.1} parent=0
    #allocation2 [shape = 'u8[4096]{0}', space=vmem, size = 0x1000, scoped, tag = 'input window, operand 0, single buffered']
    #allocation3 [shape = 's32[1]{0}', space=sflag, size = 0x4, scoped, tag = 'scoped memory for tpu_custom_call.1']
    #allocation4 [shape = 's32[1]{0}', space=sflag, size = 0x4, scoped, tag = 'scoped memory for tpu_custom_call.1']
    #allocation5 [shape = 'u8[32768]{0}', space=vmem, size = 0x8000, scoped, tag = 'input window, operand 1, single buffered']
    #allocation6 [shape = 's32[1]{0}', space=sflag, size = 0x4, scoped, tag = 'scoped memory for tpu_custom_call.1']
    #allocation7 [shape = 'u8[32768]{0}', space=vmem, size = 0x8000, scoped, tag = 'input window, operand 2, single buffered']
    #allocation8 [shape = 'u8[32768]{0}', space=vmem, size = 0x8000, scoped, tag = 'input window, operand 3, single buffered']
    #allocation9 [shape = 's32[1]{0}', space=sflag, size = 0x4, scoped, tag = 'scoped memory for tpu_custom_call.1']
    #allocation10 [shape = 'u8[32768]{0}', space=vmem, size = 0x8000, scoped, tag = 'input window, operand 4, single buffered']
    #allocation11 [shape = 'u8[8192]{0}', space=vmem, size = 0x2000, scoped, tag = 'input window, operand 5, single buffered']
    #allocation12 [shape = 's32[1]{0}', space=sflag, size = 0x4, scoped, tag = 'scoped memory for tpu_custom_call.1']
    #allocation13 [shape = 'u8[8192]{0}', space=vmem, size = 0x2000, scoped, tag = 'output window, operand 0, single buffered']
    %12 = vsyncpa [#allocation3], 0
    %13 = vsyncpa [#allocation6], 0
    %14 = vsyncpa [#allocation9], 0
    %15 = vsyncpa [#allocation12], 0
    %16 = vsyncpa [#allocation4], 0
    // Predicated region
    $region2: #{tpu_custom_call.1} parent=1 // pred_check
      _
    $region3: #{tpu_custom_call.1} parent=1 // pred_check_branch
      %18 = sbr.rel (0) target = $region5
    $region4: #{tpu_custom_call.1} parent=1 // pred_region
      %20 = vsyncadd [#allocation3], 0
      %s21 = sshll.u32 %s0, 4
      %s22 = int_to_ptr.hbm [resolvable:$true] %s21
      %s23 = sshll.u32 [#allocation2], 4
      %s24 = int_to_ptr.vmem [resolvable:$true] %s23
      %29 = dma.hbm_to_vmem [thread:$0]  %s22, 128, %s24, [#allocation3], 64, 64, 4
    $region5: #{tpu_custom_call.1} parent=1 // pred_fallthru
      _
    // Predicated region
    $region6: #{tpu_custom_call.1} parent=1 // pred_check
      _
    $region7: #{tpu_custom_call.1} parent=1 // pred_check_branch
      %31 = sbr.rel (0) target = $region9
    $region8: #{tpu_custom_call.1} parent=1 // pred_region
      %33 = vsyncadd [#allocation6], 0
      %s34 = sshll.u32 %s1, 4
      %s35 = int_to_ptr.hbm [resolvable:$true] %s34
      %s36 = sshll.u32 [#allocation5], 4
      %s37 = int_to_ptr.vmem [resolvable:$true] %s36
      %42 = dma.hbm_to_vmem [thread:$0]  %s35, 1024, %s37, [#allocation6], 64, 64, 4
    $region9: #{tpu_custom_call.1} parent=1 // pred_fallthru
      _
    // Predicated region
    $region10: #{tpu_custom_call.1} parent=1 // pred_check
      _
    $region11: #{tpu_custom_call.1} parent=1 // pred_check_branch
      %44 = sbr.rel (0) target = $region13
    $region12: #{tpu_custom_call.1} parent=1 // pred_region
      %46 = vsyncadd [#allocation6], 0
      %s47 = sshll.u32 %s2, 4
      %s48 = int_to_ptr.hbm [resolvable:$true] %s47
      %s49 = sshll.u32 [#allocation7], 4
      %s50 = int_to_ptr.vmem [resolvable:$true] %s49
      %55 = dma.hbm_to_vmem [thread:$0]  %s48, 1024, %s50, [#allocation6], 64, 64, 4
    $region13: #{tpu_custom_call.1} parent=1 // pred_fallthru
      _
    // Predicated region
    $region14: #{tpu_custom_call.1} parent=1 // pred_check
      _
    $region15: #{tpu_custom_call.1} parent=1 // pred_check_branch
      %57 = sbr.rel (0) target = $region17
    $region16: #{tpu_custom_call.1} parent=1 // pred_region
      %59 = vsyncadd [#allocation9], 0
      %s60 = sshll.u32 %s3, 4
      %s61 = int_to_ptr.hbm [resolvable:$true] %s60
      %s62 = sshll.u32 [#allocation8], 4
      %s63 = int_to_ptr.vmem [resolvable:$true] %s62
      %68 = dma.hbm_to_vmem [thread:$0]  %s61, 1024, %s63, [#allocation9], 64, 64, 4
    $region17: #{tpu_custom_call.1} parent=1 // pred_fallthru
      _
    // Predicated region
    $region18: #{tpu_custom_call.1} parent=1 // pred_check
      _
    $region19: #{tpu_custom_call.1} parent=1 // pred_check_branch
      %70 = sbr.rel (0) target = $region21
    $region20: #{tpu_custom_call.1} parent=1 // pred_region
      %72 = vsyncadd [#allocation9], 0
      %s73 = sshll.u32 %s4, 4
      %s74 = int_to_ptr.hbm [resolvable:$true] %s73
      %s75 = sshll.u32 [#allocation10], 4
      %s76 = int_to_ptr.vmem [resolvable:$true] %s75
      %81 = dma.hbm_to_vmem [thread:$0]  %s74, 1024, %s76, [#allocation9], 64, 64, 4
    $region21: #{tpu_custom_call.1} parent=1 // pred_fallthru
      _
    // Predicated region
    $region22: #{tpu_custom_call.1} parent=1 // pred_check
      _
    $region23: #{tpu_custom_call.1} parent=1 // pred_check_branch
      %83 = sbr.rel (0) target = $region25
    $region24: #{tpu_custom_call.1} parent=1 // pred_region
      %85 = vsyncadd [#allocation12], 0
      %s86 = sshll.u32 %s5, 4
      %s87 = int_to_ptr.hbm [resolvable:$true] %s86
      %s88 = sshll.u32 [#allocation11], 4
      %s89 = int_to_ptr.vmem [resolvable:$true] %s88
      %94 = dma.hbm_to_vmem [thread:$0]  %s87, 256, %s89, [#allocation12], 128, 128, 8
    $region25: #{tpu_custom_call.1} parent=1 // pred_fallthru
      _
    // Predicated region
    $region26: #{tpu_custom_call.1} parent=1 // pred_check
      _
    $region27: #{tpu_custom_call.1} parent=1 // pred_check_branch
      %96 = sbr.rel (0) target = $region29
    $region28: #{tpu_custom_call.1} parent=1 // pred_region
      _
    $region29: #{tpu_custom_call.1} parent=1 // pred_fallthru
      _
    // Predicated region
    $region30: #{tpu_custom_call.1} parent=1 // pred_check
      _
    $region31: #{tpu_custom_call.1} parent=1 // pred_check_branch
      %98 = sbr.rel (0) target = $region33
    $region32: #{tpu_custom_call.1} parent=1 // pred_region
      %100 = dma.done [#allocation3], 128
    $region33: #{tpu_custom_call.1} parent=1 // pred_fallthru
      _
    // Predicated region
    $region34: #{tpu_custom_call.1} parent=1 // pred_check
      _
    $region35: #{tpu_custom_call.1} parent=1 // pred_check_branch
      %102 = sbr.rel (0) target = $region37
    $region36: #{tpu_custom_call.1} parent=1 // pred_region
      %104 = dma.done [#allocation6], 1024
    $region37: #{tpu_custom_call.1} parent=1 // pred_fallthru
      _
    // Predicated region
    $region38: #{tpu_custom_call.1} parent=1 // pred_check
      _
    $region39: #{tpu_custom_call.1} parent=1 // pred_check_branch
      %106 = sbr.rel (0) target = $region41
    $region40: #{tpu_custom_call.1} parent=1 // pred_region
      %108 = dma.done [#allocation6], 1024
    $region41: #{tpu_custom_call.1} parent=1 // pred_fallthru
      _
    // Predicated region
    $region42: #{tpu_custom_call.1} parent=1 // pred_check
      _
    $region43: #{tpu_custom_call.1} parent=1 // pred_check_branch
      %110 = sbr.rel (0) target = $region45
    $region44: #{tpu_custom_call.1} parent=1 // pred_region
      %112 = dma.done [#allocation9], 1024
    $region45: #{tpu_custom_call.1} parent=1 // pred_fallthru
      _
    // Predicated region
    $region46: #{tpu_custom_call.1} parent=1 // pred_check
      _
    $region47: #{tpu_custom_call.1} parent=1 // pred_check_branch
      %114 = sbr.rel (0) target = $region49
    $region48: #{tpu_custom_call.1} parent=1 // pred_region
      %116 = dma.done [#allocation9], 1024
    $region49: #{tpu_custom_call.1} parent=1 // pred_fallthru
      _
    // Predicated region
    $region50: #{tpu_custom_call.1} parent=1 // pred_check
      _
    $region51: #{tpu_custom_call.1} parent=1 // pred_check_branch
      %118 = sbr.rel (0) target = $region53
    $region52: #{tpu_custom_call.1} parent=1 // pred_region
      %120 = dma.done [#allocation12], 256
    $region53: #{tpu_custom_call.1} parent=1 // pred_fallthru
      _
    %v121 = vld [vmem:[#allocation2] sm:$0xf]
    %v122 = vld [vmem:[#allocation2 + $0x4] sm:$0xf]
    %v123 = vld [vmem:[#allocation5] sm:$0xf]
    %v124 = vld [vmem:[#allocation5 + $0x4] sm:$0xf]
    %v125 = vld [vmem:[#allocation5 + $0x8] sm:$0xf]
    %v126 = vld [vmem:[#allocation5 + $0xc] sm:$0xf]
    %v127 = vld [vmem:[#allocation5 + $0x10] sm:$0xf]
    %v128 = vld [vmem:[#allocation5 + $0x14] sm:$0xf]
    %v129 = vld [vmem:[#allocation5 + $0x18] sm:$0xf]
    %v130 = vld [vmem:[#allocation5 + $0x1c] sm:$0xf]
    %v131 = vld [vmem:[#allocation5 + $0x20] sm:$0xf]
    %v132 = vld [vmem:[#allocation5 + $0x24] sm:$0xf]
    %v133 = vld [vmem:[#allocation5 + $0x28] sm:$0xf]
    %v134 = vld [vmem:[#allocation5 + $0x2c] sm:$0xf]
    %v135 = vld [vmem:[#allocation5 + $0x30] sm:$0xf]
    %v136 = vld [vmem:[#allocation5 + $0x34] sm:$0xf]
    %v137 = vld [vmem:[#allocation5 + $0x38] sm:$0xf]
    %v138 = vld [vmem:[#allocation5 + $0x3c] sm:$0xf]
    %v139 = vld [vmem:[#allocation11] sm:$0xff]
    %v140 = vld [vmem:[#allocation11 + $0x8] sm:$0xff]
    %v141 = vld [vmem:[%s6] sm:$0x1]
    %v142 = vperm.slane %v139, 0
    %v145 = vunpack.c.l.b16 %v121
    %v146 = vunpack.c.l.b16 %v122
    %v147 = vpack.c.b16 %v146, %v145
    %v165 = vunpack.c.l.b16 %v123
    %v166 = vunpack.c.l.b16 %v124
    %v167 = vunpack.c.l.b16 %v125
    %v168 = vunpack.c.l.b16 %v126
    %v169 = vunpack.c.l.b16 %v127
    %v170 = vunpack.c.l.b16 %v128
    %v171 = vunpack.c.l.b16 %v129
    %v172 = vunpack.c.l.b16 %v130
    %v173 = vunpack.c.l.b16 %v131
    %v174 = vunpack.c.l.b16 %v132
    %v175 = vunpack.c.l.b16 %v133
    %v176 = vunpack.c.l.b16 %v134
    %v177 = vunpack.c.l.b16 %v135
    %v178 = vunpack.c.l.b16 %v136
    %v179 = vunpack.c.l.b16 %v137
    %v180 = vunpack.c.l.b16 %v138
    %v181 = vpack.c.b16 %v166, %v165
    %v182 = vpack.c.b16 %v168, %v167
    %v183 = vpack.c.b16 %v170, %v169
    %v184 = vpack.c.b16 %v172, %v171
    %v185 = vpack.c.b16 %v174, %v173
    %v186 = vpack.c.b16 %v176, %v175
    %v187 = vpack.c.b16 %v178, %v177
    %v188 = vpack.c.b16 %v180, %v179
    %197 = vmatpush.bf16.msra.mxu0 %v188
    %198 = vmatpush.bf16.msra.mxu0 %v187
    %199 = vmatpush.bf16.msra.mxu0 %v186
    %200 = vmatpush.bf16.msra.mxu0 %v185
    %201 = vmatpush.bf16.msra.mxu0 %v184
    %202 = vmatpush.bf16.msra.mxu0 %v183
    %203 = vmatpush.bf16.msra.mxu0 %v182
    %204 = vmatpush.bf16.msra.mxu0 %v181
    %205 = vmatmul.bf16.gmra.mxu0 %v147
    %v206 = vpop.f32.mrf.mxu0
    %v207 = vadd.f32 %v142, %v206
    %v208 = vpop.f32.mrf.mxu0
    %v209 = vadd.f32 %v142, %v208
    %210 = vdwg.mxu0
    %211 = vadd.xlane.f32.xlu0 %v207
    %v212 = vpop.xlane.xlu0 %211
    %213 = vadd.xlane.f32.xlu0 %v209
    %v214 = vpop.xlane.xlu0 %213
    %v215 = vmul.f32 %v212, 0.015625
    %v216 = vmul.f32 %v214, 0.015625
    %v217 = vmul.f32 %v207, %v207
    %v218 = vmul.f32 %v209, %v209
    %219 = vadd.xlane.f32.xlu0 %v217
    %v220 = vpop.xlane.xlu0 %219
    %221 = vadd.xlane.f32.xlu0 %v218
    %v222 = vpop.xlane.xlu0 %221
    %v223 = vmul.f32 %v220, 0.015625
    %v224 = vmul.f32 %v222, 0.015625
    %v225 = vmul.f32 %v215, %v215
    %v226 = vmul.f32 %v216, %v216
    %v227 = vsub.f32 %v223, %v225
    %v228 = vsub.f32 %v224, %v226
    %v229 = vmax.f32 %v227, 0.0
    %v230 = vmax.f32 %v228, 0.0
    %v231 = vsub.f32 %v207, %v215
    %v232 = vsub.f32 %v209, %v216
    %v233 = vadd.f32 %v229, 1e-05
    %v234 = vadd.f32 %v230, 1e-05
    %v235 = vrsqrt.pop %v233
    %v236 = vmul.f32 %v235, %v233
    %v237 = vmul.f32 %v236, %v235
    %v238 = vmul.f32 0.5, %v237
    %v239 = vsub.f32 1.5, %v238
    %v240 = vmul.f32 %v235, %v239
    %vm241 = vweird.f32 %v233
    %vm242 = vweird.f32 %v235
    %vm243 = vmor %vm241, %vm242
    %v244 = vsel %vm243, %v235, %v240
    %v245 = vrsqrt.pop %v234
    %v246 = vmul.f32 %v245, %v234
    %v247 = vmul.f32 %v246, %v245
    %v248 = vmul.f32 0.5, %v247
    %v249 = vsub.f32 1.5, %v248
    %v250 = vmul.f32 %v245, %v249
    %vm251 = vweird.f32 %v234
    %vm252 = vweird.f32 %v245
    %vm253 = vmor %vm251, %vm252
    %v254 = vsel %vm253, %v245, %v250
    %v255 = vmul.f32 %v231, %v244
    %v256 = vmul.f32 %v232, %v254
    %v257 = vperm.slane %v139, 1
    %v258 = vmul.f32 %v255, %v257
    %v259 = vmul.f32 %v256, %v257
    %v260 = vperm.slane %v139, 2
    %v261 = vadd.f32 %v258, %v260
    %v262 = vadd.f32 %v259, %v260
    %vm263 = vcmp.gt.f32.partialorder %v261, 0.0
    %vm264 = vcmp.gt.f32.partialorder %v262, 0.0
    %v265 = vmul.f32 %v261, 0.01
    %v266 = vmul.f32 %v262, 0.01
    %v267 = vsel %vm263, %v261, %v265
    %v268 = vsel %vm264, %v262, %v266
    %v269 = vld [vmem:[#allocation7] sm:$0xf]
    %v270 = vld [vmem:[#allocation7 + $0x4] sm:$0xf]
    %v271 = vld [vmem:[#allocation7 + $0x8] sm:$0xf]
    %v272 = vld [vmem:[#allocation7 + $0xc] sm:$0xf]
    %v273 = vld [vmem:[#allocation7 + $0x10] sm:$0xf]
    %v274 = vld [vmem:[#allocation7 + $0x14] sm:$0xf]
    %v275 = vld [vmem:[#allocation7 + $0x18] sm:$0xf]
    %v276 = vld [vmem:[#allocation7 + $0x1c] sm:$0xf]
    %v277 = vld [vmem:[#allocation7 + $0x20] sm:$0xf]
    %v278 = vld [vmem:[#allocation7 + $0x24] sm:$0xf]
    %v279 = vld [vmem:[#allocation7 + $0x28] sm:$0xf]
    %v280 = vld [vmem:[#allocation7 + $0x2c] sm:$0xf]
    %v281 = vld [vmem:[#allocation7 + $0x30] sm:$0xf]
    %v282 = vld [vmem:[#allocation7 + $0x34] sm:$0xf]
    %v283 = vld [vmem:[#allocation7 + $0x38] sm:$0xf]
    %v284 = vld [vmem:[#allocation7 + $0x3c] sm:$0xf]
    %v285 = vpack.c.bf16 %v268, %v267
    %v286 = vperm.slane %v139, 3
    %v303 = vunpack.c.l.b16 %v269
    %v304 = vunpack.c.l.b16 %v270
    %v305 = vunpack.c.l.b16 %v271
    %v306 = vunpack.c.l.b16 %v272
    %v307 = vunpack.c.l.b16 %v273
    %v308 = vunpack.c.l.b16 %v274
    %v309 = vunpack.c.l.b16 %v275
    %v310 = vunpack.c.l.b16 %v276
    %v311 = vunpack.c.l.b16 %v277
    %v312 = vunpack.c.l.b16 %v278
    %v313 = vunpack.c.l.b16 %v279
    %v314 = vunpack.c.l.b16 %v280
    %v315 = vunpack.c.l.b16 %v281
    %v316 = vunpack.c.l.b16 %v282
    %v317 = vunpack.c.l.b16 %v283
    %v318 = vunpack.c.l.b16 %v284
    %v319 = vpack.c.b16 %v304, %v303
    %v320 = vpack.c.b16 %v306, %v305
    %v321 = vpack.c.b16 %v308, %v307
    %v322 = vpack.c.b16 %v310, %v309
    %v323 = vpack.c.b16 %v312, %v311
    %v324 = vpack.c.b16 %v314, %v313
    %v325 = vpack.c.b16 %v316, %v315
    %v326 = vpack.c.b16 %v318, %v317
    %335 = vmatpush.bf16.msra.mxu0 %v326
    %336 = vmatpush.bf16.msra.mxu0 %v325
    %337 = vmatpush.bf16.msra.mxu0 %v324
    %338 = vmatpush.bf16.msra.mxu0 %v323
    %339 = vmatpush.bf16.msra.mxu0 %v322
    %340 = vmatpush.bf16.msra.mxu0 %v321
    %341 = vmatpush.bf16.msra.mxu0 %v320
    %342 = vmatpush.bf16.msra.mxu0 %v319
    %343 = vmatmul.bf16.gmra.mxu0 %v285
    %v344 = vpop.f32.mrf.mxu0
    %v345 = vadd.f32 %v286, %v344
    %v346 = vpop.f32.mrf.mxu0
    %v347 = vadd.f32 %v286, %v346
    %348 = vdwg.mxu0
    %349 = vadd.xlane.f32.xlu0 %v345
    %v350 = vpop.xlane.xlu0 %349
    %351 = vadd.xlane.f32.xlu0 %v347
    %v352 = vpop.xlane.xlu0 %351
    %v353 = vmul.f32 %v350, 0.015625
    %v354 = vmul.f32 %v352, 0.015625
    %v355 = vmul.f32 %v345, %v345
    %v356 = vmul.f32 %v347, %v347
    %357 = vadd.xlane.f32.xlu0 %v355
    %v358 = vpop.xlane.xlu0 %357
    %359 = vadd.xlane.f32.xlu0 %v356
    %v360 = vpop.xlane.xlu0 %359
    %v361 = vmul.f32 %v358, 0.015625
    %v362 = vmul.f32 %v360, 0.015625
    %v363 = vmul.f32 %v353, %v353
    %v364 = vmul.f32 %v354, %v354
    %v365 = vsub.f32 %v361, %v363
    %v366 = vsub.f32 %v362, %v364
    %v367 = vmax.f32 %v365, 0.0
    %v368 = vmax.f32 %v366, 0.0
    %v369 = vsub.f32 %v345, %v353
    %v370 = vsub.f32 %v347, %v354
    %v371 = vadd.f32 %v367, 1e-05
    %v372 = vadd.f32 %v368, 1e-05
    %v373 = vrsqrt.pop %v371
    %v374 = vmul.f32 %v373, %v371
    %v375 = vmul.f32 %v374, %v373
    %v376 = vmul.f32 0.5, %v375
    %v377 = vsub.f32 1.5, %v376
    %v378 = vmul.f32 %v373, %v377
    %vm379 = vweird.f32 %v371
    %vm380 = vweird.f32 %v373
    %vm381 = vmor %vm379, %vm380
    %v382 = vsel %vm381, %v373, %v378
    %v383 = vrsqrt.pop %v372
    %v384 = vmul.f32 %v383, %v372
    %v385 = vmul.f32 %v384, %v383
    %v386 = vmul.f32 0.5, %v385
    %v387 = vsub.f32 1.5, %v386
    %v388 = vmul.f32 %v383, %v387
    %vm389 = vweird.f32 %v372
    %vm390 = vweird.f32 %v383
    %vm391 = vmor %vm389, %vm390
    %v392 = vsel %vm391, %v383, %v388
    %v393 = vmul.f32 %v369, %v382
    %v394 = vmul.f32 %v370, %v392
    %v395 = vperm.slane %v139, 4
    %v396 = vmul.f32 %v393, %v395
    %v397 = vmul.f32 %v394, %v395
    %v398 = vperm.slane %v139, 5
    %v399 = vadd.f32 %v396, %v398
    %v400 = vadd.f32 %v397, %v398
    %vm401 = vcmp.gt.f32.partialorder %v399, 0.0
    %vm402 = vcmp.gt.f32.partialorder %v400, 0.0
    %v403 = vmul.f32 %v399, 0.01
    %v404 = vmul.f32 %v400, 0.01
    %v405 = vsel %vm401, %v399, %v403
    %v406 = vsel %vm402, %v400, %v404
    %v407 = vld [vmem:[#allocation8] sm:$0xf]
    %v408 = vld [vmem:[#allocation8 + $0x4] sm:$0xf]
    %v409 = vld [vmem:[#allocation8 + $0x8] sm:$0xf]
    %v410 = vld [vmem:[#allocation8 + $0xc] sm:$0xf]
    %v411 = vld [vmem:[#allocation8 + $0x10] sm:$0xf]
    %v412 = vld [vmem:[#allocation8 + $0x14] sm:$0xf]
    %v413 = vld [vmem:[#allocation8 + $0x18] sm:$0xf]
    %v414 = vld [vmem:[#allocation8 + $0x1c] sm:$0xf]
    %v415 = vld [vmem:[#allocation8 + $0x20] sm:$0xf]
    %v416 = vld [vmem:[#allocation8 + $0x24] sm:$0xf]
    %v417 = vld [vmem:[#allocation8 + $0x28] sm:$0xf]
    %v418 = vld [vmem:[#allocation8 + $0x2c] sm:$0xf]
    %v419 = vld [vmem:[#allocation8 + $0x30] sm:$0xf]
    %v420 = vld [vmem:[#allocation8 + $0x34] sm:$0xf]
    %v421 = vld [vmem:[#allocation8 + $0x38] sm:$0xf]
    %v422 = vld [vmem:[#allocation8 + $0x3c] sm:$0xf]
    %v423 = vpack.c.bf16 %v406, %v405
    %v424 = vperm.slane %v139, 6
    %v441 = vunpack.c.l.b16 %v407
    %v442 = vunpack.c.l.b16 %v408
    %v443 = vunpack.c.l.b16 %v409
    %v444 = vunpack.c.l.b16 %v410
    %v445 = vunpack.c.l.b16 %v411
    %v446 = vunpack.c.l.b16 %v412
    %v447 = vunpack.c.l.b16 %v413
    %v448 = vunpack.c.l.b16 %v414
    %v449 = vunpack.c.l.b16 %v415
    %v450 = vunpack.c.l.b16 %v416
    %v451 = vunpack.c.l.b16 %v417
    %v452 = vunpack.c.l.b16 %v418
    %v453 = vunpack.c.l.b16 %v419
    %v454 = vunpack.c.l.b16 %v420
    %v455 = vunpack.c.l.b16 %v421
    %v456 = vunpack.c.l.b16 %v422
    %v457 = vpack.c.b16 %v442, %v441
    %v458 = vpack.c.b16 %v444, %v443
    %v459 = vpack.c.b16 %v446, %v445
    %v460 = vpack.c.b16 %v448, %v447
    %v461 = vpack.c.b16 %v450, %v449
    %v462 = vpack.c.b16 %v452, %v451
    %v463 = vpack.c.b16 %v454, %v453
    %v464 = vpack.c.b16 %v456, %v455
    %473 = vmatpush.bf16.msra.mxu0 %v464
    %474 = vmatpush.bf16.msra.mxu0 %v463
    %475 = vmatpush.bf16.msra.mxu0 %v462
    %476 = vmatpush.bf16.msra.mxu0 %v461
    %477 = vmatpush.bf16.msra.mxu0 %v460
    %478 = vmatpush.bf16.msra.mxu0 %v459
    %479 = vmatpush.bf16.msra.mxu0 %v458
    %480 = vmatpush.bf16.msra.mxu0 %v457
    %481 = vmatmul.bf16.gmra.mxu0 %v423
    %v482 = vpop.f32.mrf.mxu0
    %v483 = vadd.f32 %v424, %v482
    %v484 = vpop.f32.mrf.mxu0
    %v485 = vadd.f32 %v424, %v484
    %486 = vdwg.mxu0
    %487 = vadd.xlane.f32.xlu0 %v483
    %v488 = vpop.xlane.xlu0 %487
    %489 = vadd.xlane.f32.xlu0 %v485
    %v490 = vpop.xlane.xlu0 %489
    %v491 = vmul.f32 %v488, 0.015625
    %v492 = vmul.f32 %v490, 0.015625
    %v493 = vmul.f32 %v483, %v483
    %v494 = vmul.f32 %v485, %v485
    %495 = vadd.xlane.f32.xlu0 %v493
    %v496 = vpop.xlane.xlu0 %495
    %497 = vadd.xlane.f32.xlu0 %v494
    %v498 = vpop.xlane.xlu0 %497
    %v499 = vmul.f32 %v496, 0.015625
    %v500 = vmul.f32 %v498, 0.015625
    %v501 = vmul.f32 %v491, %v491
    %v502 = vmul.f32 %v492, %v492
    %v503 = vsub.f32 %v499, %v501
    %v504 = vsub.f32 %v500, %v502
    %v505 = vmax.f32 %v503, 0.0
    %v506 = vmax.f32 %v504, 0.0
    %v507 = vsub.f32 %v483, %v491
    %v508 = vsub.f32 %v485, %v492
    %v509 = vadd.f32 %v505, 1e-05
    %v510 = vadd.f32 %v506, 1e-05
    %v511 = vrsqrt.pop %v509
    %v512 = vmul.f32 %v511, %v509
    %v513 = vmul.f32 %v512, %v511
    %v514 = vmul.f32 0.5, %v513
    %v515 = vsub.f32 1.5, %v514
    %v516 = vmul.f32 %v511, %v515
    %vm517 = vweird.f32 %v509
    %vm518 = vweird.f32 %v511
    %vm519 = vmor %vm517, %vm518
    %v520 = vsel %vm519, %v511, %v516
    %v521 = vrsqrt.pop %v510
    %v522 = vmul.f32 %v521, %v510
    %v523 = vmul.f32 %v522, %v521
    %v524 = vmul.f32 0.5, %v523
    %v525 = vsub.f32 1.5, %v524
    %v526 = vmul.f32 %v521, %v525
    %vm527 = vweird.f32 %v510
    %vm528 = vweird.f32 %v521
    %vm529 = vmor %vm527, %vm528
    %v530 = vsel %vm529, %v521, %v526
    %v531 = vmul.f32 %v507, %v520
    %v532 = vmul.f32 %v508, %v530
    %v533 = vperm.slane %v139, 7
    %v534 = vmul.f32 %v531, %v533
    %v535 = vmul.f32 %v532, %v533
    %v536 = vperm.slane %v140, 0
    %v537 = vadd.f32 %v534, %v536
    %v538 = vadd.f32 %v535, %v536
    %vm539 = vcmp.gt.f32.partialorder %v537, 0.0
    %vm540 = vcmp.gt.f32.partialorder %v538, 0.0
    %v541 = vmul.f32 %v537, 0.01
    %v542 = vmul.f32 %v538, 0.01
    %v543 = vsel %vm539, %v537, %v541
    %v544 = vsel %vm540, %v538, %v542
    %v545 = vld [vmem:[#allocation10] sm:$0xf]
    %v546 = vld [vmem:[#allocation10 + $0x4] sm:$0xf]
    %v547 = vld [vmem:[#allocation10 + $0x8] sm:$0xf]
    %v548 = vld [vmem:[#allocation10 + $0xc] sm:$0xf]
    %v549 = vld [vmem:[#allocation10 + $0x10] sm:$0xf]
    %v550 = vld [vmem:[#allocation10 + $0x14] sm:$0xf]
    %v551 = vld [vmem:[#allocation10 + $0x18] sm:$0xf]
    %v552 = vld [vmem:[#allocation10 + $0x1c] sm:$0xf]
    %v553 = vld [vmem:[#allocation10 + $0x20] sm:$0xf]
    %v554 = vld [vmem:[#allocation10 + $0x24] sm:$0xf]
    %v555 = vld [vmem:[#allocation10 + $0x28] sm:$0xf]
    %v556 = vld [vmem:[#allocation10 + $0x2c] sm:$0xf]
    %v557 = vld [vmem:[#allocation10 + $0x30] sm:$0xf]
    %v558 = vld [vmem:[#allocation10 + $0x34] sm:$0xf]
    %v559 = vld [vmem:[#allocation10 + $0x38] sm:$0xf]
    %v560 = vld [vmem:[#allocation10 + $0x3c] sm:$0xf]
    %v561 = vpack.c.bf16 %v544, %v543
    %v563 = vperm.slane %v141, 0
    %v581 = vunpack.c.l.b16 %v545
    %v582 = vunpack.c.l.b16 %v546
    %v583 = vunpack.c.l.b16 %v547
    %v584 = vunpack.c.l.b16 %v548
    %v585 = vunpack.c.l.b16 %v549
    %v586 = vunpack.c.l.b16 %v550
    %v587 = vunpack.c.l.b16 %v551
    %v588 = vunpack.c.l.b16 %v552
    %v589 = vunpack.c.l.b16 %v553
    %v590 = vunpack.c.l.b16 %v554
    %v591 = vunpack.c.l.b16 %v555
    %v592 = vunpack.c.l.b16 %v556
    %v593 = vunpack.c.l.b16 %v557
    %v594 = vunpack.c.l.b16 %v558
    %v595 = vunpack.c.l.b16 %v559
    %v596 = vunpack.c.l.b16 %v560
    %v597 = vpack.c.b16 %v582, %v581
    %v598 = vpack.c.b16 %v584, %v583
    %v599 = vpack.c.b16 %v586, %v585
    %v600 = vpack.c.b16 %v588, %v587
    %v601 = vpack.c.b16 %v590, %v589
    %v602 = vpack.c.b16 %v592, %v591
    %v603 = vpack.c.b16 %v594, %v593
    %v604 = vpack.c.b16 %v596, %v595
    %613 = vmatpush.bf16.msra.mxu0 %v604
    %614 = vmatpush.bf16.msra.mxu0 %v603
    %615 = vmatpush.bf16.msra.mxu0 %v602
    %616 = vmatpush.bf16.msra.mxu0 %v601
    %617 = vmatpush.bf16.msra.mxu0 %v600
    %618 = vmatpush.bf16.msra.mxu0 %v599
    %619 = vmatpush.bf16.msra.mxu0 %v598
    %620 = vmatpush.bf16.msra.mxu0 %v597
    %621 = vmatmul.bf16.gmra.mxu0 %v561
    %v622 = vpop.f32.mrf.mxu0
    %v623 = vadd.f32 %v563, %v622
    %v624 = vpop.f32.mrf.mxu0
    %v625 = vadd.f32 %v563, %v624
    %626 = vdwg.mxu0
    %627 = vst [vmem:[#allocation13] sm:$0xff] %v623
    %628 = vst [vmem:[#allocation13 + $0x8] sm:$0xff] %v625
    // Predicated region
    $region54: #{tpu_custom_call.1} parent=1 // pred_check
      _
    $region55: #{tpu_custom_call.1} parent=1 // pred_check_branch
      %630 = sbr.rel (0) target = $region57
    $region56: #{tpu_custom_call.1} parent=1 // pred_region
      %632 = vsyncadd [#allocation4], 0
      %s633 = sshll.u32 [#allocation13], 4
      %s634 = int_to_ptr.vmem [resolvable:$true] %s633
      %s635 = sshll.u32 %s7, 4
      %s636 = int_to_ptr.hbm [resolvable:$true] %s635
      %641 = dma.vmem_to_hbm [thread:$0]  %s634, 256, %s636, [#allocation4], 128, 128, 8
    $region57: #{tpu_custom_call.1} parent=1 // pred_fallthru
      _
    // Predicated region
    $region58: #{tpu_custom_call.1} parent=1 // pred_check
      _
    $region59: #{tpu_custom_call.1} parent=1 // pred_check_branch
      %643 = sbr.rel (0) target = $region61
    $region60: #{tpu_custom_call.1} parent=1 // pred_region
      %645 = dma.done [#allocation4], 256
    $region61: #{tpu_custom_call.1} parent=1 // pred_fallthru
      _
    %646 = vsyncpa [#allocation3], 1
    %647 = vsyncpa [#allocation6], 1
    %648 = vsyncpa [#allocation9], 1
    %649 = vsyncpa [#allocation12], 1
    %650 = vsyncpa [#allocation4], 1

</llo_original>
